<compile_context>
chip_gen: v7x
topology: tpu7x:2x2x1
jax: 0.10.0
libtpu: 0.0.40
codegen_flags: <defaults>
</compile_context>

<pallas_src>
import math
import functools

import jax
import jax.numpy as jnp
from jax.experimental import pallas as pl
from jax.experimental.pallas import tpu as pltpu

# ---------------------------------------------------------------------------
# Small config consistent with the module (hidden % heads == 0)
# ---------------------------------------------------------------------------
NUM_HEADS = 4
HIDDEN = 64
HEAD_DIM = HIDDEN // NUM_HEADS
LN_EPS = 1e-5                      # torch.nn.LayerNorm default eps
_INV_SQRT2 = 1.0 / math.sqrt(2.0)


# ---------------------------------------------------------------------------
# Fused Pallas kernel: one grid step == one batch element, whole block
# ---------------------------------------------------------------------------
def _co_attention_block_kernel(
        vmask_ref, tmask_ref, v_ref, t_ref,
        wqkv1_ref, bqkv1_ref, wqkv2_ref, bqkv2_ref,
        wmisc_ref, vecs_ref,
        vout_ref, tout_ref, p1_ref, p2_ref, qk1_ref, qk2_ref,
        ctx1_sc, ctx2_sc,
        *, hidden, num_heads, scale, matmul_dtype):
    D, H = hidden, num_heads
    d = D // H
    f32 = jnp.float32

    def mm(a, b):
        return jnp.dot(a.astype(matmul_dtype), b.astype(matmul_dtype),
                       preferred_element_type=f32)

    def mm_nt(a, b):  # a @ b.T without materializing the transpose
        return jax.lax.dot_general(
            a.astype(matmul_dtype), b.astype(matmul_dtype),
            dimension_numbers=(((1,), (1,)), ((), ())),
            preferred_element_type=f32)

    def softmax_rows(s):
        m = jnp.max(s, axis=-1, keepdims=True)
        e = jnp.exp(s - m)
        denom = jnp.sum(e, axis=-1, keepdims=True)
        return e * pl.reciprocal(denom, approx=True)

    def gelu_exact(x):
        return 0.5 * x * (1.0 + jax.lax.erf(x * _INV_SQRT2))

    def dense_res_ln(x, w, b, res, gamma, beta):
        # LayerNorm(dense(x) + residual)   (dropout = identity in eval mode)
        y = mm(x, w) + b + res
        mu = jnp.mean(y, axis=-1, keepdims=True)
        var = jnp.mean(jnp.square(y - mu), axis=-1, keepdims=True)
        return (y - mu) * jax.lax.rsqrt(var + LN_EPS) * gamma + beta

    v_x = v_ref[0]           # (Sv, D)  vision tokens of this batch element
    t_x = t_ref[0]           # (St, D)  text tokens
    vmask = vmask_ref[0]     # (1, Sv)  multiplicative mask over vision keys
    tmask = tmask_ref[0]     # (1, St)  multiplicative mask over text keys

    # ---- fused QKV projections: one wide (S,D)x(D,3D) GEMM per stream -----
    qkv1 = mm(v_x, wqkv1_ref[...]) + bqkv1_ref[...]      # (Sv, 3D)
    qkv2 = mm(t_x, wqkv2_ref[...]) + bqkv2_ref[...]      # (St, 3D)

    # lane-dense (S, 2D) query/key slabs (head split done by the wrapper)
    qk1_ref[0] = qkv1[:, :2 * D]
    qk2_ref[0] = qkv2[:, :2 * D]

    # fold 1/sqrt(d) into the queries once (score scaling)
    q1 = qkv1[:, :D] * scale
    k1 = qkv1[:, D:2 * D]
    val1 = qkv1[:, 2 * D:]
    q2 = qkv2[:, :D] * scale
    k2 = qkv2[:, D:2 * D]
    val2 = qkv2[:, 2 * D:]

    # ---- co-attention: all heads, static unroll, 2-D MXU dots --------------
    for h in range(H):
        sl = slice(h * d, (h + 1) * d)
        q1h, k1h, v1h = q1[:, sl], k1[:, sl], val1[:, sl]
        q2h, k2h, v2h = q2[:, sl], k2[:, sl], val2[:, sl]

        # stream-1 attention: text queries x vision keys, vision mask
        s1 = mm_nt(q2h, k1h) * vmask                     # (St, Sv)
        p1 = softmax_rows(s1)
        p1_ref[0, h] = p1
        ctx1_sc[:, sl] = mm(p1, v1h)                     # (St, d)

        # stream-2 attention: vision queries x text keys, text mask
        s2 = mm_nt(q1h, k2h) * tmask                     # (Sv, St)
        p2 = softmax_rows(s2)
        p2_ref[0, h] = p2
        ctx2_sc[:, sl] = mm(p2, v2h)                     # (Sv, d)

    ctx1 = ctx1_sc[...]      # (St, D)  text_bi_output
    ctx2 = ctx2_sc[...]      # (Sv, D)  vision_bi_output

    # ---- BertBiOutput: LayerNorm(dense(ctx) + input) ------------------------
    # weight-stack rows: 0=bo_dense1 1=bo_dense2 2=v_inter 3=v_out 4=t_inter 5=t_out
    vis_attn = dense_res_ln(ctx2, wmisc_ref[0], vecs_ref[0:1], v_x,
                            vecs_ref[1:2], vecs_ref[2:3])
    txt_attn = dense_res_ln(ctx1, wmisc_ref[1], vecs_ref[3:4], t_x,
                            vecs_ref[4:5], vecs_ref[5:6])

    # ---- FFN: intermediate GELU + output residual LayerNorm -----------------
    vis_inter = gelu_exact(mm(vis_attn, wmisc_ref[2]) + vecs_ref[6:7])
    vout_ref[0] = dense_res_ln(vis_inter, wmisc_ref[3], vecs_ref[7:8], vis_attn,
                               vecs_ref[8:9], vecs_ref[9:10])

    txt_inter = gelu_exact(mm(txt_attn, wmisc_ref[4]) + vecs_ref[10:11])
    tout_ref[0] = dense_res_ln(txt_inter, wmisc_ref[5], vecs_ref[11:12], txt_attn,
                               vecs_ref[12:13], vecs_ref[13:14])


# ---------------------------------------------------------------------------
# Parameter construction + one-time packing
# ---------------------------------------------------------------------------
def init_params(key, hidden=HIDDEN):
    names = [
        "q1", "k1", "v1", "q2", "k2", "v2",        # BertBiAttention
        "bo_dense1", "bo_dense2",                  # BertBiOutput dense layers
        "v_inter", "v_out", "t_inter", "t_out",    # FFN layers
    ]
    params = {}
    keys = jax.random.split(key, 2 * len(names))
    for i, n in enumerate(names):
        params[n + "_w"] = 0.05 * jax.random.normal(
            keys[2 * i], (hidden, hidden), jnp.float32)          # stored as (in, out)
        params[n + "_b"] = 0.05 * jax.random.normal(
            keys[2 * i + 1], (hidden,), jnp.float32)
    for ln in ["bo_ln1", "bo_ln2", "v_out_ln", "t_out_ln"]:
        params[ln + "_g"] = jnp.ones((hidden,), jnp.float32)
        params[ln + "_b"] = jnp.zeros((hidden,), jnp.float32)
    return params


_VEC_ORDER = ["bo_dense1_b", "bo_ln1_g", "bo_ln1_b",
              "bo_dense2_b", "bo_ln2_g", "bo_ln2_b",
              "v_inter_b", "v_out_b", "v_out_ln_g", "v_out_ln_b",
              "t_inter_b", "t_out_b", "t_out_ln_g", "t_out_ln_b"]
_MISC_ORDER = ["bo_dense1", "bo_dense2", "v_inter", "v_out", "t_inter", "t_out"]


def pack_params(params):
    """Concatenate QKV weights and stack every bias / LN vector once."""
    w_qkv1 = jnp.concatenate([params["q1_w"], params["k1_w"], params["v1_w"]], axis=1)
    b_qkv1 = jnp.concatenate([params["q1_b"], params["k1_b"], params["v1_b"]]).reshape(1, -1)
    w_qkv2 = jnp.concatenate([params["q2_w"], params["k2_w"], params["v2_w"]], axis=1)
    b_qkv2 = jnp.concatenate([params["q2_b"], params["k2_b"], params["v2_b"]]).reshape(1, -1)
    w_misc = jnp.stack([params[n + "_w"] for n in _MISC_ORDER])          # (6, D, D)
    vecs = jnp.stack([params[n] for n in _VEC_ORDER])                    # (14, D)
    return dict(w_qkv1=w_qkv1, b_qkv1=b_qkv1, w_qkv2=w_qkv2, b_qkv2=b_qkv2,
                w_misc=w_misc, vecs=vecs)


# ---------------------------------------------------------------------------
# Forward pass: one fused pallas_call
# ---------------------------------------------------------------------------
def co_attention_block_forward(params, v_in, v_mask, t_in, t_mask,
                               matmul_dtype=jnp.float32):
    B, Sv, D = v_in.shape
    St = t_in.shape[1]
    H = NUM_HEADS
    d = D // H
    scale = 1.0 / math.sqrt(d)

    packed = pack_params(params)
    vmask = v_mask.reshape(B, 1, Sv).astype(jnp.float32)
    tmask = t_mask.reshape(B, 1, St).astype(jnp.float32)

    kern = functools.partial(_co_attention_block_kernel,
                             hidden=D, num_heads=H, scale=scale,
                             matmul_dtype=matmul_dtype)

    def batched(shape):                      # per-batch-element block
        n = len(shape)
        return pl.BlockSpec((1,) + tuple(shape[1:]),
                            lambda b, _n=n: (b,) + (0,) * (_n - 1))

    def shared(shape):                       # weights: same block every step
        n = len(shape)
        return pl.BlockSpec(tuple(shape), lambda b, _n=n: (0,) * _n)

    out_shapes = (
        jax.ShapeDtypeStruct((B, Sv, D), jnp.float32),        # vision_layer_output
        jax.ShapeDtypeStruct((B, St, D), jnp.float32),        # text_layer_output
        jax.ShapeDtypeStruct((B, H, St, Sv), jnp.float32),    # attn1
        jax.ShapeDtypeStruct((B, H, Sv, St), jnp.float32),    # attn2
        jax.ShapeDtypeStruct((B, Sv, 2 * D), jnp.float32),    # q1|k1 slab (lane-dense)
        jax.ShapeDtypeStruct((B, St, 2 * D), jnp.float32),    # q2|k2 slab (lane-dense)
    )

    in_specs = [
        batched((B, 1, Sv)), batched((B, 1, St)),
        batched((B, Sv, D)), batched((B, St, D)),
        shared((D, 3 * D)), shared((1, 3 * D)),
        shared((D, 3 * D)), shared((1, 3 * D)),
        shared((6, D, D)), shared((14, D)),
    ]
    out_specs = tuple(batched(s.shape) for s in out_shapes)

    outs = pl.pallas_call(
        kern,
        out_shape=out_shapes,
        grid=(B,),
        in_specs=in_specs,
        out_specs=out_specs,
        scratch_shapes=[pltpu.VMEM((St, D), jnp.float32),     # ctx1 accumulator
                        pltpu.VMEM((Sv, D), jnp.float32)],    # ctx2 accumulator
        compiler_params=pltpu.CompilerParams(
            dimension_semantics=("parallel",)),   # batch sharding on v7x's 2 TCs
    )(vmask, tmask, v_in, t_in,
      packed["w_qkv1"], packed["b_qkv1"], packed["w_qkv2"], packed["b_qkv2"],
      packed["w_misc"], packed["vecs"])

    vout, tout, p1, p2, qk1, qk2 = outs

    def split_heads(x):                       # (B, S, D) -> (B, H, S, d)
        b, s, dd = x.shape
        return x.reshape(b, s, H, dd // H).transpose(0, 2, 1, 3)

    q1o, k1o = split_heads(qk1[:, :, :D]), split_heads(qk1[:, :, D:])
    q2o, k2o = split_heads(qk2[:, :, :D]), split_heads(qk2[:, :, D:])

    co_attention_probs = {
        "attn2": p2, "queries2": q2o, "keys1": k1o,
        "attn1": p1, "querues1": q1o, "keys2": k2o,   # 'querues1' typo kept from torch
    }
    return vout, tout, co_attention_probs


# ---------------------------------------------------------------------------
# Pure-JAX reference (numerical sanity check)
# ---------------------------------------------------------------------------
def reference_forward(params, v_in, v_mask, t_in, t_mask):
    B, Sv, D = v_in.shape
    St = t_in.shape[1]
    H, d = NUM_HEADS, HEAD_DIM
    hp = jax.lax.Precision.HIGHEST

    def lin(x, n):
        return jnp.dot(x, params[n + "_w"], precision=hp) + params[n + "_b"]

    def heads(x):
        return x.reshape(x.shape[0], x.shape[1], H, d).transpose(0, 2, 1, 3)

    def ln(x, g, b):
        mu = jnp.mean(x, -1, keepdims=True)
        var = jnp.mean(jnp.square(x - mu), -1, keepdims=True)
        return (x - mu) * jax.lax.rsqrt(var + LN_EPS) * g + b

    q1, k1, val1 = heads(lin(v_in, "q1")), heads(lin(v_in, "k1")), heads(lin(v_in, "v1"))
    q2, k2, val2 = heads(lin(t_in, "q2")), heads(lin(t_in, "k2")), heads(lin(t_in, "v2"))

    s1 = jnp.einsum("bhqd,bhkd->bhqk", q2, k1, precision=hp) / math.sqrt(d) * v_mask
    p1 = jax.nn.softmax(s1, axis=-1)
    c1 = jnp.einsum("bhqk,bhkd->bhqd", p1, val1, precision=hp)
    c1 = c1.transpose(0, 2, 1, 3).reshape(B, St, D)

    s2 = jnp.einsum("bhqd,bhkd->bhqk", q1, k2, precision=hp) / math.sqrt(d) * t_mask
    p2 = jax.nn.softmax(s2, axis=-1)
    c2 = jnp.einsum("bhqk,bhkd->bhqd", p2, val2, precision=hp)
    c2 = c2.transpose(0, 2, 1, 3).reshape(B, Sv, D)

    vis_attn = ln(lin(c2, "bo_dense1") + v_in, params["bo_ln1_g"], params["bo_ln1_b"])
    txt_attn = ln(lin(c1, "bo_dense2") + t_in, params["bo_ln2_g"], params["bo_ln2_b"])

    vis_i = jax.nn.gelu(lin(vis_attn, "v_inter"), approximate=False)
    vis_out = ln(lin(vis_i, "v_out") + vis_attn, params["v_out_ln_g"], params["v_out_ln_b"])
    txt_i = jax.nn.gelu(lin(txt_attn, "t_inter"), approximate=False)
    txt_out = ln(lin(txt_i, "t_out") + txt_attn, params["t_out_ln_g"], params["t_out_ln_b"])
    return vis_out, txt_out, p1, p2, q1, k1, q2, k2


# ---------------------------------------------------------------------------
if __name__ == "__main__":
    key = jax.random.PRNGKey(0)
    k_param, k_v, k_t, k_mv, k_mt = jax.random.split(key, 5)

    B, Sv, St = 2, 16, 8
    params = init_params(k_param)

    vision_input = jax.random.normal(k_v, (B, Sv, HIDDEN), jnp.float32)
    text_input = jax.random.normal(k_t, (B, St, HIDDEN), jnp.float32)
    vision_mask = jax.random.bernoulli(k_mv, 0.85, (B, 1, 1, Sv)).astype(jnp.float32)
    text_mask = jax.random.bernoulli(k_mt, 0.85, (B, 1, 1, St)).astype(jnp.float32)

    # --- f32 path (correctness) ---------------------------------------------
    fwd = jax.jit(functools.partial(co_attention_block_forward,
                                    matmul_dtype=jnp.float32))
    vis_out, txt_out, co_probs = fwd(params, vision_input, vision_mask,
                                     text_input, text_mask)
    jax.block_until_ready((vis_out, txt_out, co_probs))

    (vis_ref, txt_ref, p1_ref_a, p2_ref_a,
     q1_ref_a, k1_ref_a, q2_ref_a, k2_ref_a) = reference_forward(
        params, vision_input, vision_mask, text_input, text_mask)

    assert jnp.allclose(vis_out, vis_ref, rtol=5e-3, atol=5e-3), "vision mismatch"
    assert jnp.allclose(txt_out, txt_ref, rtol=5e-3, atol=5e-3), "text mismatch"
    assert jnp.allclose(co_probs["attn1"], p1_ref_a, rtol=5e-3, atol=5e-3), "attn1 mismatch"
    assert jnp.allclose(co_probs["attn2"], p2_ref_a, rtol=5e-3, atol=5e-3), "attn2 mismatch"
    assert jnp.allclose(co_probs["querues1"], q1_ref_a, rtol=5e-3, atol=5e-3), "q1 mismatch"
    assert jnp.allclose(co_probs["keys1"], k1_ref_a, rtol=5e-3, atol=5e-3), "k1 mismatch"
    assert jnp.allclose(co_probs["queries2"], q2_ref_a, rtol=5e-3, atol=5e-3), "q2 mismatch"
    assert jnp.allclose(co_probs["keys2"], k2_ref_a, rtol=5e-3, atol=5e-3), "k2 mismatch"

    # --- bf16 MXU-input path (v6e/v7x lever; elementwise stays f32) ----------
    fwd_bf16 = jax.jit(functools.partial(co_attention_block_forward,
                                         matmul_dtype=jnp.bfloat16))
    vis_bf, txt_bf, _ = fwd_bf16(params, vision_input, vision_mask,
                                 text_input, text_mask)
    jax.block_until_ready((vis_bf, txt_bf))
    assert jnp.allclose(vis_bf, vis_ref, rtol=1e-1, atol=1e-1), "bf16 vision drift"
    assert jnp.allclose(txt_bf, txt_ref, rtol=1e-1, atol=1e-1), "bf16 text drift"

    print("KERNEL_OK")
</pallas_src>

<mosaic_0001>
module attributes {stable_mosaic.version = 11 : i64} {
  func.func @_co_attention_block_kernel(%arg0: i32, %arg1: memref<1x1x16xf32, #tpu.memory_space<vmem>>, %arg2: memref<1x1x8xf32, #tpu.memory_space<vmem>>, %arg3: memref<1x16x64xf32, #tpu.memory_space<vmem>>, %arg4: memref<1x8x64xf32, #tpu.memory_space<vmem>>, %arg5: memref<64x192xf32, #tpu.memory_space<vmem>>, %arg6: memref<1x192xf32, #tpu.memory_space<vmem>>, %arg7: memref<64x192xf32, #tpu.memory_space<vmem>>, %arg8: memref<1x192xf32, #tpu.memory_space<vmem>>, %arg9: memref<6x64x64xf32, #tpu.memory_space<vmem>>, %arg10: memref<14x64xf32, #tpu.memory_space<vmem>>, %arg11: memref<1x16x64xf32, #tpu.memory_space<vmem>>, %arg12: memref<1x8x64xf32, #tpu.memory_space<vmem>>, %arg13: memref<1x4x8x16xf32, #tpu.memory_space<vmem>>, %arg14: memref<1x4x16x8xf32, #tpu.memory_space<vmem>>, %arg15: memref<1x16x128xf32, #tpu.memory_space<vmem>>, %arg16: memref<1x8x128xf32, #tpu.memory_space<vmem>>, %arg17: memref<8x64xf32, #tpu.memory_space<vmem>>, %arg18: memref<16x64xf32, #tpu.memory_space<vmem>>) attributes {dimension_semantics = [#tpu.dimension_semantics<parallel>], iteration_bounds = array<i64: 2>, scalar_prefetch = 0 : i64, scratch_operands = 2 : i64, tpu.core_type = #tpu.core_type<tc>, window_params = [{transform_indices = @transform_0, window_bounds = array<i64: 1, 1, 16>}, {transform_indices = @transform_1, window_bounds = array<i64: 1, 1, 8>}, {transform_indices = @transform_2, window_bounds = array<i64: 1, 16, 64>}, {transform_indices = @transform_3, window_bounds = array<i64: 1, 8, 64>}, {pipeline_mode = #tpu.pipeline_mode<synchronous>, transform_indices = @transform_4, window_bounds = array<i64: 64, 192>}, {pipeline_mode = #tpu.pipeline_mode<synchronous>, transform_indices = @transform_5, window_bounds = array<i64: 1, 192>}, {pipeline_mode = #tpu.pipeline_mode<synchronous>, transform_indices = @transform_6, window_bounds = array<i64: 64, 192>}, {pipeline_mode = #tpu.pipeline_mode<synchronous>, transform_indices = @transform_7, window_bounds = array<i64: 1, 192>}, {pipeline_mode = #tpu.pipeline_mode<synchronous>, transform_indices = @transform_8, window_bounds = array<i64: 6, 64, 64>}, {pipeline_mode = #tpu.pipeline_mode<synchronous>, transform_indices = @transform_9, window_bounds = array<i64: 14, 64>}, {transform_indices = @transform_10, window_bounds = array<i64: 1, 16, 64>}, {transform_indices = @transform_11, window_bounds = array<i64: 1, 8, 64>}, {transform_indices = @transform_12, window_bounds = array<i64: 1, 4, 8, 16>}, {transform_indices = @transform_13, window_bounds = array<i64: 1, 4, 16, 8>}, {transform_indices = @transform_14, window_bounds = array<i64: 1, 16, 128>}, {transform_indices = @transform_15, window_bounds = array<i64: 1, 8, 128>}]} {
    %c0 = arith.constant 0 : index
    %c0_0 = arith.constant 0 : index
    %c0_1 = arith.constant 0 : index
    %0 = vector.load %arg3[%c0, %c0_0, %c0_1] : memref<1x16x64xf32, #tpu.memory_space<vmem>>, vector<1x16x64xf32>
    %1 = vector.shape_cast %0 : vector<1x16x64xf32> to vector<16x64xf32>
    %c0_2 = arith.constant 0 : index
    %c0_3 = arith.constant 0 : index
    %c0_4 = arith.constant 0 : index
    %2 = vector.load %arg4[%c0_2, %c0_3, %c0_4] : memref<1x8x64xf32, #tpu.memory_space<vmem>>, vector<1x8x64xf32>
    %3 = vector.shape_cast %2 : vector<1x8x64xf32> to vector<8x64xf32>
    %c0_5 = arith.constant 0 : index
    %c0_6 = arith.constant 0 : index
    %c0_7 = arith.constant 0 : index
    %4 = vector.load %arg1[%c0_5, %c0_6, %c0_7] : memref<1x1x16xf32, #tpu.memory_space<vmem>>, vector<1x1x16xf32>
    %5 = vector.shape_cast %4 : vector<1x1x16xf32> to vector<1x16xf32>
    %c0_8 = arith.constant 0 : index
    %c0_9 = arith.constant 0 : index
    %c0_10 = arith.constant 0 : index
    %6 = vector.load %arg2[%c0_8, %c0_9, %c0_10] : memref<1x1x8xf32, #tpu.memory_space<vmem>>, vector<1x1x8xf32>
    %7 = vector.shape_cast %6 : vector<1x1x8xf32> to vector<1x8xf32>
    %c0_11 = arith.constant 0 : index
    %c0_12 = arith.constant 0 : index
    %8 = vector.load %arg5[%c0_11, %c0_12] : memref<64x192xf32, #tpu.memory_space<vmem>>, vector<64x192xf32>
    %cst = arith.constant dense<0.000000e+00> : vector<16x192xf32>
    %9 = tpu.matmul %1, %8, %cst {dimension_numbers = #tpu.dot_dimension_numbers<[1], [0], [0], [1], [0, 0, 1, 1], [], []>} : vector<16x64xf32>, vector<64x192xf32>, vector<16x192xf32> -> vector<16x192xf32>
    %c0_13 = arith.constant 0 : index
    %c0_14 = arith.constant 0 : index
    %10 = vector.load %arg6[%c0_13, %c0_14] : memref<1x192xf32, #tpu.memory_space<vmem>>, vector<1x192xf32>
    %11 = vector.broadcast %10 : vector<1x192xf32> to vector<16x192xf32>
    %12 = arith.addf %9, %11 : vector<16x192xf32>
    %c0_15 = arith.constant 0 : index
    %c0_16 = arith.constant 0 : index
    %13 = vector.load %arg7[%c0_15, %c0_16] : memref<64x192xf32, #tpu.memory_space<vmem>>, vector<64x192xf32>
    %cst_17 = arith.constant dense<0.000000e+00> : vector<8x192xf32>
    %14 = tpu.matmul %3, %13, %cst_17 {dimension_numbers = #tpu.dot_dimension_numbers<[1], [0], [0], [1], [0, 0, 1, 1], [], []>} : vector<8x64xf32>, vector<64x192xf32>, vector<8x192xf32> -> vector<8x192xf32>
    %c0_18 = arith.constant 0 : index
    %c0_19 = arith.constant 0 : index
    %15 = vector.load %arg8[%c0_18, %c0_19] : memref<1x192xf32, #tpu.memory_space<vmem>>, vector<1x192xf32>
    %16 = vector.broadcast %15 : vector<1x192xf32> to vector<8x192xf32>
    %17 = arith.addf %14, %16 : vector<8x192xf32>
    %18 = vector.extract_strided_slice %12 {offsets = [0, 0], sizes = [16, 128], strides = [1, 1]} : vector<16x192xf32> to vector<16x128xf32>
    %c0_20 = arith.constant 0 : index
    %c0_21 = arith.constant 0 : index
    %c0_22 = arith.constant 0 : index
    %19 = vector.load %arg15[%c0_20, %c0_21, %c0_22] : memref<1x16x128xf32, #tpu.memory_space<vmem>>, vector<1x16x128xf32>
    %20 = vector.shape_cast %19 : vector<1x16x128xf32> to vector<16x128xf32>
    %21 = vector.shape_cast %18 : vector<16x128xf32> to vector<1x16x128xf32>
    tpu.vector_store %arg15[%c0_20, %c0_21, %c0_22], %21 {strides = array<i32>} : memref<1x16x128xf32, #tpu.memory_space<vmem>>, vector<1x16x128xf32>,
    %22 = vector.extract_strided_slice %17 {offsets = [0, 0], sizes = [8, 128], strides = [1, 1]} : vector<8x192xf32> to vector<8x128xf32>
    %c0_23 = arith.constant 0 : index
    %c0_24 = arith.constant 0 : index
    %c0_25 = arith.constant 0 : index
    %23 = vector.load %arg16[%c0_23, %c0_24, %c0_25] : memref<1x8x128xf32, #tpu.memory_space<vmem>>, vector<1x8x128xf32>
    %24 = vector.shape_cast %23 : vector<1x8x128xf32> to vector<8x128xf32>
    %25 = vector.shape_cast %22 : vector<8x128xf32> to vector<1x8x128xf32>
    tpu.vector_store %arg16[%c0_23, %c0_24, %c0_25], %25 {strides = array<i32>} : memref<1x8x128xf32, #tpu.memory_space<vmem>>, vector<1x8x128xf32>,
    %26 = vector.extract_strided_slice %12 {offsets = [0, 0], sizes = [16, 64], strides = [1, 1]} : vector<16x192xf32> to vector<16x64xf32>
    %cst_26 = arith.constant 2.500000e-01 : f32
    %27 = vector.broadcast %cst_26 : f32 to vector<16x64xf32>
    %28 = arith.mulf %26, %27 : vector<16x64xf32>
    %29 = vector.extract_strided_slice %12 {offsets = [0, 64], sizes = [16, 64], strides = [1, 1]} : vector<16x192xf32> to vector<16x64xf32>
    %30 = vector.extract_strided_slice %12 {offsets = [0, 128], sizes = [16, 64], strides = [1, 1]} : vector<16x192xf32> to vector<16x64xf32>
    %31 = vector.extract_strided_slice %17 {offsets = [0, 0], sizes = [8, 64], strides = [1, 1]} : vector<8x192xf32> to vector<8x64xf32>
    %cst_27 = arith.constant 2.500000e-01 : f32
    %32 = vector.broadcast %cst_27 : f32 to vector<8x64xf32>
    %33 = arith.mulf %31, %32 : vector<8x64xf32>
    %34 = vector.extract_strided_slice %17 {offsets = [0, 64], sizes = [8, 64], strides = [1, 1]} : vector<8x192xf32> to vector<8x64xf32>
    %35 = vector.extract_strided_slice %17 {offsets = [0, 128], sizes = [8, 64], strides = [1, 1]} : vector<8x192xf32> to vector<8x64xf32>
    %36 = vector.extract_strided_slice %28 {offsets = [0, 0], sizes = [16, 16], strides = [1, 1]} : vector<16x64xf32> to vector<16x16xf32>
    %37 = vector.extract_strided_slice %29 {offsets = [0, 0], sizes = [16, 16], strides = [1, 1]} : vector<16x64xf32> to vector<16x16xf32>
    %38 = vector.extract_strided_slice %30 {offsets = [0, 0], sizes = [16, 16], strides = [1, 1]} : vector<16x64xf32> to vector<16x16xf32>
    %39 = vector.extract_strided_slice %33 {offsets = [0, 0], sizes = [8, 16], strides = [1, 1]} : vector<8x64xf32> to vector<8x16xf32>
    %40 = vector.extract_strided_slice %34 {offsets = [0, 0], sizes = [8, 16], strides = [1, 1]} : vector<8x64xf32> to vector<8x16xf32>
    %41 = vector.extract_strided_slice %35 {offsets = [0, 0], sizes = [8, 16], strides = [1, 1]} : vector<8x64xf32> to vector<8x16xf32>
    %cst_28 = arith.constant dense<0.000000e+00> : vector<8x16xf32>
    %42 = tpu.matmul %39, %37, %cst_28 {dimension_numbers = #tpu.dot_dimension_numbers<[1], [1], [0], [0], [0, 0, 1, 0], [], []>} : vector<8x16xf32>, vector<16x16xf32>, vector<8x16xf32> -> vector<8x16xf32>
    %43 = vector.broadcast %5 : vector<1x16xf32> to vector<8x16xf32>
    %44 = arith.mulf %42, %43 : vector<8x16xf32>
    %cst_29 = arith.constant dense<0xFF800000> : vector<8xf32>
    %45 = vector.multi_reduction <maximumf>, %44, %cst_29 [1] : vector<8x16xf32> to vector<8xf32>
    %46 = vector.shape_cast %45 : vector<8xf32> to vector<8x1xf32>
    %47 = vector.broadcast %46 : vector<8x1xf32> to vector<8x16xf32>
    %48 = arith.subf %44, %47 : vector<8x16xf32>
    %49 = math.exp %48 : vector<8x16xf32>
    %cst_30 = arith.constant dense<0.000000e+00> : vector<8xf32>
    %50 = vector.multi_reduction <add>, %49, %cst_30 [1] : vector<8x16xf32> to vector<8xf32>
    %51 = vector.shape_cast %50 : vector<8xf32> to vector<8x1xf32>
    %52 = tpu.reciprocal %51 {approx = true} : vector<8x1xf32> -> vector<8x1xf32>
    %53 = vector.broadcast %52 : vector<8x1xf32> to vector<8x16xf32>
    %54 = arith.mulf %49, %53 : vector<8x16xf32>
    %c0_31 = arith.constant 0 : index
    %c0_32 = arith.constant 0 : index
    %c0_33 = arith.constant 0 : index
    %c0_34 = arith.constant 0 : index
    %55 = vector.load %arg13[%c0_31, %c0_32, %c0_33, %c0_34] : memref<1x4x8x16xf32, #tpu.memory_space<vmem>>, vector<1x1x8x16xf32>
    %56 = vector.shape_cast %55 : vector<1x1x8x16xf32> to vector<8x16xf32>
    %57 = vector.shape_cast %54 : vector<8x16xf32> to vector<1x1x8x16xf32>
    tpu.vector_store %arg13[%c0_31, %c0_32, %c0_33, %c0_34], %57 {strides = array<i32>} : memref<1x4x8x16xf32, #tpu.memory_space<vmem>>, vector<1x1x8x16xf32>,
    %cst_35 = arith.constant dense<0.000000e+00> : vector<8x16xf32>
    %58 = tpu.matmul %54, %38, %cst_35 {dimension_numbers = #tpu.dot_dimension_numbers<[1], [0], [0], [1], [0, 0, 1, 1], [], []>} : vector<8x16xf32>, vector<16x16xf32>, vector<8x16xf32> -> vector<8x16xf32>
    %c0_36 = arith.constant 0 : index
    %c0_37 = arith.constant 0 : index
    %59 = vector.load %arg17[%c0_36, %c0_37] : memref<8x64xf32, #tpu.memory_space<vmem>>, vector<8x16xf32>
    tpu.vector_store %arg17[%c0_36, %c0_37], %58 {strides = array<i32>} : memref<8x64xf32, #tpu.memory_space<vmem>>, vector<8x16xf32>,
    %cst_38 = arith.constant dense<0.000000e+00> : vector<16x8xf32>
    %60 = tpu.matmul %36, %40, %cst_38 {dimension_numbers = #tpu.dot_dimension_numbers<[1], [1], [0], [0], [0, 0, 1, 0], [], []>} : vector<16x16xf32>, vector<8x16xf32>, vector<16x8xf32> -> vector<16x8xf32>
    %61 = vector.broadcast %7 : vector<1x8xf32> to vector<16x8xf32>
    %62 = arith.mulf %60, %61 : vector<16x8xf32>
    %cst_39 = arith.constant dense<0xFF800000> : vector<16xf32>
    %63 = vector.multi_reduction <maximumf>, %62, %cst_39 [1] : vector<16x8xf32> to vector<16xf32>
    %64 = vector.shape_cast %63 : vector<16xf32> to vector<16x1xf32>
    %65 = vector.broadcast %64 : vector<16x1xf32> to vector<16x8xf32>
    %66 = arith.subf %62, %65 : vector<16x8xf32>
    %67 = math.exp %66 : vector<16x8xf32>
    %cst_40 = arith.constant dense<0.000000e+00> : vector<16xf32>
    %68 = vector.multi_reduction <add>, %67, %cst_40 [1] : vector<16x8xf32> to vector<16xf32>
    %69 = vector.shape_cast %68 : vector<16xf32> to vector<16x1xf32>
    %70 = tpu.reciprocal %69 {approx = true} : vector<16x1xf32> -> vector<16x1xf32>
    %71 = vector.broadcast %70 : vector<16x1xf32> to vector<16x8xf32>
    %72 = arith.mulf %67, %71 : vector<16x8xf32>
    %c0_41 = arith.constant 0 : index
    %c0_42 = arith.constant 0 : index
    %c0_43 = arith.constant 0 : index
    %c0_44 = arith.constant 0 : index
    %73 = vector.load %arg14[%c0_41, %c0_42, %c0_43, %c0_44] : memref<1x4x16x8xf32, #tpu.memory_space<vmem>>, vector<1x1x16x8xf32>
    %74 = vector.shape_cast %73 : vector<1x1x16x8xf32> to vector<16x8xf32>
    %75 = vector.shape_cast %72 : vector<16x8xf32> to vector<1x1x16x8xf32>
    tpu.vector_store %arg14[%c0_41, %c0_42, %c0_43, %c0_44], %75 {strides = array<i32>} : memref<1x4x16x8xf32, #tpu.memory_space<vmem>>, vector<1x1x16x8xf32>,
    %cst_45 = arith.constant dense<0.000000e+00> : vector<16x16xf32>
    %76 = tpu.matmul %72, %41, %cst_45 {dimension_numbers = #tpu.dot_dimension_numbers<[1], [0], [0], [1], [0, 0, 1, 1], [], []>} : vector<16x8xf32>, vector<8x16xf32>, vector<16x16xf32> -> vector<16x16xf32>
    %c0_46 = arith.constant 0 : index
    %c0_47 = arith.constant 0 : index
    %77 = vector.load %arg18[%c0_46, %c0_47] : memref<16x64xf32, #tpu.memory_space<vmem>>, vector<16x16xf32>
    tpu.vector_store %arg18[%c0_46, %c0_47], %76 {strides = array<i32>} : memref<16x64xf32, #tpu.memory_space<vmem>>, vector<16x16xf32>,
    %78 = vector.extract_strided_slice %28 {offsets = [0, 16], sizes = [16, 16], strides = [1, 1]} : vector<16x64xf32> to vector<16x16xf32>
    %79 = vector.extract_strided_slice %29 {offsets = [0, 16], sizes = [16, 16], strides = [1, 1]} : vector<16x64xf32> to vector<16x16xf32>
    %80 = vector.extract_strided_slice %30 {offsets = [0, 16], sizes = [16, 16], strides = [1, 1]} : vector<16x64xf32> to vector<16x16xf32>
    %81 = vector.extract_strided_slice %33 {offsets = [0, 16], sizes = [8, 16], strides = [1, 1]} : vector<8x64xf32> to vector<8x16xf32>
    %82 = vector.extract_strided_slice %34 {offsets = [0, 16], sizes = [8, 16], strides = [1, 1]} : vector<8x64xf32> to vector<8x16xf32>
    %83 = vector.extract_strided_slice %35 {offsets = [0, 16], sizes = [8, 16], strides = [1, 1]} : vector<8x64xf32> to vector<8x16xf32>
    %cst_48 = arith.constant dense<0.000000e+00> : vector<8x16xf32>
    %84 = tpu.matmul %81, %79, %cst_48 {dimension_numbers = #tpu.dot_dimension_numbers<[1], [1], [0], [0], [0, 0, 1, 0], [], []>} : vector<8x16xf32>, vector<16x16xf32>, vector<8x16xf32> -> vector<8x16xf32>
    %85 = vector.broadcast %5 : vector<1x16xf32> to vector<8x16xf32>
    %86 = arith.mulf %84, %85 : vector<8x16xf32>
    %cst_49 = arith.constant dense<0xFF800000> : vector<8xf32>
    %87 = vector.multi_reduction <maximumf>, %86, %cst_49 [1] : vector<8x16xf32> to vector<8xf32>
    %88 = vector.shape_cast %87 : vector<8xf32> to vector<8x1xf32>
    %89 = vector.broadcast %88 : vector<8x1xf32> to vector<8x16xf32>
    %90 = arith.subf %86, %89 : vector<8x16xf32>
    %91 = math.exp %90 : vector<8x16xf32>
    %cst_50 = arith.constant dense<0.000000e+00> : vector<8xf32>
    %92 = vector.multi_reduction <add>, %91, %cst_50 [1] : vector<8x16xf32> to vector<8xf32>
    %93 = vector.shape_cast %92 : vector<8xf32> to vector<8x1xf32>
    %94 = tpu.reciprocal %93 {approx = true} : vector<8x1xf32> -> vector<8x1xf32>
    %95 = vector.broadcast %94 : vector<8x1xf32> to vector<8x16xf32>
    %96 = arith.mulf %91, %95 : vector<8x16xf32>
    %c0_51 = arith.constant 0 : index
    %c1 = arith.constant 1 : index
    %c0_52 = arith.constant 0 : index
    %c0_53 = arith.constant 0 : index
    %97 = vector.load %arg13[%c0_51, %c1, %c0_52, %c0_53] : memref<1x4x8x16xf32, #tpu.memory_space<vmem>>, vector<1x1x8x16xf32>
    %98 = vector.shape_cast %97 : vector<1x1x8x16xf32> to vector<8x16xf32>
    %99 = vector.shape_cast %96 : vector<8x16xf32> to vector<1x1x8x16xf32>
    tpu.vector_store %arg13[%c0_51, %c1, %c0_52, %c0_53], %99 {strides = array<i32>} : memref<1x4x8x16xf32, #tpu.memory_space<vmem>>, vector<1x1x8x16xf32>,
    %cst_54 = arith.constant dense<0.000000e+00> : vector<8x16xf32>
    %100 = tpu.matmul %96, %80, %cst_54 {dimension_numbers = #tpu.dot_dimension_numbers<[1], [0], [0], [1], [0, 0, 1, 1], [], []>} : vector<8x16xf32>, vector<16x16xf32>, vector<8x16xf32> -> vector<8x16xf32>
    %c0_55 = arith.constant 0 : index
    %c16 = arith.constant 16 : index
    %101 = vector.load %arg17[%c0_55, %c16] : memref<8x64xf32, #tpu.memory_space<vmem>>, vector<8x16xf32>
    tpu.vector_store %arg17[%c0_55, %c16], %100 {strides = array<i32>} : memref<8x64xf32, #tpu.memory_space<vmem>>, vector<8x16xf32>,
    %cst_56 = arith.constant dense<0.000000e+00> : vector<16x8xf32>
    %102 = tpu.matmul %78, %82, %cst_56 {dimension_numbers = #tpu.dot_dimension_numbers<[1], [1], [0], [0], [0, 0, 1, 0], [], []>} : vector<16x16xf32>, vector<8x16xf32>, vector<16x8xf32> -> vector<16x8xf32>
    %103 = vector.broadcast %7 : vector<1x8xf32> to vector<16x8xf32>
    %104 = arith.mulf %102, %103 : vector<16x8xf32>
    %cst_57 = arith.constant dense<0xFF800000> : vector<16xf32>
    %105 = vector.multi_reduction <maximumf>, %104, %cst_57 [1] : vector<16x8xf32> to vector<16xf32>
    %106 = vector.shape_cast %105 : vector<16xf32> to vector<16x1xf32>
    %107 = vector.broadcast %106 : vector<16x1xf32> to vector<16x8xf32>
    %108 = arith.subf %104, %107 : vector<16x8xf32>
    %109 = math.exp %108 : vector<16x8xf32>
    %cst_58 = arith.constant dense<0.000000e+00> : vector<16xf32>
    %110 = vector.multi_reduction <add>, %109, %cst_58 [1] : vector<16x8xf32> to vector<16xf32>
    %111 = vector.shape_cast %110 : vector<16xf32> to vector<16x1xf32>
    %112 = tpu.reciprocal %111 {approx = true} : vector<16x1xf32> -> vector<16x1xf32>
    %113 = vector.broadcast %112 : vector<16x1xf32> to vector<16x8xf32>
    %114 = arith.mulf %109, %113 : vector<16x8xf32>
    %c0_59 = arith.constant 0 : index
    %c1_60 = arith.constant 1 : index
    %c0_61 = arith.constant 0 : index
    %c0_62 = arith.constant 0 : index
    %115 = vector.load %arg14[%c0_59, %c1_60, %c0_61, %c0_62] : memref<1x4x16x8xf32, #tpu.memory_space<vmem>>, vector<1x1x16x8xf32>
    %116 = vector.shape_cast %115 : vector<1x1x16x8xf32> to vector<16x8xf32>
    %117 = vector.shape_cast %114 : vector<16x8xf32> to vector<1x1x16x8xf32>
    tpu.vector_store %arg14[%c0_59, %c1_60, %c0_61, %c0_62], %117 {strides = array<i32>} : memref<1x4x16x8xf32, #tpu.memory_space<vmem>>, vector<1x1x16x8xf32>,
    %cst_63 = arith.constant dense<0.000000e+00> : vector<16x16xf32>
    %118 = tpu.matmul %114, %83, %cst_63 {dimension_numbers = #tpu.dot_dimension_numbers<[1], [0], [0], [1], [0, 0, 1, 1], [], []>} : vector<16x8xf32>, vector<8x16xf32>, vector<16x16xf32> -> vector<16x16xf32>
    %c0_64 = arith.constant 0 : index
    %c16_65 = arith.constant 16 : index
    %119 = vector.load %arg18[%c0_64, %c16_65] : memref<16x64xf32, #tpu.memory_space<vmem>>, vector<16x16xf32>
    tpu.vector_store %arg18[%c0_64, %c16_65], %118 {strides = array<i32>} : memref<16x64xf32, #tpu.memory_space<vmem>>, vector<16x16xf32>,
    %120 = vector.extract_strided_slice %28 {offsets = [0, 32], sizes = [16, 16], strides = [1, 1]} : vector<16x64xf32> to vector<16x16xf32>
    %121 = vector.extract_strided_slice %29 {offsets = [0, 32], sizes = [16, 16], strides = [1, 1]} : vector<16x64xf32> to vector<16x16xf32>
    %122 = vector.extract_strided_slice %30 {offsets = [0, 32], sizes = [16, 16], strides = [1, 1]} : vector<16x64xf32> to vector<16x16xf32>
    %123 = vector.extract_strided_slice %33 {offsets = [0, 32], sizes = [8, 16], strides = [1, 1]} : vector<8x64xf32> to vector<8x16xf32>
    %124 = vector.extract_strided_slice %34 {offsets = [0, 32], sizes = [8, 16], strides = [1, 1]} : vector<8x64xf32> to vector<8x16xf32>
    %125 = vector.extract_strided_slice %35 {offsets = [0, 32], sizes = [8, 16], strides = [1, 1]} : vector<8x64xf32> to vector<8x16xf32>
    %cst_66 = arith.constant dense<0.000000e+00> : vector<8x16xf32>
    %126 = tpu.matmul %123, %121, %cst_66 {dimension_numbers = #tpu.dot_dimension_numbers<[1], [1], [0], [0], [0, 0, 1, 0], [], []>} : vector<8x16xf32>, vector<16x16xf32>, vector<8x16xf32> -> vector<8x16xf32>
    %127 = vector.broadcast %5 : vector<1x16xf32> to vector<8x16xf32>
    %128 = arith.mulf %126, %127 : vector<8x16xf32>
    %cst_67 = arith.constant dense<0xFF800000> : vector<8xf32>
    %129 = vector.multi_reduction <maximumf>, %128, %cst_67 [1] : vector<8x16xf32> to vector<8xf32>
    %130 = vector.shape_cast %129 : vector<8xf32> to vector<8x1xf32>
    %131 = vector.broadcast %130 : vector<8x1xf32> to vector<8x16xf32>
    %132 = arith.subf %128, %131 : vector<8x16xf32>
    %133 = math.exp %132 : vector<8x16xf32>
    %cst_68 = arith.constant dense<0.000000e+00> : vector<8xf32>
    %134 = vector.multi_reduction <add>, %133, %cst_68 [1] : vector<8x16xf32> to vector<8xf32>
    %135 = vector.shape_cast %134 : vector<8xf32> to vector<8x1xf32>
    %136 = tpu.reciprocal %135 {approx = true} : vector<8x1xf32> -> vector<8x1xf32>
    %137 = vector.broadcast %136 : vector<8x1xf32> to vector<8x16xf32>
    %138 = arith.mulf %133, %137 : vector<8x16xf32>
    %c0_69 = arith.constant 0 : index
    %c2 = arith.constant 2 : index
    %c0_70 = arith.constant 0 : index
    %c0_71 = arith.constant 0 : index
    %139 = vector.load %arg13[%c0_69, %c2, %c0_70, %c0_71] : memref<1x4x8x16xf32, #tpu.memory_space<vmem>>, vector<1x1x8x16xf32>
    %140 = vector.shape_cast %139 : vector<1x1x8x16xf32> to vector<8x16xf32>
    %141 = vector.shape_cast %138 : vector<8x16xf32> to vector<1x1x8x16xf32>
    tpu.vector_store %arg13[%c0_69, %c2, %c0_70, %c0_71], %141 {strides = array<i32>} : memref<1x4x8x16xf32, #tpu.memory_space<vmem>>, vector<1x1x8x16xf32>,
    %cst_72 = arith.constant dense<0.000000e+00> : vector<8x16xf32>
    %142 = tpu.matmul %138, %122, %cst_72 {dimension_numbers = #tpu.dot_dimension_numbers<[1], [0], [0], [1], [0, 0, 1, 1], [], []>} : vector<8x16xf32>, vector<16x16xf32>, vector<8x16xf32> -> vector<8x16xf32>
    %c0_73 = arith.constant 0 : index
    %c32 = arith.constant 32 : index
    %143 = vector.load %arg17[%c0_73, %c32] : memref<8x64xf32, #tpu.memory_space<vmem>>, vector<8x16xf32>
    tpu.vector_store %arg17[%c0_73, %c32], %142 {strides = array<i32>} : memref<8x64xf32, #tpu.memory_space<vmem>>, vector<8x16xf32>,
    %cst_74 = arith.constant dense<0.000000e+00> : vector<16x8xf32>
    %144 = tpu.matmul %120, %124, %cst_74 {dimension_numbers = #tpu.dot_dimension_numbers<[1], [1], [0], [0], [0, 0, 1, 0], [], []>} : vector<16x16xf32>, vector<8x16xf32>, vector<16x8xf32> -> vector<16x8xf32>
    %145 = vector.broadcast %7 : vector<1x8xf32> to vector<16x8xf32>
    %146 = arith.mulf %144, %145 : vector<16x8xf32>
    %cst_75 = arith.constant dense<0xFF800000> : vector<16xf32>
    %147 = vector.multi_reduction <maximumf>, %146, %cst_75 [1] : vector<16x8xf32> to vector<16xf32>
    %148 = vector.shape_cast %147 : vector<16xf32> to vector<16x1xf32>
    %149 = vector.broadcast %148 : vector<16x1xf32> to vector<16x8xf32>
    %150 = arith.subf %146, %149 : vector<16x8xf32>
    %151 = math.exp %150 : vector<16x8xf32>
    %cst_76 = arith.constant dense<0.000000e+00> : vector<16xf32>
    %152 = vector.multi_reduction <add>, %151, %cst_76 [1] : vector<16x8xf32> to vector<16xf32>
    %153 = vector.shape_cast %152 : vector<16xf32> to vector<16x1xf32>
    %154 = tpu.reciprocal %153 {approx = true} : vector<16x1xf32> -> vector<16x1xf32>
    %155 = vector.broadcast %154 : vector<16x1xf32> to vector<16x8xf32>
    %156 = arith.mulf %151, %155 : vector<16x8xf32>
    %c0_77 = arith.constant 0 : index
    %c2_78 = arith.constant 2 : index
    %c0_79 = arith.constant 0 : index
    %c0_80 = arith.constant 0 : index
    %157 = vector.load %arg14[%c0_77, %c2_78, %c0_79, %c0_80] : memref<1x4x16x8xf32, #tpu.memory_space<vmem>>, vector<1x1x16x8xf32>
    %158 = vector.shape_cast %157 : vector<1x1x16x8xf32> to vector<16x8xf32>
    %159 = vector.shape_cast %156 : vector<16x8xf32> to vector<1x1x16x8xf32>
    tpu.vector_store %arg14[%c0_77, %c2_78, %c0_79, %c0_80], %159 {strides = array<i32>} : memref<1x4x16x8xf32, #tpu.memory_space<vmem>>, vector<1x1x16x8xf32>,
    %cst_81 = arith.constant dense<0.000000e+00> : vector<16x16xf32>
    %160 = tpu.matmul %156, %125, %cst_81 {dimension_numbers = #tpu.dot_dimension_numbers<[1], [0], [0], [1], [0, 0, 1, 1], [], []>} : vector<16x8xf32>, vector<8x16xf32>, vector<16x16xf32> -> vector<16x16xf32>
    %c0_82 = arith.constant 0 : index
    %c32_83 = arith.constant 32 : index
    %161 = vector.load %arg18[%c0_82, %c32_83] : memref<16x64xf32, #tpu.memory_space<vmem>>, vector<16x16xf32>
    tpu.vector_store %arg18[%c0_82, %c32_83], %160 {strides = array<i32>} : memref<16x64xf32, #tpu.memory_space<vmem>>, vector<16x16xf32>,
    %162 = vector.extract_strided_slice %28 {offsets = [0, 48], sizes = [16, 16], strides = [1, 1]} : vector<16x64xf32> to vector<16x16xf32>
    %163 = vector.extract_strided_slice %29 {offsets = [0, 48], sizes = [16, 16], strides = [1, 1]} : vector<16x64xf32> to vector<16x16xf32>
    %164 = vector.extract_strided_slice %30 {offsets = [0, 48], sizes = [16, 16], strides = [1, 1]} : vector<16x64xf32> to vector<16x16xf32>
    %165 = vector.extract_strided_slice %33 {offsets = [0, 48], sizes = [8, 16], strides = [1, 1]} : vector<8x64xf32> to vector<8x16xf32>
    %166 = vector.extract_strided_slice %34 {offsets = [0, 48], sizes = [8, 16], strides = [1, 1]} : vector<8x64xf32> to vector<8x16xf32>
    %167 = vector.extract_strided_slice %35 {offsets = [0, 48], sizes = [8, 16], strides = [1, 1]} : vector<8x64xf32> to vector<8x16xf32>
    %cst_84 = arith.constant dense<0.000000e+00> : vector<8x16xf32>
    %168 = tpu.matmul %165, %163, %cst_84 {dimension_numbers = #tpu.dot_dimension_numbers<[1], [1], [0], [0], [0, 0, 1, 0], [], []>} : vector<8x16xf32>, vector<16x16xf32>, vector<8x16xf32> -> vector<8x16xf32>
    %169 = vector.broadcast %5 : vector<1x16xf32> to vector<8x16xf32>
    %170 = arith.mulf %168, %169 : vector<8x16xf32>
    %cst_85 = arith.constant dense<0xFF800000> : vector<8xf32>
    %171 = vector.multi_reduction <maximumf>, %170, %cst_85 [1] : vector<8x16xf32> to vector<8xf32>
    %172 = vector.shape_cast %171 : vector<8xf32> to vector<8x1xf32>
    %173 = vector.broadcast %172 : vector<8x1xf32> to vector<8x16xf32>
    %174 = arith.subf %170, %173 : vector<8x16xf32>
    %175 = math.exp %174 : vector<8x16xf32>
    %cst_86 = arith.constant dense<0.000000e+00> : vector<8xf32>
    %176 = vector.multi_reduction <add>, %175, %cst_86 [1] : vector<8x16xf32> to vector<8xf32>
    %177 = vector.shape_cast %176 : vector<8xf32> to vector<8x1xf32>
    %178 = tpu.reciprocal %177 {approx = true} : vector<8x1xf32> -> vector<8x1xf32>
    %179 = vector.broadcast %178 : vector<8x1xf32> to vector<8x16xf32>
    %180 = arith.mulf %175, %179 : vector<8x16xf32>
    %c0_87 = arith.constant 0 : index
    %c3 = arith.constant 3 : index
    %c0_88 = arith.constant 0 : index
    %c0_89 = arith.constant 0 : index
    %181 = vector.load %arg13[%c0_87, %c3, %c0_88, %c0_89] : memref<1x4x8x16xf32, #tpu.memory_space<vmem>>, vector<1x1x8x16xf32>
    %182 = vector.shape_cast %181 : vector<1x1x8x16xf32> to vector<8x16xf32>
    %183 = vector.shape_cast %180 : vector<8x16xf32> to vector<1x1x8x16xf32>
    tpu.vector_store %arg13[%c0_87, %c3, %c0_88, %c0_89], %183 {strides = array<i32>} : memref<1x4x8x16xf32, #tpu.memory_space<vmem>>, vector<1x1x8x16xf32>,
    %cst_90 = arith.constant dense<0.000000e+00> : vector<8x16xf32>
    %184 = tpu.matmul %180, %164, %cst_90 {dimension_numbers = #tpu.dot_dimension_numbers<[1], [0], [0], [1], [0, 0, 1, 1], [], []>} : vector<8x16xf32>, vector<16x16xf32>, vector<8x16xf32> -> vector<8x16xf32>
    %c0_91 = arith.constant 0 : index
    %c48 = arith.constant 48 : index
    %185 = vector.load %arg17[%c0_91, %c48] : memref<8x64xf32, #tpu.memory_space<vmem>>, vector<8x16xf32>
    tpu.vector_store %arg17[%c0_91, %c48], %184 {strides = array<i32>} : memref<8x64xf32, #tpu.memory_space<vmem>>, vector<8x16xf32>,
    %cst_92 = arith.constant dense<0.000000e+00> : vector<16x8xf32>
    %186 = tpu.matmul %162, %166, %cst_92 {dimension_numbers = #tpu.dot_dimension_numbers<[1], [1], [0], [0], [0, 0, 1, 0], [], []>} : vector<16x16xf32>, vector<8x16xf32>, vector<16x8xf32> -> vector<16x8xf32>
    %187 = vector.broadcast %7 : vector<1x8xf32> to vector<16x8xf32>
    %188 = arith.mulf %186, %187 : vector<16x8xf32>
    %cst_93 = arith.constant dense<0xFF800000> : vector<16xf32>
    %189 = vector.multi_reduction <maximumf>, %188, %cst_93 [1] : vector<16x8xf32> to vector<16xf32>
    %190 = vector.shape_cast %189 : vector<16xf32> to vector<16x1xf32>
    %191 = vector.broadcast %190 : vector<16x1xf32> to vector<16x8xf32>
    %192 = arith.subf %188, %191 : vector<16x8xf32>
    %193 = math.exp %192 : vector<16x8xf32>
    %cst_94 = arith.constant dense<0.000000e+00> : vector<16xf32>
    %194 = vector.multi_reduction <add>, %193, %cst_94 [1] : vector<16x8xf32> to vector<16xf32>
    %195 = vector.shape_cast %194 : vector<16xf32> to vector<16x1xf32>
    %196 = tpu.reciprocal %195 {approx = true} : vector<16x1xf32> -> vector<16x1xf32>
    %197 = vector.broadcast %196 : vector<16x1xf32> to vector<16x8xf32>
    %198 = arith.mulf %193, %197 : vector<16x8xf32>
    %c0_95 = arith.constant 0 : index
    %c3_96 = arith.constant 3 : index
    %c0_97 = arith.constant 0 : index
    %c0_98 = arith.constant 0 : index
    %199 = vector.load %arg14[%c0_95, %c3_96, %c0_97, %c0_98] : memref<1x4x16x8xf32, #tpu.memory_space<vmem>>, vector<1x1x16x8xf32>
    %200 = vector.shape_cast %199 : vector<1x1x16x8xf32> to vector<16x8xf32>
    %201 = vector.shape_cast %198 : vector<16x8xf32> to vector<1x1x16x8xf32>
    tpu.vector_store %arg14[%c0_95, %c3_96, %c0_97, %c0_98], %201 {strides = array<i32>} : memref<1x4x16x8xf32, #tpu.memory_space<vmem>>, vector<1x1x16x8xf32>,
    %cst_99 = arith.constant dense<0.000000e+00> : vector<16x16xf32>
    %202 = tpu.matmul %198, %167, %cst_99 {dimension_numbers = #tpu.dot_dimension_numbers<[1], [0], [0], [1], [0, 0, 1, 1], [], []>} : vector<16x8xf32>, vector<8x16xf32>, vector<16x16xf32> -> vector<16x16xf32>
    %c0_100 = arith.constant 0 : index
    %c48_101 = arith.constant 48 : index
    %203 = vector.load %arg18[%c0_100, %c48_101] : memref<16x64xf32, #tpu.memory_space<vmem>>, vector<16x16xf32>
    tpu.vector_store %arg18[%c0_100, %c48_101], %202 {strides = array<i32>} : memref<16x64xf32, #tpu.memory_space<vmem>>, vector<16x16xf32>,
    %c0_102 = arith.constant 0 : index
    %c0_103 = arith.constant 0 : index
    %204 = vector.load %arg17[%c0_102, %c0_103] : memref<8x64xf32, #tpu.memory_space<vmem>>, vector<8x64xf32>
    %c0_104 = arith.constant 0 : index
    %c0_105 = arith.constant 0 : index
    %205 = vector.load %arg18[%c0_104, %c0_105] : memref<16x64xf32, #tpu.memory_space<vmem>>, vector<16x64xf32>
    %c0_106 = arith.constant 0 : index
    %c0_107 = arith.constant 0 : index
    %c0_108 = arith.constant 0 : index
    %206 = vector.load %arg9[%c0_106, %c0_107, %c0_108] : memref<6x64x64xf32, #tpu.memory_space<vmem>>, vector<1x64x64xf32>
    %207 = vector.shape_cast %206 : vector<1x64x64xf32> to vector<64x64xf32>
    %c0_109 = arith.constant 0 : index
    %c0_110 = arith.constant 0 : index
    %208 = vector.load %arg10[%c0_109, %c0_110] : memref<14x64xf32, #tpu.memory_space<vmem>>, vector<1x64xf32>
    %c1_111 = arith.constant 1 : index
    %c0_112 = arith.constant 0 : index
    %209 = vector.load %arg10[%c1_111, %c0_112] : memref<14x64xf32, #tpu.memory_space<vmem>>, vector<1x64xf32>
    %c2_113 = arith.constant 2 : index
    %c0_114 = arith.constant 0 : index
    %210 = vector.load %arg10[%c2_113, %c0_114] : memref<14x64xf32, #tpu.memory_space<vmem>>, vector<1x64xf32>
    %cst_115 = arith.constant dense<0.000000e+00> : vector<16x64xf32>
    %211 = tpu.matmul %205, %207, %cst_115 {dimension_numbers = #tpu.dot_dimension_numbers<[1], [0], [0], [1], [0, 0, 1, 1], [], []>} : vector<16x64xf32>, vector<64x64xf32>, vector<16x64xf32> -> vector<16x64xf32>
    %212 = vector.broadcast %208 : vector<1x64xf32> to vector<16x64xf32>
    %213 = arith.addf %211, %212 : vector<16x64xf32>
    %214 = arith.addf %213, %1 : vector<16x64xf32>
    %cst_116 = arith.constant dense<0.000000e+00> : vector<16xf32>
    %215 = vector.multi_reduction <add>, %214, %cst_116 [1] : vector<16x64xf32> to vector<16xf32>
    %216 = vector.shape_cast %215 : vector<16xf32> to vector<16x1xf32>
    %cst_117 = arith.constant 6.400000e+01 : f32
    %217 = vector.broadcast %cst_117 : f32 to vector<16x1xf32>
    %218 = arith.divf %216, %217 : vector<16x1xf32>
    %219 = vector.broadcast %218 : vector<16x1xf32> to vector<16x64xf32>
    %220 = arith.subf %214, %219 : vector<16x64xf32>
    %221 = arith.mulf %220, %220 : vector<16x64xf32>
    %cst_118 = arith.constant dense<0.000000e+00> : vector<16xf32>
    %222 = vector.multi_reduction <add>, %221, %cst_118 [1] : vector<16x64xf32> to vector<16xf32>
    %223 = vector.shape_cast %222 : vector<16xf32> to vector<16x1xf32>
    %cst_119 = arith.constant 6.400000e+01 : f32
    %224 = vector.broadcast %cst_119 : f32 to vector<16x1xf32>
    %225 = arith.divf %223, %224 : vector<16x1xf32>
    %226 = vector.broadcast %218 : vector<16x1xf32> to vector<16x64xf32>
    %227 = arith.subf %214, %226 : vector<16x64xf32>
    %cst_120 = arith.constant 9.99999974E-6 : f32
    %228 = vector.broadcast %cst_120 : f32 to vector<16x1xf32>
    %229 = arith.addf %225, %228 : vector<16x1xf32>
    %230 = math.rsqrt %229 : vector<16x1xf32>
    %231 = vector.broadcast %230 : vector<16x1xf32> to vector<16x64xf32>
    %232 = arith.mulf %227, %231 : vector<16x64xf32>
    %233 = vector.broadcast %209 : vector<1x64xf32> to vector<16x64xf32>
    %234 = arith.mulf %232, %233 : vector<16x64xf32>
    %235 = vector.broadcast %210 : vector<1x64xf32> to vector<16x64xf32>
    %236 = arith.addf %234, %235 : vector<16x64xf32>
    %c1_121 = arith.constant 1 : index
    %c0_122 = arith.constant 0 : index
    %c0_123 = arith.constant 0 : index
    %237 = vector.load %arg9[%c1_121, %c0_122, %c0_123] : memref<6x64x64xf32, #tpu.memory_space<vmem>>, vector<1x64x64xf32>
    %238 = vector.shape_cast %237 : vector<1x64x64xf32> to vector<64x64xf32>
    %c3_124 = arith.constant 3 : index
    %c0_125 = arith.constant 0 : index
    %239 = vector.load %arg10[%c3_124, %c0_125] : memref<14x64xf32, #tpu.memory_space<vmem>>, vector<1x64xf32>
    %c4 = arith.constant 4 : index
    %c0_126 = arith.constant 0 : index
    %240 = vector.load %arg10[%c4, %c0_126] : memref<14x64xf32, #tpu.memory_space<vmem>>, vector<1x64xf32>
    %c5 = arith.constant 5 : index
    %c0_127 = arith.constant 0 : index
    %241 = vector.load %arg10[%c5, %c0_127] : memref<14x64xf32, #tpu.memory_space<vmem>>, vector<1x64xf32>
    %cst_128 = arith.constant dense<0.000000e+00> : vector<8x64xf32>
    %242 = tpu.matmul %204, %238, %cst_128 {dimension_numbers = #tpu.dot_dimension_numbers<[1], [0], [0], [1], [0, 0, 1, 1], [], []>} : vector<8x64xf32>, vector<64x64xf32>, vector<8x64xf32> -> vector<8x64xf32>
    %243 = vector.broadcast %239 : vector<1x64xf32> to vector<8x64xf32>
    %244 = arith.addf %242, %243 : vector<8x64xf32>
    %245 = arith.addf %244, %3 : vector<8x64xf32>
    %cst_129 = arith.constant dense<0.000000e+00> : vector<8xf32>
    %246 = vector.multi_reduction <add>, %245, %cst_129 [1] : vector<8x64xf32> to vector<8xf32>
    %247 = vector.shape_cast %246 : vector<8xf32> to vector<8x1xf32>
    %cst_130 = arith.constant 6.400000e+01 : f32
    %248 = vector.broadcast %cst_130 : f32 to vector<8x1xf32>
    %249 = arith.divf %247, %248 : vector<8x1xf32>
    %250 = vector.broadcast %249 : vector<8x1xf32> to vector<8x64xf32>
    %251 = arith.subf %245, %250 : vector<8x64xf32>
    %252 = arith.mulf %251, %251 : vector<8x64xf32>
    %cst_131 = arith.constant dense<0.000000e+00> : vector<8xf32>
    %253 = vector.multi_reduction <add>, %252, %cst_131 [1] : vector<8x64xf32> to vector<8xf32>
    %254 = vector.shape_cast %253 : vector<8xf32> to vector<8x1xf32>
    %cst_132 = arith.constant 6.400000e+01 : f32
    %255 = vector.broadcast %cst_132 : f32 to vector<8x1xf32>
    %256 = arith.divf %254, %255 : vector<8x1xf32>
    %257 = vector.broadcast %249 : vector<8x1xf32> to vector<8x64xf32>
    %258 = arith.subf %245, %257 : vector<8x64xf32>
    %cst_133 = arith.constant 9.99999974E-6 : f32
    %259 = vector.broadcast %cst_133 : f32 to vector<8x1xf32>
    %260 = arith.addf %256, %259 : vector<8x1xf32>
    %261 = math.rsqrt %260 : vector<8x1xf32>
    %262 = vector.broadcast %261 : vector<8x1xf32> to vector<8x64xf32>
    %263 = arith.mulf %258, %262 : vector<8x64xf32>
    %264 = vector.broadcast %240 : vector<1x64xf32> to vector<8x64xf32>
    %265 = arith.mulf %263, %264 : vector<8x64xf32>
    %266 = vector.broadcast %241 : vector<1x64xf32> to vector<8x64xf32>
    %267 = arith.addf %265, %266 : vector<8x64xf32>
    %c2_134 = arith.constant 2 : index
    %c0_135 = arith.constant 0 : index
    %c0_136 = arith.constant 0 : index
    %268 = vector.load %arg9[%c2_134, %c0_135, %c0_136] : memref<6x64x64xf32, #tpu.memory_space<vmem>>, vector<1x64x64xf32>
    %269 = vector.shape_cast %268 : vector<1x64x64xf32> to vector<64x64xf32>
    %cst_137 = arith.constant dense<0.000000e+00> : vector<16x64xf32>
    %270 = tpu.matmul %236, %269, %cst_137 {dimension_numbers = #tpu.dot_dimension_numbers<[1], [0], [0], [1], [0, 0, 1, 1], [], []>} : vector<16x64xf32>, vector<64x64xf32>, vector<16x64xf32> -> vector<16x64xf32>
    %c6 = arith.constant 6 : index
    %c0_138 = arith.constant 0 : index
    %271 = vector.load %arg10[%c6, %c0_138] : memref<14x64xf32, #tpu.memory_space<vmem>>, vector<1x64xf32>
    %272 = vector.broadcast %271 : vector<1x64xf32> to vector<16x64xf32>
    %273 = arith.addf %270, %272 : vector<16x64xf32>
    %cst_139 = arith.constant 5.000000e-01 : f32
    %274 = vector.broadcast %cst_139 : f32 to vector<16x64xf32>
    %275 = arith.mulf %274, %273 : vector<16x64xf32>
    %cst_140 = arith.constant 0.707106769 : f32
    %276 = vector.broadcast %cst_140 : f32 to vector<16x64xf32>
    %277 = arith.mulf %273, %276 : vector<16x64xf32>
    %278 = math.erf %277 : vector<16x64xf32>
    %cst_141 = arith.constant 1.000000e+00 : f32
    %279 = vector.broadcast %cst_141 : f32 to vector<16x64xf32>
    %280 = arith.addf %279, %278 : vector<16x64xf32>
    %281 = arith.mulf %275, %280 : vector<16x64xf32>
    %c3_142 = arith.constant 3 : index
    %c0_143 = arith.constant 0 : index
    %c0_144 = arith.constant 0 : index
    %282 = vector.load %arg9[%c3_142, %c0_143, %c0_144] : memref<6x64x64xf32, #tpu.memory_space<vmem>>, vector<1x64x64xf32>
    %283 = vector.shape_cast %282 : vector<1x64x64xf32> to vector<64x64xf32>
    %c7 = arith.constant 7 : index
    %c0_145 = arith.constant 0 : index
    %284 = vector.load %arg10[%c7, %c0_145] : memref<14x64xf32, #tpu.memory_space<vmem>>, vector<1x64xf32>
    %c8 = arith.constant 8 : index
    %c0_146 = arith.constant 0 : index
    %285 = vector.load %arg10[%c8, %c0_146] : memref<14x64xf32, #tpu.memory_space<vmem>>, vector<1x64xf32>
    %c9 = arith.constant 9 : index
    %c0_147 = arith.constant 0 : index
    %286 = vector.load %arg10[%c9, %c0_147] : memref<14x64xf32, #tpu.memory_space<vmem>>, vector<1x64xf32>
    %cst_148 = arith.constant dense<0.000000e+00> : vector<16x64xf32>
    %287 = tpu.matmul %281, %283, %cst_148 {dimension_numbers = #tpu.dot_dimension_numbers<[1], [0], [0], [1], [0, 0, 1, 1], [], []>} : vector<16x64xf32>, vector<64x64xf32>, vector<16x64xf32> -> vector<16x64xf32>
    %288 = vector.broadcast %284 : vector<1x64xf32> to vector<16x64xf32>
    %289 = arith.addf %287, %288 : vector<16x64xf32>
    %290 = arith.addf %289, %236 : vector<16x64xf32>
    %cst_149 = arith.constant dense<0.000000e+00> : vector<16xf32>
    %291 = vector.multi_reduction <add>, %290, %cst_149 [1] : vector<16x64xf32> to vector<16xf32>
    %292 = vector.shape_cast %291 : vector<16xf32> to vector<16x1xf32>
    %cst_150 = arith.constant 6.400000e+01 : f32
    %293 = vector.broadcast %cst_150 : f32 to vector<16x1xf32>
    %294 = arith.divf %292, %293 : vector<16x1xf32>
    %295 = vector.broadcast %294 : vector<16x1xf32> to vector<16x64xf32>
    %296 = arith.subf %290, %295 : vector<16x64xf32>
    %297 = arith.mulf %296, %296 : vector<16x64xf32>
    %cst_151 = arith.constant dense<0.000000e+00> : vector<16xf32>
    %298 = vector.multi_reduction <add>, %297, %cst_151 [1] : vector<16x64xf32> to vector<16xf32>
    %299 = vector.shape_cast %298 : vector<16xf32> to vector<16x1xf32>
    %cst_152 = arith.constant 6.400000e+01 : f32
    %300 = vector.broadcast %cst_152 : f32 to vector<16x1xf32>
    %301 = arith.divf %299, %300 : vector<16x1xf32>
    %302 = vector.broadcast %294 : vector<16x1xf32> to vector<16x64xf32>
    %303 = arith.subf %290, %302 : vector<16x64xf32>
    %cst_153 = arith.constant 9.99999974E-6 : f32
    %304 = vector.broadcast %cst_153 : f32 to vector<16x1xf32>
    %305 = arith.addf %301, %304 : vector<16x1xf32>
    %306 = math.rsqrt %305 : vector<16x1xf32>
    %307 = vector.broadcast %306 : vector<16x1xf32> to vector<16x64xf32>
    %308 = arith.mulf %303, %307 : vector<16x64xf32>
    %309 = vector.broadcast %285 : vector<1x64xf32> to vector<16x64xf32>
    %310 = arith.mulf %308, %309 : vector<16x64xf32>
    %311 = vector.broadcast %286 : vector<1x64xf32> to vector<16x64xf32>
    %312 = arith.addf %310, %311 : vector<16x64xf32>
    %c0_154 = arith.constant 0 : index
    %c0_155 = arith.constant 0 : index
    %c0_156 = arith.constant 0 : index
    %313 = vector.load %arg11[%c0_154, %c0_155, %c0_156] : memref<1x16x64xf32, #tpu.memory_space<vmem>>, vector<1x16x64xf32>
    %314 = vector.shape_cast %313 : vector<1x16x64xf32> to vector<16x64xf32>
    %315 = vector.shape_cast %312 : vector<16x64xf32> to vector<1x16x64xf32>
    tpu.vector_store %arg11[%c0_154, %c0_155, %c0_156], %315 {strides = array<i32>} : memref<1x16x64xf32, #tpu.memory_space<vmem>>, vector<1x16x64xf32>,
    %c4_157 = arith.constant 4 : index
    %c0_158 = arith.constant 0 : index
    %c0_159 = arith.constant 0 : index
    %316 = vector.load %arg9[%c4_157, %c0_158, %c0_159] : memref<6x64x64xf32, #tpu.memory_space<vmem>>, vector<1x64x64xf32>
    %317 = vector.shape_cast %316 : vector<1x64x64xf32> to vector<64x64xf32>
    %cst_160 = arith.constant dense<0.000000e+00> : vector<8x64xf32>
    %318 = tpu.matmul %267, %317, %cst_160 {dimension_numbers = #tpu.dot_dimension_numbers<[1], [0], [0], [1], [0, 0, 1, 1], [], []>} : vector<8x64xf32>, vector<64x64xf32>, vector<8x64xf32> -> vector<8x64xf32>
    %c10 = arith.constant 10 : index
    %c0_161 = arith.constant 0 : index
    %319 = vector.load %arg10[%c10, %c0_161] : memref<14x64xf32, #tpu.memory_space<vmem>>, vector<1x64xf32>
    %320 = vector.broadcast %319 : vector<1x64xf32> to vector<8x64xf32>
    %321 = arith.addf %318, %320 : vector<8x64xf32>
    %cst_162 = arith.constant 5.000000e-01 : f32
    %322 = vector.broadcast %cst_162 : f32 to vector<8x64xf32>
    %323 = arith.mulf %322, %321 : vector<8x64xf32>
    %cst_163 = arith.constant 0.707106769 : f32
    %324 = vector.broadcast %cst_163 : f32 to vector<8x64xf32>
    %325 = arith.mulf %321, %324 : vector<8x64xf32>
    %326 = math.erf %325 : vector<8x64xf32>
    %cst_164 = arith.constant 1.000000e+00 : f32
    %327 = vector.broadcast %cst_164 : f32 to vector<8x64xf32>
    %328 = arith.addf %327, %326 : vector<8x64xf32>
    %329 = arith.mulf %323, %328 : vector<8x64xf32>
    %c5_165 = arith.constant 5 : index
    %c0_166 = arith.constant 0 : index
    %c0_167 = arith.constant 0 : index
    %330 = vector.load %arg9[%c5_165, %c0_166, %c0_167] : memref<6x64x64xf32, #tpu.memory_space<vmem>>, vector<1x64x64xf32>
    %331 = vector.shape_cast %330 : vector<1x64x64xf32> to vector<64x64xf32>
    %c11 = arith.constant 11 : index
    %c0_168 = arith.constant 0 : index
    %332 = vector.load %arg10[%c11, %c0_168] : memref<14x64xf32, #tpu.memory_space<vmem>>, vector<1x64xf32>
    %c12 = arith.constant 12 : index
    %c0_169 = arith.constant 0 : index
    %333 = vector.load %arg10[%c12, %c0_169] : memref<14x64xf32, #tpu.memory_space<vmem>>, vector<1x64xf32>
    %c13 = arith.constant 13 : index
    %c0_170 = arith.constant 0 : index
    %334 = vector.load %arg10[%c13, %c0_170] : memref<14x64xf32, #tpu.memory_space<vmem>>, vector<1x64xf32>
    %cst_171 = arith.constant dense<0.000000e+00> : vector<8x64xf32>
    %335 = tpu.matmul %329, %331, %cst_171 {dimension_numbers = #tpu.dot_dimension_numbers<[1], [0], [0], [1], [0, 0, 1, 1], [], []>} : vector<8x64xf32>, vector<64x64xf32>, vector<8x64xf32> -> vector<8x64xf32>
    %336 = vector.broadcast %332 : vector<1x64xf32> to vector<8x64xf32>
    %337 = arith.addf %335, %336 : vector<8x64xf32>
    %338 = arith.addf %337, %267 : vector<8x64xf32>
    %cst_172 = arith.constant dense<0.000000e+00> : vector<8xf32>
    %339 = vector.multi_reduction <add>, %338, %cst_172 [1] : vector<8x64xf32> to vector<8xf32>
    %340 = vector.shape_cast %339 : vector<8xf32> to vector<8x1xf32>
    %cst_173 = arith.constant 6.400000e+01 : f32
    %341 = vector.broadcast %cst_173 : f32 to vector<8x1xf32>
    %342 = arith.divf %340, %341 : vector<8x1xf32>
    %343 = vector.broadcast %342 : vector<8x1xf32> to vector<8x64xf32>
    %344 = arith.subf %338, %343 : vector<8x64xf32>
    %345 = arith.mulf %344, %344 : vector<8x64xf32>
    %cst_174 = arith.constant dense<0.000000e+00> : vector<8xf32>
    %346 = vector.multi_reduction <add>, %345, %cst_174 [1] : vector<8x64xf32> to vector<8xf32>
    %347 = vector.shape_cast %346 : vector<8xf32> to vector<8x1xf32>
    %cst_175 = arith.constant 6.400000e+01 : f32
    %348 = vector.broadcast %cst_175 : f32 to vector<8x1xf32>
    %349 = arith.divf %347, %348 : vector<8x1xf32>
    %350 = vector.broadcast %342 : vector<8x1xf32> to vector<8x64xf32>
    %351 = arith.subf %338, %350 : vector<8x64xf32>
    %cst_176 = arith.constant 9.99999974E-6 : f32
    %352 = vector.broadcast %cst_176 : f32 to vector<8x1xf32>
    %353 = arith.addf %349, %352 : vector<8x1xf32>
    %354 = math.rsqrt %353 : vector<8x1xf32>
    %355 = vector.broadcast %354 : vector<8x1xf32> to vector<8x64xf32>
    %356 = arith.mulf %351, %355 : vector<8x64xf32>
    %357 = vector.broadcast %333 : vector<1x64xf32> to vector<8x64xf32>
    %358 = arith.mulf %356, %357 : vector<8x64xf32>
    %359 = vector.broadcast %334 : vector<1x64xf32> to vector<8x64xf32>
    %360 = arith.addf %358, %359 : vector<8x64xf32>
    %c0_177 = arith.constant 0 : index
    %c0_178 = arith.constant 0 : index
    %c0_179 = arith.constant 0 : index
    %361 = vector.load %arg12[%c0_177, %c0_178, %c0_179] : memref<1x8x64xf32, #tpu.memory_space<vmem>>, vector<1x8x64xf32>
    %362 = vector.shape_cast %361 : vector<1x8x64xf32> to vector<8x64xf32>
    %363 = vector.shape_cast %360 : vector<8x64xf32> to vector<1x8x64xf32>
    tpu.vector_store %arg12[%c0_177, %c0_178, %c0_179], %363 {strides = array<i32>} : memref<1x8x64xf32, #tpu.memory_space<vmem>>, vector<1x8x64xf32>,
    return
  }
  func.func @transform_0(%arg0: i32) -> (i32, i32, i32) {
    %c0_i32 = arith.constant 0 : i32
    %c0_i32_0 = arith.constant 0 : i32
    %c0_i32_1 = arith.constant 0 : i32
    return %arg0, %c0_i32, %c0_i32_0 : i32, i32, i32
  }
  func.func @transform_1(%arg0: i32) -> (i32, i32, i32) {
    %c0_i32 = arith.constant 0 : i32
    %c0_i32_0 = arith.constant 0 : i32
    %c0_i32_1 = arith.constant 0 : i32
    return %arg0, %c0_i32, %c0_i32_0 : i32, i32, i32
  }
  func.func @transform_2(%arg0: i32) -> (i32, i32, i32) {
    %c0_i32 = arith.constant 0 : i32
    %c0_i32_0 = arith.constant 0 : i32
    %c0_i32_1 = arith.constant 0 : i32
    return %arg0, %c0_i32, %c0_i32_0 : i32, i32, i32
  }
  func.func @transform_3(%arg0: i32) -> (i32, i32, i32) {
    %c0_i32 = arith.constant 0 : i32
    %c0_i32_0 = arith.constant 0 : i32
    %c0_i32_1 = arith.constant 0 : i32
    return %arg0, %c0_i32, %c0_i32_0 : i32, i32, i32
  }
  func.func @transform_4(%arg0: i32) -> (i32, i32) {
    %c0_i32 = arith.constant 0 : i32
    %c0_i32_0 = arith.constant 0 : i32
    %c0_i32_1 = arith.constant 0 : i32
    return %c0_i32, %c0_i32_0 : i32, i32
  }
  func.func @transform_5(%arg0: i32) -> (i32, i32) {
    %c0_i32 = arith.constant 0 : i32
    %c0_i32_0 = arith.constant 0 : i32
    %c0_i32_1 = arith.constant 0 : i32
    return %c0_i32, %c0_i32_0 : i32, i32
  }
  func.func @transform_6(%arg0: i32) -> (i32, i32) {
    %c0_i32 = arith.constant 0 : i32
    %c0_i32_0 = arith.constant 0 : i32
    %c0_i32_1 = arith.constant 0 : i32
    return %c0_i32, %c0_i32_0 : i32, i32
  }
  func.func @transform_7(%arg0: i32) -> (i32, i32) {
    %c0_i32 = arith.constant 0 : i32
    %c0_i32_0 = arith.constant 0 : i32
    %c0_i32_1 = arith.constant 0 : i32
    return %c0_i32, %c0_i32_0 : i32, i32
  }
  func.func @transform_8(%arg0: i32) -> (i32, i32, i32) {
    %c0_i32 = arith.constant 0 : i32
    %c0_i32_0 = arith.constant 0 : i32
    %c0_i32_1 = arith.constant 0 : i32
    %c0_i32_2 = arith.constant 0 : i32
    return %c0_i32, %c0_i32_0, %c0_i32_1 : i32, i32, i32
  }
  func.func @transform_9(%arg0: i32) -> (i32, i32) {
    %c0_i32 = arith.constant 0 : i32
    %c0_i32_0 = arith.constant 0 : i32
    %c0_i32_1 = arith.constant 0 : i32
    return %c0_i32, %c0_i32_0 : i32, i32
  }
  func.func @transform_10(%arg0: i32) -> (i32, i32, i32) {
    %c0_i32 = arith.constant 0 : i32
    %c0_i32_0 = arith.constant 0 : i32
    %c0_i32_1 = arith.constant 0 : i32
    return %arg0, %c0_i32, %c0_i32_0 : i32, i32, i32
  }
  func.func @transform_11(%arg0: i32) -> (i32, i32, i32) {
    %c0_i32 = arith.constant 0 : i32
    %c0_i32_0 = arith.constant 0 : i32
    %c0_i32_1 = arith.constant 0 : i32
    return %arg0, %c0_i32, %c0_i32_0 : i32, i32, i32
  }
  func.func @transform_12(%arg0: i32) -> (i32, i32, i32, i32) {
    %c0_i32 = arith.constant 0 : i32
    %c0_i32_0 = arith.constant 0 : i32
    %c0_i32_1 = arith.constant 0 : i32
    %c0_i32_2 = arith.constant 0 : i32
    return %arg0, %c0_i32, %c0_i32_0, %c0_i32_1 : i32, i32, i32, i32
  }
  func.func @transform_13(%arg0: i32) -> (i32, i32, i32, i32) {
    %c0_i32 = arith.constant 0 : i32
    %c0_i32_0 = arith.constant 0 : i32
    %c0_i32_1 = arith.constant 0 : i32
    %c0_i32_2 = arith.constant 0 : i32
    return %arg0, %c0_i32, %c0_i32_0, %c0_i32_1 : i32, i32, i32, i32
  }
  func.func @transform_14(%arg0: i32) -> (i32, i32, i32) {
    %c0_i32 = arith.constant 0 : i32
    %c0_i32_0 = arith.constant 0 : i32
    %c0_i32_1 = arith.constant 0 : i32
    return %arg0, %c0_i32, %c0_i32_0 : i32, i32, i32
  }
  func.func @transform_15(%arg0: i32) -> (i32, i32, i32) {
    %c0_i32 = arith.constant 0 : i32
    %c0_i32_0 = arith.constant 0 : i32
    %c0_i32_1 = arith.constant 0 : i32
    return %arg0, %c0_i32, %c0_i32_0 : i32, i32, i32
  }
}

</mosaic_0001>

<llo_original>
// kernel: co_attention_block_forward.1
$region0: #{co_attention_block_forward.1}
  #allocation0 [shape = 'u32[]', space=smem, size = 0x4, offset = 0x4, fixed_abs, tag = 'smem constant byte address 0x4 - core index']
  #allocation1 [shape = 'u32[144,128]{1,0:T(1,128)}', space=vmem, size = 0x12000, scoped, tag = 'internal scratch']
  #allocation2 [shape = 'f32[8,64]{1,0:T(8,128)}', space=vmem, size = 0x1000, scoped, tag = 'scratch operand']
  #allocation3 [shape = 'f32[16,64]{1,0:T(8,128)}', space=vmem, size = 0x2000, scoped, tag = 'scratch operand']
  %s0 = inlined_call_operand.vmem [shape: f32[2,1,16], index: 0, kind: input, shape index: {}]
  %s1 = inlined_call_operand.vmem [shape: f32[2,1,8], index: 1, kind: input, shape index: {}]
  %s2 = inlined_call_operand.vmem [shape: f32[2,16,64], index: 2, kind: input, shape index: {}]
  %s3 = inlined_call_operand.vmem [shape: f32[2,8,64], index: 3, kind: input, shape index: {}]
  %s4 = inlined_call_operand.vmem [shape: f32[64,192], index: 4, kind: input, shape index: {}]
  %s5 = inlined_call_operand.vmem [shape: f32[1,192], index: 5, kind: input, shape index: {}]
  %s6 = inlined_call_operand.vmem [shape: f32[64,192], index: 6, kind: input, shape index: {}]
  %s7 = inlined_call_operand.vmem [shape: f32[1,192], index: 7, kind: input, shape index: {}]
  %s8 = inlined_call_operand.vmem [shape: f32[6,64,64], index: 8, kind: input, shape index: {}]
  %s9 = inlined_call_operand.vmem [shape: f32[14,64], index: 9, kind: input, shape index: {}]
  %s10 = inlined_call_operand.hbm [shape: f32[2,16,64], index: 10, kind: output, shape index: {0}]
  %s11 = inlined_call_operand.hbm [shape: f32[2,8,64], index: 11, kind: output, shape index: {1}]
  %s12 = inlined_call_operand.hbm [shape: f32[2,4,8,16], index: 12, kind: output, shape index: {2}]
  %s13 = inlined_call_operand.vmem [shape: f32[2,4,16,8], index: 13, kind: output, shape index: {3}]
  %s14 = inlined_call_operand.vmem [shape: f32[2,16,128], index: 14, kind: output, shape index: {4}]
  %s15 = inlined_call_operand.vmem [shape: f32[2,8,128], index: 15, kind: output, shape index: {5}]
  %16 = xla_tuple %s10, %s11, %s12, %s13, %s14, %s15
  %s17 = sld [smem:[#allocation0]]
  $region113: #{co_attention_block_forward.1} parent=0
    _
  %s19 = ssub.s32 1, %s17
  %s20 = scalar_select 0, %s19, %s17
  $region1: #{co_attention_block_forward.1} parent=0
    #allocation4 [shape = 'u8[16384]{0}', space=vmem, size = 0x4000, scoped, tag = 'output window, operand 0']
    #allocation5 [shape = 's32[2]{0}', space=sflag, size = 0x8, scoped, tag = 'scoped memory for co_attention_block_forward.1']
    #allocation6 [shape = 'u8[8192]{0}', space=vmem, size = 0x2000, scoped, tag = 'output window, operand 1']
    #allocation7 [shape = 's32[2]{0}', space=sflag, size = 0x8, scoped, tag = 'scoped memory for co_attention_block_forward.1']
    #allocation8 [shape = 'u8[32768]{0}', space=vmem, size = 0x8000, scoped, tag = 'output window, operand 2']
    %21 = vsyncpa [#allocation5], 0
    %s22 = scalar_lea.sflag [#allocation5], 1
    %23 = vsyncpa %s22, 0
    %24 = vsyncpa [#allocation7], 0
    %s25 = scalar_lea.sflag [#allocation7], 1
    %26 = vsyncpa %s25, 0
    loop: start=0, step=1, limit=4
    $region2: #{co_attention_block_forward.1} parent=1 // loop_pre_header
      _
    $region3: #{co_attention_block_forward.1} parent=1 // loop_header
      %s28 = sphi 0, %s32
      %p29 = scmp.ge.s32.totalorder %s28, 4
      %s38 = sphi 0, %s40
      %s41 = sphi 0, %s38
      %s42 = sphi 0, %s41
      %s58 = sphi 0, %s42
      %s64 = sphi 0, %s66
      %s67 = sphi 0, %s64
      %s68 = sphi 0, %s67
      %s84 = sphi 0, %s68
      %s90 = sphi 0, %s92
      %s93 = sphi 0, %s90
      %s94 = sphi 0, %s93
      %s110 = sphi 0, %s94
      %s116 = sphi 0, %s118
      %s119 = sphi 0, %s116
      %s120 = sphi 0, %s119
      %s136 = sphi 0, %s120
      %s140 = sphi 0, %s140
      %s142 = sphi 0, %s140
      %s143 = sphi 0, %s142
      %s157 = sphi 0, %s143
      %s161 = sphi 0, %s161
      %s163 = sphi 0, %s161
      %s164 = sphi 0, %s163
      %s178 = sphi 0, %s164
      %s182 = sphi 0, %s182
      %s184 = sphi 0, %s182
      %s185 = sphi 0, %s184
      %s199 = sphi 0, %s185
      %s203 = sphi 0, %s203
      %s205 = sphi 0, %s203
      %s206 = sphi 0, %s205
      %s220 = sphi 0, %s206
      %s224 = sphi 0, %s224
      %s226 = sphi 0, %s224
      %s227 = sphi 0, %s226
      %s241 = sphi 0, %s227
      %s245 = sphi 0, %s245
      %s247 = sphi 0, %s245
      %s248 = sphi 0, %s247
      %s262 = sphi 0, %s248
      %s268 = sphi 0, %s270
      %s271 = sphi 0, %s268
      %s272 = sphi 0, %s271
      %s288 = sphi 0, %s272
      %s294 = sphi 0, %s296
      %s297 = sphi 0, %s294
      %s298 = sphi 0, %s297
      %s314 = sphi 0, %s298
      %s320 = sphi 0, %s322
      %s323 = sphi 0, %s320
      %s324 = sphi 0, %s323
      %s340 = sphi 0, %s324
      %s346 = sphi 0, %s348
      %s349 = sphi 0, %s346
      %s350 = sphi 0, %s349
      %s366 = sphi 0, %s350
      %s372 = sphi 0, %s374
      %s375 = sphi 0, %s372
      %s376 = sphi 0, %s375
      %s392 = sphi 0, %s376
      %s398 = sphi 0, %s400
      %s401 = sphi 0, %s398
      %s402 = sphi 0, %s401
      %s418 = sphi 0, %s402
    $region4: #{co_attention_block_forward.1} parent=1 // loop_header_branch
      %31 = sbr.rel (%p29) target = $region8
    $region5: #{co_attention_block_forward.1} parent=1 // loop_body
      %s33 = ssub.s32 %s28, 1
      %s34 = ssub.s32 %s28, 2
      %s35 = sadd.s32 %s28, 1
      %s36 = ssub.s32 %s28, %s35
      %p37 = scmp.eq.s32.totalorder %s36, 0
      %s39 = sadd.s32 %s38, 1
      %s40 = scalar_select %p37, %s38, %s39
      %p43 = pneg %p37
      %p44 = scmp.eq.s32.totalorder %s28, 1
      %p45 = por %p43, %p44
      %p46 = scmp.ne.s32.totalorder %s38, %s41
      %p47 = scmp.eq.s32.totalorder %s28, 0
      %p48 = por %p46, %p47
      %p49 = scmp.ne.s32.totalorder %s38, %s41
      %p50 = scmp.eq.s32.totalorder %s33, 1
      %p51 = por %p49, %p50
      %p52 = scmp.ne.s32.totalorder %s41, %s42
      %p53 = scmp.eq.s32.totalorder %s33, 0
      %p54 = por %p52, %p53
      %p55 = scmp.ne.s32.totalorder %s41, %s42
      %p56 = scmp.eq.s32.totalorder %s34, 1
      %p57 = por %p55, %p56
      %p59 = scmp.ne.s32.totalorder %s42, %s58
      %p60 = scmp.eq.s32.totalorder %s34, 0
      %p61 = por %p59, %p60
      %s62 = ssub.s32 %s28, %s35
      %p63 = scmp.eq.s32.totalorder %s62, 0
      %s65 = sadd.s32 %s64, 1
      %s66 = scalar_select %p63, %s64, %s65
      %p69 = pneg %p63
      %p70 = scmp.eq.s32.totalorder %s28, 1
      %p71 = por %p69, %p70
      %p72 = scmp.ne.s32.totalorder %s64, %s67
      %p73 = scmp.eq.s32.totalorder %s28, 0
      %p74 = por %p72, %p73
      %p75 = scmp.ne.s32.totalorder %s64, %s67
      %p76 = scmp.eq.s32.totalorder %s33, 1
      %p77 = por %p75, %p76
      %p78 = scmp.ne.s32.totalorder %s67, %s68
      %p79 = scmp.eq.s32.totalorder %s33, 0
      %p80 = por %p78, %p79
      %p81 = scmp.ne.s32.totalorder %s67, %s68
      %p82 = scmp.eq.s32.totalorder %s34, 1
      %p83 = por %p81, %p82
      %p85 = scmp.ne.s32.totalorder %s68, %s84
      %p86 = scmp.eq.s32.totalorder %s34, 0
      %p87 = por %p85, %p86
      %s88 = ssub.s32 %s28, %s35
      %p89 = scmp.eq.s32.totalorder %s88, 0
      %s91 = sadd.s32 %s90, 1
      %s92 = scalar_select %p89, %s90, %s91
      %p95 = pneg %p89
      %p96 = scmp.eq.s32.totalorder %s28, 1
      %p97 = por %p95, %p96
      %p98 = scmp.ne.s32.totalorder %s90, %s93
      %p99 = scmp.eq.s32.totalorder %s28, 0
      %p100 = por %p98, %p99
      %p101 = scmp.ne.s32.totalorder %s90, %s93
      %p102 = scmp.eq.s32.totalorder %s33, 1
      %p103 = por %p101, %p102
      %p104 = scmp.ne.s32.totalorder %s93, %s94
      %p105 = scmp.eq.s32.totalorder %s33, 0
      %p106 = por %p104, %p105
      %p107 = scmp.ne.s32.totalorder %s93, %s94
      %p108 = scmp.eq.s32.totalorder %s34, 1
      %p109 = por %p107, %p108
      %p111 = scmp.ne.s32.totalorder %s94, %s110
      %p112 = scmp.eq.s32.totalorder %s34, 0
      %p113 = por %p111, %p112
      %s114 = ssub.s32 %s28, %s35
      %p115 = scmp.eq.s32.totalorder %s114, 0
      %s117 = sadd.s32 %s116, 1
      %s118 = scalar_select %p115, %s116, %s117
      %p121 = pneg %p115
      %p122 = scmp.eq.s32.totalorder %s28, 1
      %p123 = por %p121, %p122
      %p124 = scmp.ne.s32.totalorder %s116, %s119
      %p125 = scmp.eq.s32.totalorder %s28, 0
      %p126 = por %p124, %p125
      %p127 = scmp.ne.s32.totalorder %s116, %s119
      %p128 = scmp.eq.s32.totalorder %s33, 1
      %p129 = por %p127, %p128
      %p130 = scmp.ne.s32.totalorder %s119, %s120
      %p131 = scmp.eq.s32.totalorder %s33, 0
      %p132 = por %p130, %p131
      %p133 = scmp.ne.s32.totalorder %s119, %s120
      %p134 = scmp.eq.s32.totalorder %s34, 1
      %p135 = por %p133, %p134
      %p137 = scmp.ne.s32.totalorder %s120, %s136
      %p138 = scmp.eq.s32.totalorder %s34, 0
      %p139 = por %p137, %p138
      %s141 = sadd.s32 %s140, 1
      %p144 = scmp.eq.s32.totalorder %s28, 1
      %p145 = scmp.ne.s32.totalorder %s140, %s142
      %p146 = scmp.eq.s32.totalorder %s28, 0
      %p147 = por %p145, %p146
      %p148 = scmp.ne.s32.totalorder %s140, %s142
      %p149 = scmp.eq.s32.totalorder %s33, 1
      %p150 = por %p148, %p149
      %p151 = scmp.ne.s32.totalorder %s142, %s143
      %p152 = scmp.eq.s32.totalorder %s33, 0
      %p153 = por %p151, %p152
      %p154 = scmp.ne.s32.totalorder %s142, %s143
      %p155 = scmp.eq.s32.totalorder %s34, 1
      %p156 = por %p154, %p155
      %p158 = scmp.ne.s32.totalorder %s143, %s157
      %p159 = scmp.eq.s32.totalorder %s34, 0
      %p160 = por %p158, %p159
      %s162 = sadd.s32 %s161, 1
      %p165 = scmp.eq.s32.totalorder %s28, 1
      %p166 = scmp.ne.s32.totalorder %s161, %s163
      %p167 = scmp.eq.s32.totalorder %s28, 0
      %p168 = por %p166, %p167
      %p169 = scmp.ne.s32.totalorder %s161, %s163
      %p170 = scmp.eq.s32.totalorder %s33, 1
      %p171 = por %p169, %p170
      %p172 = scmp.ne.s32.totalorder %s163, %s164
      %p173 = scmp.eq.s32.totalorder %s33, 0
      %p174 = por %p172, %p173
      %p175 = scmp.ne.s32.totalorder %s163, %s164
      %p176 = scmp.eq.s32.totalorder %s34, 1
      %p177 = por %p175, %p176
      %p179 = scmp.ne.s32.totalorder %s164, %s178
      %p180 = scmp.eq.s32.totalorder %s34, 0
      %p181 = por %p179, %p180
      %s183 = sadd.s32 %s182, 1
      %p186 = scmp.eq.s32.totalorder %s28, 1
      %p187 = scmp.ne.s32.totalorder %s182, %s184
      %p188 = scmp.eq.s32.totalorder %s28, 0
      %p189 = por %p187, %p188
      %p190 = scmp.ne.s32.totalorder %s182, %s184
      %p191 = scmp.eq.s32.totalorder %s33, 1
      %p192 = por %p190, %p191
      %p193 = scmp.ne.s32.totalorder %s184, %s185
      %p194 = scmp.eq.s32.totalorder %s33, 0
      %p195 = por %p193, %p194
      %p196 = scmp.ne.s32.totalorder %s184, %s185
      %p197 = scmp.eq.s32.totalorder %s34, 1
      %p198 = por %p196, %p197
      %p200 = scmp.ne.s32.totalorder %s185, %s199
      %p201 = scmp.eq.s32.totalorder %s34, 0
      %p202 = por %p200, %p201
      %s204 = sadd.s32 %s203, 1
      %p207 = scmp.eq.s32.totalorder %s28, 1
      %p208 = scmp.ne.s32.totalorder %s203, %s205
      %p209 = scmp.eq.s32.totalorder %s28, 0
      %p210 = por %p208, %p209
      %p211 = scmp.ne.s32.totalorder %s203, %s205
      %p212 = scmp.eq.s32.totalorder %s33, 1
      %p213 = por %p211, %p212
      %p214 = scmp.ne.s32.totalorder %s205, %s206
      %p215 = scmp.eq.s32.totalorder %s33, 0
      %p216 = por %p214, %p215
      %p217 = scmp.ne.s32.totalorder %s205, %s206
      %p218 = scmp.eq.s32.totalorder %s34, 1
      %p219 = por %p217, %p218
      %p221 = scmp.ne.s32.totalorder %s206, %s220
      %p222 = scmp.eq.s32.totalorder %s34, 0
      %p223 = por %p221, %p222
      %s225 = sadd.s32 %s224, 1
      %p228 = scmp.eq.s32.totalorder %s28, 1
      %p229 = scmp.ne.s32.totalorder %s224, %s226
      %p230 = scmp.eq.s32.totalorder %s28, 0
      %p231 = por %p229, %p230
      %p232 = scmp.ne.s32.totalorder %s224, %s226
      %p233 = scmp.eq.s32.totalorder %s33, 1
      %p234 = por %p232, %p233
      %p235 = scmp.ne.s32.totalorder %s226, %s227
      %p236 = scmp.eq.s32.totalorder %s33, 0
      %p237 = por %p235, %p236
      %p238 = scmp.ne.s32.totalorder %s226, %s227
      %p239 = scmp.eq.s32.totalorder %s34, 1
      %p240 = por %p238, %p239
      %p242 = scmp.ne.s32.totalorder %s227, %s241
      %p243 = scmp.eq.s32.totalorder %s34, 0
      %p244 = por %p242, %p243
      %s246 = sadd.s32 %s245, 1
      %p249 = scmp.eq.s32.totalorder %s28, 1
      %p250 = scmp.ne.s32.totalorder %s245, %s247
      %p251 = scmp.eq.s32.totalorder %s28, 0
      %p252 = por %p250, %p251
      %p253 = scmp.ne.s32.totalorder %s245, %s247
      %p254 = scmp.eq.s32.totalorder %s33, 1
      %p255 = por %p253, %p254
      %p256 = scmp.ne.s32.totalorder %s247, %s248
      %p257 = scmp.eq.s32.totalorder %s33, 0
      %p258 = por %p256, %p257
      %p259 = scmp.ne.s32.totalorder %s247, %s248
      %p260 = scmp.eq.s32.totalorder %s34, 1
      %p261 = por %p259, %p260
      %p263 = scmp.ne.s32.totalorder %s248, %s262
      %p264 = scmp.eq.s32.totalorder %s34, 0
      %p265 = por %p263, %p264
      %s266 = ssub.s32 %s28, %s35
      %p267 = scmp.eq.s32.totalorder %s266, 0
      %s269 = sadd.s32 %s268, 1
      %s270 = scalar_select %p267, %s268, %s269
      %p273 = pneg %p267
      %p274 = scmp.eq.s32.totalorder %s28, 1
      %p275 = por %p273, %p274
      %p276 = scmp.ne.s32.totalorder %s268, %s271
      %p277 = scmp.eq.s32.totalorder %s28, 0
      %p278 = por %p276, %p277
      %p279 = scmp.ne.s32.totalorder %s268, %s271
      %p280 = scmp.eq.s32.totalorder %s33, 1
      %p281 = por %p279, %p280
      %p282 = scmp.ne.s32.totalorder %s271, %s272
      %p283 = scmp.eq.s32.totalorder %s33, 0
      %p284 = por %p282, %p283
      %p285 = scmp.ne.s32.totalorder %s271, %s272
      %p286 = scmp.eq.s32.totalorder %s34, 1
      %p287 = por %p285, %p286
      %p289 = scmp.ne.s32.totalorder %s272, %s288
      %p290 = scmp.eq.s32.totalorder %s34, 0
      %p291 = por %p289, %p290
      %s292 = ssub.s32 %s28, %s35
      %p293 = scmp.eq.s32.totalorder %s292, 0
      %s295 = sadd.s32 %s294, 1
      %s296 = scalar_select %p293, %s294, %s295
      %p299 = pneg %p293
      %p300 = scmp.eq.s32.totalorder %s28, 1
      %p301 = por %p299, %p300
      %p302 = scmp.ne.s32.totalorder %s294, %s297
      %p303 = scmp.eq.s32.totalorder %s28, 0
      %p304 = por %p302, %p303
      %p305 = scmp.ne.s32.totalorder %s294, %s297
      %p306 = scmp.eq.s32.totalorder %s33, 1
      %p307 = por %p305, %p306
      %p308 = scmp.ne.s32.totalorder %s297, %s298
      %p309 = scmp.eq.s32.totalorder %s33, 0
      %p310 = por %p308, %p309
      %p311 = scmp.ne.s32.totalorder %s297, %s298
      %p312 = scmp.eq.s32.totalorder %s34, 1
      %p313 = por %p311, %p312
      %p315 = scmp.ne.s32.totalorder %s298, %s314
      %p316 = scmp.eq.s32.totalorder %s34, 0
      %p317 = por %p315, %p316
      %s318 = ssub.s32 %s28, %s35
      %p319 = scmp.eq.s32.totalorder %s318, 0
      %s321 = sadd.s32 %s320, 1
      %s322 = scalar_select %p319, %s320, %s321
      %p325 = pneg %p319
      %p326 = scmp.eq.s32.totalorder %s28, 1
      %p327 = por %p325, %p326
      %p328 = scmp.ne.s32.totalorder %s320, %s323
      %p329 = scmp.eq.s32.totalorder %s28, 0
      %p330 = por %p328, %p329
      %p331 = scmp.ne.s32.totalorder %s320, %s323
      %p332 = scmp.eq.s32.totalorder %s33, 1
      %p333 = por %p331, %p332
      %p334 = scmp.ne.s32.totalorder %s323, %s324
      %p335 = scmp.eq.s32.totalorder %s33, 0
      %p336 = por %p334, %p335
      %p337 = scmp.ne.s32.totalorder %s323, %s324
      %p338 = scmp.eq.s32.totalorder %s34, 1
      %p339 = por %p337, %p338
      %p341 = scmp.ne.s32.totalorder %s324, %s340
      %p342 = scmp.eq.s32.totalorder %s34, 0
      %p343 = por %p341, %p342
      %s344 = ssub.s32 %s28, %s35
      %p345 = scmp.eq.s32.totalorder %s344, 0
      %s347 = sadd.s32 %s346, 1
      %s348 = scalar_select %p345, %s346, %s347
      %p351 = pneg %p345
      %p352 = scmp.eq.s32.totalorder %s28, 1
      %p353 = por %p351, %p352
      %p354 = scmp.ne.s32.totalorder %s346, %s349
      %p355 = scmp.eq.s32.totalorder %s28, 0
      %p356 = por %p354, %p355
      %p357 = scmp.ne.s32.totalorder %s346, %s349
      %p358 = scmp.eq.s32.totalorder %s33, 1
      %p359 = por %p357, %p358
      %p360 = scmp.ne.s32.totalorder %s349, %s350
      %p361 = scmp.eq.s32.totalorder %s33, 0
      %p362 = por %p360, %p361
      %p363 = scmp.ne.s32.totalorder %s349, %s350
      %p364 = scmp.eq.s32.totalorder %s34, 1
      %p365 = por %p363, %p364
      %p367 = scmp.ne.s32.totalorder %s350, %s366
      %p368 = scmp.eq.s32.totalorder %s34, 0
      %p369 = por %p367, %p368
      %s370 = ssub.s32 %s28, %s35
      %p371 = scmp.eq.s32.totalorder %s370, 0
      %s373 = sadd.s32 %s372, 1
      %s374 = scalar_select %p371, %s372, %s373
      %p377 = pneg %p371
      %p378 = scmp.eq.s32.totalorder %s28, 1
      %p379 = por %p377, %p378
      %p380 = scmp.ne.s32.totalorder %s372, %s375
      %p381 = scmp.eq.s32.totalorder %s28, 0
      %p382 = por %p380, %p381
      %p383 = scmp.ne.s32.totalorder %s372, %s375
      %p384 = scmp.eq.s32.totalorder %s33, 1
      %p385 = por %p383, %p384
      %p386 = scmp.ne.s32.totalorder %s375, %s376
      %p387 = scmp.eq.s32.totalorder %s33, 0
      %p388 = por %p386, %p387
      %p389 = scmp.ne.s32.totalorder %s375, %s376
      %p390 = scmp.eq.s32.totalorder %s34, 1
      %p391 = por %p389, %p390
      %p393 = scmp.ne.s32.totalorder %s376, %s392
      %p394 = scmp.eq.s32.totalorder %s34, 0
      %p395 = por %p393, %p394
      %s396 = ssub.s32 %s28, %s35
      %p397 = scmp.eq.s32.totalorder %s396, 0
      %s399 = sadd.s32 %s398, 1
      %s400 = scalar_select %p397, %s398, %s399
      %p403 = pneg %p397
      %p404 = scmp.eq.s32.totalorder %s28, 1
      %p405 = por %p403, %p404
      %p406 = scmp.ne.s32.totalorder %s398, %s401
      %p407 = scmp.eq.s32.totalorder %s28, 0
      %p408 = por %p406, %p407
      %p409 = scmp.ne.s32.totalorder %s398, %s401
      %p410 = scmp.eq.s32.totalorder %s33, 1
      %p411 = por %p409, %p410
      %p412 = scmp.ne.s32.totalorder %s401, %s402
      %p413 = scmp.eq.s32.totalorder %s33, 0
      %p414 = por %p412, %p413
      %p415 = scmp.ne.s32.totalorder %s401, %s402
      %p416 = scmp.eq.s32.totalorder %s34, 1
      %p417 = por %p415, %p416
      %p419 = scmp.ne.s32.totalorder %s402, %s418
      %p420 = scmp.eq.s32.totalorder %s34, 0
      %p421 = por %p419, %p420
      %p422 = scmp.le.s32.totalorder 1, %s28
      %p423 = scmp.lt.s32.totalorder %s28, 3
      %p424 = pnand %p422, %p423
      %p425 = pneg %p424
      // Predicated region
      $region9: #{co_attention_block_forward.1} parent=5 // pred_check
        _
      $region10: #{co_attention_block_forward.1} parent=5 // pred_check_branch
        %427 = sbr.rel (%p424) target = $region12
      $region11: #{co_attention_block_forward.1} parent=5 // pred_region
        %s428 = ssub.s32 %s28, 1
        // Predicated region
        $region13: #{co_attention_block_forward.1} parent=11 // pred_check
          %p429 = pneg %p153
        $region14: #{co_attention_block_forward.1} parent=11 // pred_check_branch
          %431 = sbr.rel (%p429) target = $region16
        $region15: #{co_attention_block_forward.1} parent=11 // pred_region
          _
        $region16: #{co_attention_block_forward.1} parent=11 // pred_fallthru
          _
        // Predicated region
        $region17: #{co_attention_block_forward.1} parent=11 // pred_check
          %p432 = pneg %p174
        $region18: #{co_attention_block_forward.1} parent=11 // pred_check_branch
          %434 = sbr.rel (%p432) target = $region20
        $region19: #{co_attention_block_forward.1} parent=11 // pred_region
          _
        $region20: #{co_attention_block_forward.1} parent=11 // pred_fallthru
          _
        // Predicated region
        $region21: #{co_attention_block_forward.1} parent=11 // pred_check
          %p435 = pneg %p195
        $region22: #{co_attention_block_forward.1} parent=11 // pred_check_branch
          %437 = sbr.rel (%p435) target = $region24
        $region23: #{co_attention_block_forward.1} parent=11 // pred_region
          _
        $region24: #{co_attention_block_forward.1} parent=11 // pred_fallthru
          _
        // Predicated region
        $region25: #{co_attention_block_forward.1} parent=11 // pred_check
          %p438 = pneg %p216
        $region26: #{co_attention_block_forward.1} parent=11 // pred_check_branch
          %440 = sbr.rel (%p438) target = $region28
        $region27: #{co_attention_block_forward.1} parent=11 // pred_region
          _
        $region28: #{co_attention_block_forward.1} parent=11 // pred_fallthru
          _
        // Predicated region
        $region29: #{co_attention_block_forward.1} parent=11 // pred_check
          %p441 = pneg %p237
        $region30: #{co_attention_block_forward.1} parent=11 // pred_check_branch
          %443 = sbr.rel (%p441) target = $region32
        $region31: #{co_attention_block_forward.1} parent=11 // pred_region
          _
        $region32: #{co_attention_block_forward.1} parent=11 // pred_fallthru
          _
        // Predicated region
        $region33: #{co_attention_block_forward.1} parent=11 // pred_check
          %p444 = pneg %p258
        $region34: #{co_attention_block_forward.1} parent=11 // pred_check_branch
          %446 = sbr.rel (%p444) target = $region36
        $region35: #{co_attention_block_forward.1} parent=11 // pred_region
          _
        $region36: #{co_attention_block_forward.1} parent=11 // pred_fallthru
          _
      $region12: #{co_attention_block_forward.1} parent=5 // pred_fallthru
        _
      %p447 = scmp.lt.s32.totalorder %s28, 2
      // Predicated region
      $region37: #{co_attention_block_forward.1} parent=5 // pred_check
        %p448 = pneg %p447
      $region38: #{co_attention_block_forward.1} parent=5 // pred_check_branch
        %450 = sbr.rel (%p448) target = $region40
      $region39: #{co_attention_block_forward.1} parent=5 // pred_region
        // Predicated region
        $region41: #{co_attention_block_forward.1} parent=39 // pred_check
          %p451 = pneg %p48
        $region42: #{co_attention_block_forward.1} parent=39 // pred_check_branch
          %453 = sbr.rel (%p451) target = $region44
        $region43: #{co_attention_block_forward.1} parent=39 // pred_region
          %p454 = scmp.lt.s32.totalorder %s28, 1
          %s455 = scalar_select %p454, %s28, 1
          %s456 = scalar_lea.vmem %s0, %s455
        $region44: #{co_attention_block_forward.1} parent=39 // pred_fallthru
          _
        // Predicated region
        $region45: #{co_attention_block_forward.1} parent=39 // pred_check
          %p457 = pneg %p74
        $region46: #{co_attention_block_forward.1} parent=39 // pred_check_branch
          %459 = sbr.rel (%p457) target = $region48
        $region47: #{co_attention_block_forward.1} parent=39 // pred_region
          %p460 = scmp.lt.s32.totalorder %s28, 1
          %s461 = scalar_select %p460, %s28, 1
          %s462 = scalar_lea.vmem %s1, %s461
        $region48: #{co_attention_block_forward.1} parent=39 // pred_fallthru
          _
        // Predicated region
        $region49: #{co_attention_block_forward.1} parent=39 // pred_check
          %p463 = pneg %p100
        $region50: #{co_attention_block_forward.1} parent=39 // pred_check_branch
          %465 = sbr.rel (%p463) target = $region52
        $region51: #{co_attention_block_forward.1} parent=39 // pred_region
          %p466 = scmp.lt.s32.totalorder %s28, 1
          %s467 = scalar_select %p466, %s28, 1
          %s468 = smul.addr %s467, 2
          %s469 = smul.addr %s468, 8
          %s470 = scalar_lea.vmem %s2, %s469
        $region52: #{co_attention_block_forward.1} parent=39 // pred_fallthru
          _
        // Predicated region
        $region53: #{co_attention_block_forward.1} parent=39 // pred_check
          %p471 = pneg %p126
        $region54: #{co_attention_block_forward.1} parent=39 // pred_check_branch
          %473 = sbr.rel (%p471) target = $region56
        $region55: #{co_attention_block_forward.1} parent=39 // pred_region
          %p474 = scmp.lt.s32.totalorder %s28, 1
          %s475 = scalar_select %p474, %s28, 1
          %s476 = smul.addr %s475, 8
          %s477 = scalar_lea.vmem %s3, %s476
        $region56: #{co_attention_block_forward.1} parent=39 // pred_fallthru
          _
      $region40: #{co_attention_block_forward.1} parent=5 // pred_fallthru
        _
      %p478 = scmp.le.s32.totalorder 1, %s28
      %p479 = scmp.lt.s32.totalorder %s28, 3
      %p480 = pnand %p478, %p479
      %p481 = pneg %p480
      // Predicated region
      $region57: #{co_attention_block_forward.1} parent=5 // pred_check
        _
      $region58: #{co_attention_block_forward.1} parent=5 // pred_check_branch
        %483 = sbr.rel (%p480) target = $region60
      $region59: #{co_attention_block_forward.1} parent=5 // pred_region
        %s484 = ssub.s32 %s28, 1
        %p485 = scmp.lt.s32.totalorder %s33, 1
        %s486 = scalar_select %p485, %s33, 1
        %s487 = scalar_lea.vmem %s0, %s486
        %p488 = pneg %p54
        %p489 = pneg %p51
        %p490 = scmp.lt.s32.totalorder %s33, 1
        %s491 = scalar_select %p490, %s33, 1
        %s492 = scalar_lea.vmem %s1, %s491
        %p493 = pneg %p80
        %p494 = pneg %p77
        %p495 = scmp.lt.s32.totalorder %s33, 1
        %s496 = scalar_select %p495, %s33, 1
        %s497 = smul.addr %s496, 2
        %s498 = smul.addr %s497, 8
        %s499 = scalar_lea.vmem %s2, %s498
        %p500 = pneg %p106
        %p501 = pneg %p103
        %p502 = scmp.lt.s32.totalorder %s33, 1
        %s503 = scalar_select %p502, %s33, 1
        %s504 = smul.addr %s503, 8
        %s505 = scalar_lea.vmem %s3, %s504
        %p506 = pneg %p132
        %p507 = pneg %p129
        %p508 = pneg %p153
        %p509 = pneg %p150
        %p510 = pneg %p174
        %p511 = pneg %p171
        %p512 = pneg %p195
        %p513 = pneg %p192
        %p514 = pneg %p216
        %p515 = pneg %p213
        %p516 = pneg %p237
        %p517 = pneg %p234
        %p518 = pneg %p258
        %p519 = pneg %p255
        %p520 = pneg %p284
        %p521 = pneg %p281
        %s522 = sand.u32 %s271, 1
        %s523 = scalar_lea.sflag [#allocation5], %s522
        %s524 = sand.u32 %s271, 1
        %s525 = smul.addr %s524, 16
        %s526 = scalar_lea.vmem [#allocation4], %s525
        %p527 = pneg %p310
        %p528 = pneg %p307
        %s529 = sand.u32 %s33, 1
        %s530 = scalar_lea.sflag [#allocation7], %s529
        %s531 = sand.u32 %s297, 1
        %s532 = smul.addr %s531, 8
        %s533 = scalar_lea.vmem [#allocation6], %s532
        %p534 = pneg %p336
        %p535 = pneg %p333
        %s536 = sand.u32 %s33, 1
        %s537 = scalar_lea.sflag [#allocation7], %s536
        %s538 = sand.u32 %s323, 1
        %s539 = smul.addr %s538, 32
        %s540 = scalar_lea.vmem [#allocation8], %s539
        %p541 = pneg %p362
        %p542 = pneg %p359
        %p543 = scmp.lt.s32.totalorder %s33, 1
        %s544 = scalar_select %p543, %s33, 1
        %s545 = smul.addr %s544, 8
        %s546 = smul.addr %s545, 8
        %s547 = scalar_lea.vmem %s13, %s546
        %p548 = pneg %p388
        %p549 = pneg %p385
        %p550 = scmp.lt.s32.totalorder %s33, 1
        %s551 = scalar_select %p550, %s33, 1
        %s552 = smul.addr %s551, 2
        %s553 = smul.addr %s552, 8
        %s554 = scalar_lea.vmem %s14, %s553
        %p555 = pneg %p414
        %p556 = pneg %p411
        %p557 = scmp.lt.s32.totalorder %s33, 1
        %s558 = scalar_select %p557, %s33, 1
        %s559 = smul.addr %s558, 8
        %s560 = scalar_lea.vmem %s15, %s559
        %p561 = scmp.lt.s32.totalorder %s33, 1
        %s562 = scalar_select %p561, %s33, 1
        %s563 = scalar_lea.vmem %s0, %s562
        %p564 = scmp.lt.s32.totalorder %s33, 1
        %s565 = scalar_select %p564, %s33, 1
        %s566 = scalar_lea.vmem %s1, %s565
        %p567 = scmp.lt.s32.totalorder %s33, 1
        %s568 = scalar_select %p567, %s33, 1
        %s569 = smul.addr %s568, 2
        %s570 = smul.addr %s569, 8
        %s571 = scalar_lea.vmem %s2, %s570
        %p572 = scmp.lt.s32.totalorder %s33, 1
        %s573 = scalar_select %p572, %s33, 1
        %s574 = smul.addr %s573, 8
        %s575 = scalar_lea.vmem %s3, %s574
        %p576 = scmp.lt.s32.totalorder %s33, 1
        %s577 = scalar_select %p576, %s33, 1
        %s578 = smul.addr %s577, 8
        %s579 = smul.addr %s578, 8
        %s580 = scalar_lea.vmem %s13, %s579
        %p581 = scmp.lt.s32.totalorder %s33, 1
        %s582 = scalar_select %p581, %s33, 1
        %s583 = smul.addr %s582, 2
        %s584 = smul.addr %s583, 8
        %s585 = scalar_lea.vmem %s14, %s584
        %p586 = scmp.lt.s32.totalorder %s33, 1
        %s587 = scalar_select %p586, %s33, 1
        %s588 = smul.addr %s587, 8
        %s589 = scalar_lea.vmem %s15, %s588
        %v590 = vld [vmem:[%s571] sm:$0xff]
        %v591 = vld [vmem:[%s571 + $0x8] sm:$0xff]
        %v592 = vld [vmem:[%s575] sm:$0xff]
        %v593 = vld [vmem:[%s563] sm:$0x1]
        %v594 = vld [vmem:[%s566] sm:$0x1]
        %v595 = vld [vmem:[%s4] sm:$0xff]
        %v596 = vld [vmem:[%s4 + $0x8] sm:$0xff]
        %v597 = vld [vmem:[%s4 + $0x10] sm:$0xff]
        %v598 = vld [vmem:[%s4 + $0x18] sm:$0xff]
        %v599 = vld [vmem:[%s4 + $0x20] sm:$0xff]
        %v600 = vld [vmem:[%s4 + $0x28] sm:$0xff]
        %v601 = vld [vmem:[%s4 + $0x30] sm:$0xff]
        %v602 = vld [vmem:[%s4 + $0x38] sm:$0xff]
        %v603 = vld [vmem:[%s4 + $0x40] sm:$0xff]
        %v604 = vld [vmem:[%s4 + $0x48] sm:$0xff]
        %v605 = vld [vmem:[%s4 + $0x50] sm:$0xff]
        %v606 = vld [vmem:[%s4 + $0x58] sm:$0xff]
        %v607 = vld [vmem:[%s4 + $0x60] sm:$0xff]
        %v608 = vld [vmem:[%s4 + $0x68] sm:$0xff]
        %v609 = vld [vmem:[%s4 + $0x70] sm:$0xff]
        %v610 = vld [vmem:[%s4 + $0x78] sm:$0xff]
        %v611 = vld [vmem:[%s5] sm:$0x3]
        %v613 = vlaneseq
        %v614 = vshrl.u32 %v613, 7
        %v615 = vsub.s32 0, %v614
        %v616 = vrot.slane %v611, %v615
        %v617 = vlaneseq
        %v618 = vshrl.u32 %v617, 7
        %v619 = vsub.s32 1, %v618
        %v620 = vrot.slane %v611, %v619
        %vm623 = vcmask 523264
        %v625 = vsel %vm623, %v590, 0
        %v628 = vsel %vm623, %v591, 0
        %630 = vmatprep.subr.mxu0 %v596
        %631 = vmatpush1.msra.mxu0 %v595
        %632 = vmatprep.subr.mxu0 %v598
        %633 = vmatpush1.msra.mxu0 %v597
        %634 = vmatprep.subr.mxu0 %v600
        %635 = vmatpush1.msra.mxu0 %v599
        %636 = vmatprep.subr.mxu0 %v602
        %637 = vmatpush1.msra.mxu0 %v601
        %638 = vmatprep.subr.mxu0 %v604
        %639 = vmatpush1.msra.mxu0 %v603
        %640 = vmatprep.subr.mxu0 %v606
        %641 = vmatpush1.msra.mxu0 %v605
        %642 = vmatprep.subr.mxu0 %v608
        %643 = vmatpush1.msra.mxu0 %v607
        %644 = vmatprep.subr.mxu0 %v610
        %645 = vmatpush1.msra.mxu0 %v609
        %646 = vmatprep.subr.mxu0 0.0
        %647 = vmatpush1.msra.mxu0 0.0
        %648 = vmatprep.subr.mxu0 0.0
        %649 = vmatpush1.msra.mxu0 0.0
        %650 = vmatprep.subr.mxu0 0.0
        %651 = vmatpush1.msra.mxu0 0.0
        %652 = vmatprep.subr.mxu0 0.0
        %653 = vmatpush1.msra.mxu0 0.0
        %654 = vmatprep.subr.mxu0 0.0
        %655 = vmatpush1.msra.mxu0 0.0
        %656 = vmatprep.subr.mxu0 0.0
        %657 = vmatpush1.msra.mxu0 0.0
        %658 = vmatprep.subr.mxu0 0.0
        %659 = vmatpush1.msra.mxu0 0.0
        %660 = vmatprep.subr.mxu0 0.0
        %661 = vmatpush1.msra.mxu0 0.0
        %662 = vmatprep.subr.mxu0 0.0
        %663 = vmatpush1.msra.mxu0 0.0
        %664 = vmatprep.subr.mxu0 0.0
        %665 = vmatpush1.msra.mxu0 0.0
        %666 = vmatprep.subr.mxu0 0.0
        %667 = vmatpush1.msra.mxu0 0.0
        %668 = vmatprep.subr.mxu0 0.0
        %669 = vmatpush1.msra.mxu0 0.0
        %670 = vmatprep.subr.mxu0 0.0
        %671 = vmatpush1.msra.mxu0 0.0
        %672 = vmatprep.subr.mxu0 0.0
        %673 = vmatpush1.msra.mxu0 0.0
        %674 = vmatprep.subr.mxu0 0.0
        %675 = vmatpush1.msra.mxu0 0.0
        %676 = vmatprep.subr.mxu0 0.0
        %677 = vmatpush1.msra.mxu0 0.0
        %678 = vmatprep.subr.mxu0 0.0
        %679 = vmatpush1.msra.mxu0 0.0
        %680 = vmatprep.subr.mxu0 0.0
        %681 = vmatpush1.msra.mxu0 0.0
        %682 = vmatprep.subr.mxu0 0.0
        %683 = vmatpush1.msra.mxu0 0.0
        %684 = vmatprep.subr.mxu0 0.0
        %685 = vmatpush1.msra.mxu0 0.0
        %686 = vmatprep.subr.mxu0 0.0
        %687 = vmatpush1.msra.mxu0 0.0
        %688 = vmatprep.subr.mxu0 0.0
        %689 = vmatpush1.msra.mxu0 0.0
        %690 = vmatprep.subr.mxu0 0.0
        %691 = vmatpush1.msra.mxu0 0.0
        %692 = vmatprep.subr.mxu0 0.0
        %693 = vmatpush1.msra.mxu0 0.0
        %694 = vmatprep.mubr.f32.mxu0 0.0
        %695 = vmatmul.mubr.f32.gmra.mrb[0].mxu0 %v625
        %v696 = vpop.f32.mrb[0].mxu0
        %v697 = vadd.f32 %v616, %v696
        %v698 = vpop.f32.mrb[0].mxu0
        %v699 = vadd.f32 %v620, %v698
        %700 = vmatprep.mubr.f32.mxu0 0.0
        %701 = vmatmul.mubr.f32.gmra.mrb[0].mxu0 %v628
        %v702 = vpop.f32.mrb[0].mxu0
        %v703 = vadd.f32 %v616, %v702
        %v704 = vpop.f32.mrb[0].mxu0
        %v705 = vadd.f32 %v620, %v704
        %706 = vdwg.mxu0
        %v707 = vld [vmem:[%s6] sm:$0xff]
        %v708 = vld [vmem:[%s6 + $0x8] sm:$0xff]
        %v709 = vld [vmem:[%s6 + $0x10] sm:$0xff]
        %v710 = vld [vmem:[%s6 + $0x18] sm:$0xff]
        %v711 = vld [vmem:[%s6 + $0x20] sm:$0xff]
        %v712 = vld [vmem:[%s6 + $0x28] sm:$0xff]
        %v713 = vld [vmem:[%s6 + $0x30] sm:$0xff]
        %v714 = vld [vmem:[%s6 + $0x38] sm:$0xff]
        %v715 = vld [vmem:[%s6 + $0x40] sm:$0xff]
        %v716 = vld [vmem:[%s6 + $0x48] sm:$0xff]
        %v717 = vld [vmem:[%s6 + $0x50] sm:$0xff]
        %v718 = vld [vmem:[%s6 + $0x58] sm:$0xff]
        %v719 = vld [vmem:[%s6 + $0x60] sm:$0xff]
        %v720 = vld [vmem:[%s6 + $0x68] sm:$0xff]
        %v721 = vld [vmem:[%s6 + $0x70] sm:$0xff]
        %v722 = vld [vmem:[%s6 + $0x78] sm:$0xff]
        %v723 = vld [vmem:[%s7] sm:$0x3]
        %v725 = vlaneseq
        %v726 = vshrl.u32 %v725, 7
        %v727 = vsub.s32 0, %v726
        %v728 = vrot.slane %v723, %v727
        %v729 = vlaneseq
        %v730 = vshrl.u32 %v729, 7
        %v731 = vsub.s32 1, %v730
        %v732 = vrot.slane %v723, %v731
        %v736 = vsel %vm623, %v592, 0
        %738 = vmatprep.subr.mxu0 %v708
        %739 = vmatpush1.msra.mxu0 %v707
        %740 = vmatprep.subr.mxu0 %v710
        %741 = vmatpush1.msra.mxu0 %v709
        %742 = vmatprep.subr.mxu0 %v712
        %743 = vmatpush1.msra.mxu0 %v711
        %744 = vmatprep.subr.mxu0 %v714
        %745 = vmatpush1.msra.mxu0 %v713
        %746 = vmatprep.subr.mxu0 %v716
        %747 = vmatpush1.msra.mxu0 %v715
        %748 = vmatprep.subr.mxu0 %v718
        %749 = vmatpush1.msra.mxu0 %v717
        %750 = vmatprep.subr.mxu0 %v720
        %751 = vmatpush1.msra.mxu0 %v719
        %752 = vmatprep.subr.mxu0 %v722
        %753 = vmatpush1.msra.mxu0 %v721
        %754 = vmatprep.subr.mxu0 0.0
        %755 = vmatpush1.msra.mxu0 0.0
        %756 = vmatprep.subr.mxu0 0.0
        %757 = vmatpush1.msra.mxu0 0.0
        %758 = vmatprep.subr.mxu0 0.0
        %759 = vmatpush1.msra.mxu0 0.0
        %760 = vmatprep.subr.mxu0 0.0
        %761 = vmatpush1.msra.mxu0 0.0
        %762 = vmatprep.subr.mxu0 0.0
        %763 = vmatpush1.msra.mxu0 0.0
        %764 = vmatprep.subr.mxu0 0.0
        %765 = vmatpush1.msra.mxu0 0.0
        %766 = vmatprep.subr.mxu0 0.0
        %767 = vmatpush1.msra.mxu0 0.0
        %768 = vmatprep.subr.mxu0 0.0
        %769 = vmatpush1.msra.mxu0 0.0
        %770 = vmatprep.subr.mxu0 0.0
        %771 = vmatpush1.msra.mxu0 0.0
        %772 = vmatprep.subr.mxu0 0.0
        %773 = vmatpush1.msra.mxu0 0.0
        %774 = vmatprep.subr.mxu0 0.0
        %775 = vmatpush1.msra.mxu0 0.0
        %776 = vmatprep.subr.mxu0 0.0
        %777 = vmatpush1.msra.mxu0 0.0
        %778 = vmatprep.subr.mxu0 0.0
        %779 = vmatpush1.msra.mxu0 0.0
        %780 = vmatprep.subr.mxu0 0.0
        %781 = vmatpush1.msra.mxu0 0.0
        %782 = vmatprep.subr.mxu0 0.0
        %783 = vmatpush1.msra.mxu0 0.0
        %784 = vmatprep.subr.mxu0 0.0
        %785 = vmatpush1.msra.mxu0 0.0
        %786 = vmatprep.subr.mxu0 0.0
        %787 = vmatpush1.msra.mxu0 0.0
        %788 = vmatprep.subr.mxu0 0.0
        %789 = vmatpush1.msra.mxu0 0.0
        %790 = vmatprep.subr.mxu0 0.0
        %791 = vmatpush1.msra.mxu0 0.0
        %792 = vmatprep.subr.mxu0 0.0
        %793 = vmatpush1.msra.mxu0 0.0
        %794 = vmatprep.subr.mxu0 0.0
        %795 = vmatpush1.msra.mxu0 0.0
        %796 = vmatprep.subr.mxu0 0.0
        %797 = vmatpush1.msra.mxu0 0.0
        %798 = vmatprep.subr.mxu0 0.0
        %799 = vmatpush1.msra.mxu0 0.0
        %800 = vmatprep.subr.mxu0 0.0
        %801 = vmatpush1.msra.mxu0 0.0
        %802 = vmatprep.mubr.f32.mxu0 0.0
        %803 = vmatmul.mubr.f32.gmra.mrb[0].mxu0 %v736
        %v804 = vpop.f32.mrb[0].mxu0
        %v805 = vadd.f32 %v728, %v804
        %v806 = vpop.f32.mrb[0].mxu0
        %v807 = vadd.f32 %v732, %v806
        %808 = vdwg.mxu0
        %809 = vst [vmem:[%s585] sm:$0xff] %v697
        %810 = vst [vmem:[%s585 + $0x8] sm:$0xff] %v703
        %811 = vst [vmem:[%s589] sm:$0xff] %v805
        %v812 = vmul.f32 %v697, 0.25
        %v813 = vmul.f32 %v703, 0.25
        %v814 = vmul.f32 %v805, 0.25
        %817 = vrot.lane.b32.xlu0 %v697, 64
        %v818 = vpop.permute.xlu0 %817
        %819 = vrot.lane.b32.xlu0 %v703, 64
        %v820 = vpop.permute.xlu0 %819
        %vm821 = vcmask 130048
        %v823 = vsel %vm821, %v814, 0
        %v825 = vsel %vm821, %v818, 0
        %v827 = vsel %vm821, %v820, 0
        %829 = vmatprep.subr.mxu0 0.0
        %830 = vmatpush1.xpose.msra.mxu0 %v825
        %831 = vmatprep.subr.mxu0 0.0
        %832 = vmatpush1.xpose.msra.mxu0 %v827
        %833 = vmatprep.subr.mxu0 0.0
        %834 = vmatpush1.xpose.msra.mxu0 0.0
        %835 = vmatprep.subr.mxu0 0.0
        %836 = vmatpush1.xpose.msra.mxu0 0.0
        %837 = vmatprep.subr.mxu0 0.0
        %838 = vmatpush1.xpose.msra.mxu0 0.0
        %839 = vmatprep.subr.mxu0 0.0
        %840 = vmatpush1.xpose.msra.mxu0 0.0
        %841 = vmatprep.subr.mxu0 0.0
        %842 = vmatpush1.xpose.msra.mxu0 0.0
        %843 = vmatprep.subr.mxu0 0.0
        %844 = vmatpush1.xpose.msra.mxu0 0.0
        %845 = vmatprep.subr.mxu0 0.0
        %846 = vmatpush1.xpose.msra.mxu0 0.0
        %847 = vmatprep.subr.mxu0 0.0
        %848 = vmatpush1.xpose.msra.mxu0 0.0
        %849 = vmatprep.subr.mxu0 0.0
        %850 = vmatpush1.xpose.msra.mxu0 0.0
        %851 = vmatprep.subr.mxu0 0.0
        %852 = vmatpush1.xpose.msra.mxu0 0.0
        %853 = vmatprep.subr.mxu0 0.0
        %854 = vmatpush1.xpose.msra.mxu0 0.0
        %855 = vmatprep.subr.mxu0 0.0
        %856 = vmatpush1.xpose.msra.mxu0 0.0
        %857 = vmatprep.subr.mxu0 0.0
        %858 = vmatpush1.xpose.msra.mxu0 0.0
        %859 = vmatprep.subr.mxu0 0.0
        %860 = vmatpush1.xpose.msra.mxu0 0.0
        %861 = vmatprep.subr.mxu0 0.0
        %862 = vmatpush1.xpose.msra.mxu0 0.0
        %863 = vmatprep.subr.mxu0 0.0
        %864 = vmatpush1.xpose.msra.mxu0 0.0
        %865 = vmatprep.subr.mxu0 0.0
        %866 = vmatpush1.xpose.msra.mxu0 0.0
        %867 = vmatprep.subr.mxu0 0.0
        %868 = vmatpush1.xpose.msra.mxu0 0.0
        %869 = vmatprep.subr.mxu0 0.0
        %870 = vmatpush1.xpose.msra.mxu0 0.0
        %871 = vmatprep.subr.mxu0 0.0
        %872 = vmatpush1.xpose.msra.mxu0 0.0
        %873 = vmatprep.subr.mxu0 0.0
        %874 = vmatpush1.xpose.msra.mxu0 0.0
        %875 = vmatprep.subr.mxu0 0.0
        %876 = vmatpush1.xpose.msra.mxu0 0.0
        %877 = vmatprep.subr.mxu0 0.0
        %878 = vmatpush1.xpose.msra.mxu0 0.0
        %879 = vmatprep.subr.mxu0 0.0
        %880 = vmatpush1.xpose.msra.mxu0 0.0
        %881 = vmatprep.subr.mxu0 0.0
        %882 = vmatpush1.xpose.msra.mxu0 0.0
        %883 = vmatprep.subr.mxu0 0.0
        %884 = vmatpush1.xpose.msra.mxu0 0.0
        %885 = vmatprep.subr.mxu0 0.0
        %886 = vmatpush1.xpose.msra.mxu0 0.0
        %887 = vmatprep.subr.mxu0 0.0
        %888 = vmatpush1.xpose.msra.mxu0 0.0
        %889 = vmatprep.subr.mxu0 0.0
        %890 = vmatpush1.xpose.msra.mxu0 0.0
        %891 = vmatprep.subr.mxu0 0.0
        %892 = vmatpush1.xpose.msra.mxu0 0.0
        %893 = vmatprep.mubr.f32.mxu0 0.0
        %894 = vmatmul.mubr.f32.gmra.mrb[0].mxu0 %v823
        %v895 = vpop.f32.mrb[0].mxu0
        %v896 = vadd.f32 0.0, %v895
        %v897 = vpop.f32.mrb[0].mxu0
        %898 = vdwg.mxu0
        %v900 = vlaneseq
        %v901 = vshrl.u32 %v900, 7
        %v902 = vsub.s32 0, %v901
        %v903 = vrot.slane %v593, %v902
        %v905 = vmul.f32 %v896, %v903
        %v906 = vsel %vm821, %v905, -inf
        %907 = vmax.xlane.f32.xlu0 %v906
        %v908 = vpop.xlane.xlu0 %907
        %v909 = vsub.f32 %v905, %v908
        %v910 = vmul.f32 %v909, 1.442695
        %v911 = vpow.pop %v910
        %v912 = vsel %vm821, %v911, 0.0
        %913 = vadd.xlane.f32.xlu0 %v912
        %v914 = vpop.xlane.xlu0 %913
        %v915 = vrcp.pop %v914
        %v916 = vmul.f32 %v911, %v915
        %917 = vst.msk [vmem:[%s540] sm:$0xff] %vm821, %v916
        %v919 = vsel %vm821, %v916, 0
        %921 = vmatprep.subr.mxu0 0.0
        %922 = vmatpush1.msra.mxu0 %v699
        %923 = vmatprep.subr.mxu0 0.0
        %924 = vmatpush1.msra.mxu0 %v705
        %925 = vmatprep.subr.mxu0 0.0
        %926 = vmatpush1.msra.mxu0 0.0
        %927 = vmatprep.subr.mxu0 0.0
        %928 = vmatpush1.msra.mxu0 0.0
        %929 = vmatprep.subr.mxu0 0.0
        %930 = vmatpush1.msra.mxu0 0.0
        %931 = vmatprep.subr.mxu0 0.0
        %932 = vmatpush1.msra.mxu0 0.0
        %933 = vmatprep.subr.mxu0 0.0
        %934 = vmatpush1.msra.mxu0 0.0
        %935 = vmatprep.subr.mxu0 0.0
        %936 = vmatpush1.msra.mxu0 0.0
        %937 = vmatprep.subr.mxu0 0.0
        %938 = vmatpush1.msra.mxu0 0.0
        %939 = vmatprep.subr.mxu0 0.0
        %940 = vmatpush1.msra.mxu0 0.0
        %941 = vmatprep.subr.mxu0 0.0
        %942 = vmatpush1.msra.mxu0 0.0
        %943 = vmatprep.subr.mxu0 0.0
        %944 = vmatpush1.msra.mxu0 0.0
        %945 = vmatprep.subr.mxu0 0.0
        %946 = vmatpush1.msra.mxu0 0.0
        %947 = vmatprep.subr.mxu0 0.0
        %948 = vmatpush1.msra.mxu0 0.0
        %949 = vmatprep.subr.mxu0 0.0
        %950 = vmatpush1.msra.mxu0 0.0
        %951 = vmatprep.subr.mxu0 0.0
        %952 = vmatpush1.msra.mxu0 0.0
        %953 = vmatprep.subr.mxu0 0.0
        %954 = vmatpush1.msra.mxu0 0.0
        %955 = vmatprep.subr.mxu0 0.0
        %956 = vmatpush1.msra.mxu0 0.0
        %957 = vmatprep.subr.mxu0 0.0
        %958 = vmatpush1.msra.mxu0 0.0
        %959 = vmatprep.subr.mxu0 0.0
        %960 = vmatpush1.msra.mxu0 0.0
        %961 = vmatprep.subr.mxu0 0.0
        %962 = vmatpush1.msra.mxu0 0.0
        %963 = vmatprep.subr.mxu0 0.0
        %964 = vmatpush1.msra.mxu0 0.0
        %965 = vmatprep.subr.mxu0 0.0
        %966 = vmatpush1.msra.mxu0 0.0
        %967 = vmatprep.subr.mxu0 0.0
        %968 = vmatpush1.msra.mxu0 0.0
        %969 = vmatprep.subr.mxu0 0.0
        %970 = vmatpush1.msra.mxu0 0.0
        %971 = vmatprep.subr.mxu0 0.0
        %972 = vmatpush1.msra.mxu0 0.0
        %973 = vmatprep.subr.mxu0 0.0
        %974 = vmatpush1.msra.mxu0 0.0
        %975 = vmatprep.subr.mxu0 0.0
        %976 = vmatpush1.msra.mxu0 0.0
        %977 = vmatprep.subr.mxu0 0.0
        %978 = vmatpush1.msra.mxu0 0.0
        %979 = vmatprep.subr.mxu0 0.0
        %980 = vmatpush1.msra.mxu0 0.0
        %981 = vmatprep.subr.mxu0 0.0
        %982 = vmatpush1.msra.mxu0 0.0
        %983 = vmatprep.subr.mxu0 0.0
        %984 = vmatpush1.msra.mxu0 0.0
        %985 = vmatprep.mubr.f32.mxu0 0.0
        %986 = vmatmul.mubr.f32.gmra.mrb[0].mxu0 %v919
        %v987 = vpop.f32.mrb[0].mxu0
        %v988 = vadd.f32 0.0, %v987
        %v989 = vpop.f32.mrb[0].mxu0
        %990 = vdwg.mxu0
        %991 = vst.msk [vmem:[#allocation2] sm:$0xff] %vm821, %v988
        %993 = vrot.lane.b32.xlu0 %v805, 64
        %v994 = vpop.permute.xlu0 %993
        %v996 = vsel %vm821, %v812, 0
        %v999 = vsel %vm821, %v813, 0
        %v1001 = vsel %vm821, %v994, 0
        %1003 = vmatprep.subr.mxu0 0.0
        %1004 = vmatpush1.xpose.msra.mxu0 %v1001
        %1005 = vmatprep.subr.mxu0 0.0
        %1006 = vmatpush1.xpose.msra.mxu0 0.0
        %1007 = vmatprep.subr.mxu0 0.0
        %1008 = vmatpush1.xpose.msra.mxu0 0.0
        %1009 = vmatprep.subr.mxu0 0.0
        %1010 = vmatpush1.xpose.msra.mxu0 0.0
        %1011 = vmatprep.subr.mxu0 0.0
        %1012 = vmatpush1.xpose.msra.mxu0 0.0
        %1013 = vmatprep.subr.mxu0 0.0
        %1014 = vmatpush1.xpose.msra.mxu0 0.0
        %1015 = vmatprep.subr.mxu0 0.0
        %1016 = vmatpush1.xpose.msra.mxu0 0.0
        %1017 = vmatprep.subr.mxu0 0.0
        %1018 = vmatpush1.xpose.msra.mxu0 0.0
        %1019 = vmatprep.subr.mxu0 0.0
        %1020 = vmatpush1.xpose.msra.mxu0 0.0
        %1021 = vmatprep.subr.mxu0 0.0
        %1022 = vmatpush1.xpose.msra.mxu0 0.0
        %1023 = vmatprep.subr.mxu0 0.0
        %1024 = vmatpush1.xpose.msra.mxu0 0.0
        %1025 = vmatprep.subr.mxu0 0.0
        %1026 = vmatpush1.xpose.msra.mxu0 0.0
        %1027 = vmatprep.subr.mxu0 0.0
        %1028 = vmatpush1.xpose.msra.mxu0 0.0
        %1029 = vmatprep.subr.mxu0 0.0
        %1030 = vmatpush1.xpose.msra.mxu0 0.0
        %1031 = vmatprep.subr.mxu0 0.0
        %1032 = vmatpush1.xpose.msra.mxu0 0.0
        %1033 = vmatprep.subr.mxu0 0.0
        %1034 = vmatpush1.xpose.msra.mxu0 0.0
        %1035 = vmatprep.subr.mxu0 0.0
        %1036 = vmatpush1.xpose.msra.mxu0 0.0
        %1037 = vmatprep.subr.mxu0 0.0
        %1038 = vmatpush1.xpose.msra.mxu0 0.0
        %1039 = vmatprep.subr.mxu0 0.0
        %1040 = vmatpush1.xpose.msra.mxu0 0.0
        %1041 = vmatprep.subr.mxu0 0.0
        %1042 = vmatpush1.xpose.msra.mxu0 0.0
        %1043 = vmatprep.subr.mxu0 0.0
        %1044 = vmatpush1.xpose.msra.mxu0 0.0
        %1045 = vmatprep.subr.mxu0 0.0
        %1046 = vmatpush1.xpose.msra.mxu0 0.0
        %1047 = vmatprep.subr.mxu0 0.0
        %1048 = vmatpush1.xpose.msra.mxu0 0.0
        %1049 = vmatprep.subr.mxu0 0.0
        %1050 = vmatpush1.xpose.msra.mxu0 0.0
        %1051 = vmatprep.subr.mxu0 0.0
        %1052 = vmatpush1.xpose.msra.mxu0 0.0
        %1053 = vmatprep.subr.mxu0 0.0
        %1054 = vmatpush1.xpose.msra.mxu0 0.0
        %1055 = vmatprep.subr.mxu0 0.0
        %1056 = vmatpush1.xpose.msra.mxu0 0.0
        %1057 = vmatprep.subr.mxu0 0.0
        %1058 = vmatpush1.xpose.msra.mxu0 0.0
        %1059 = vmatprep.subr.mxu0 0.0
        %1060 = vmatpush1.xpose.msra.mxu0 0.0
        %1061 = vmatprep.subr.mxu0 0.0
        %1062 = vmatpush1.xpose.msra.mxu0 0.0
        %1063 = vmatprep.subr.mxu0 0.0
        %1064 = vmatpush1.xpose.msra.mxu0 0.0
        %1065 = vmatprep.subr.mxu0 0.0
        %1066 = vmatpush1.xpose.msra.mxu0 0.0
        %1067 = vmatprep.mubr.f32.mxu0 0.0
        %1068 = vmatmul.mubr.f32.gmra.mrb[0].mxu0 %v996
        %v1069 = vpop.f32.mrb[0].mxu0
        %v1070 = vadd.f32 0.0, %v1069
        %v1071 = vpop.f32.mrb[0].mxu0
        %1072 = vmatprep.mubr.f32.mxu0 0.0
        %1073 = vmatmul.mubr.f32.gmra.mrb[0].mxu0 %v999
        %v1074 = vpop.f32.mrb[0].mxu0
        %v1075 = vadd.f32 0.0, %v1074
        %v1076 = vpop.f32.mrb[0].mxu0
        %1077 = vdwg.mxu0
        %v1079 = vlaneseq
        %v1080 = vshrl.u32 %v1079, 7
        %v1081 = vsub.s32 0, %v1080
        %v1082 = vrot.slane %v594, %v1081
        %v1084 = vmul.f32 %v1070, %v1082
        %v1085 = vmul.f32 %v1075, %v1082
        %vm1086 = vcmask 64512
        %v1087 = vsel %vm1086, %v1084, -inf
        %1088 = vmax.xlane.f32.xlu0 %v1087
        %v1089 = vpop.xlane.xlu0 %1088
        %v1090 = vsel %vm1086, %v1085, -inf
        %1091 = vmax.xlane.f32.xlu0 %v1090
        %v1092 = vpop.xlane.xlu0 %1091
        %v1093 = vsub.f32 %v1084, %v1089
        %v1094 = vsub.f32 %v1085, %v1092
        %v1095 = vmul.f32 %v1093, 1.442695
        %v1096 = vpow.pop %v1095
        %v1097 = vmul.f32 %v1094, 1.442695
        %v1098 = vpow.pop %v1097
        %v1099 = vsel %vm1086, %v1096, 0.0
        %1100 = vadd.xlane.f32.xlu0 %v1099
        %v1101 = vpop.xlane.xlu0 %1100
        %v1102 = vsel %vm1086, %v1098, 0.0
        %1103 = vadd.xlane.f32.xlu0 %v1102
        %v1104 = vpop.xlane.xlu0 %1103
        %v1105 = vrcp.pop %v1101
        %v1106 = vrcp.pop %v1104
        %v1107 = vmul.f32 %v1096, %v1105
        %v1108 = vmul.f32 %v1098, %v1106
        %1109 = vst.msk [vmem:[%s580] sm:$0xff] %vm1086, %v1107
        %1110 = vst.msk [vmem:[%s580 + $0x8] sm:$0xff] %vm1086, %v1108
        %v1112 = vsel %vm1086, %v1107, 0
        %v1115 = vsel %vm1086, %v1108, 0
        %1117 = vmatprep.subr.mxu0 0.0
        %1118 = vmatpush1.msra.mxu0 %v807
        %1119 = vmatprep.subr.mxu0 0.0
        %1120 = vmatpush1.msra.mxu0 0.0
        %1121 = vmatprep.subr.mxu0 0.0
        %1122 = vmatpush1.msra.mxu0 0.0
        %1123 = vmatprep.subr.mxu0 0.0
        %1124 = vmatpush1.msra.mxu0 0.0
        %1125 = vmatprep.subr.mxu0 0.0
        %1126 = vmatpush1.msra.mxu0 0.0
        %1127 = vmatprep.subr.mxu0 0.0
        %1128 = vmatpush1.msra.mxu0 0.0
        %1129 = vmatprep.subr.mxu0 0.0
        %1130 = vmatpush1.msra.mxu0 0.0
        %1131 = vmatprep.subr.mxu0 0.0
        %1132 = vmatpush1.msra.mxu0 0.0
        %1133 = vmatprep.subr.mxu0 0.0
        %1134 = vmatpush1.msra.mxu0 0.0
        %1135 = vmatprep.subr.mxu0 0.0
        %1136 = vmatpush1.msra.mxu0 0.0
        %1137 = vmatprep.subr.mxu0 0.0
        %1138 = vmatpush1.msra.mxu0 0.0
        %1139 = vmatprep.subr.mxu0 0.0
        %1140 = vmatpush1.msra.mxu0 0.0
        %1141 = vmatprep.subr.mxu0 0.0
        %1142 = vmatpush1.msra.mxu0 0.0
        %1143 = vmatprep.subr.mxu0 0.0
        %1144 = vmatpush1.msra.mxu0 0.0
        %1145 = vmatprep.subr.mxu0 0.0
        %1146 = vmatpush1.msra.mxu0 0.0
        %1147 = vmatprep.subr.mxu0 0.0
        %1148 = vmatpush1.msra.mxu0 0.0
        %1149 = vmatprep.subr.mxu0 0.0
        %1150 = vmatpush1.msra.mxu0 0.0
        %1151 = vmatprep.subr.mxu0 0.0
        %1152 = vmatpush1.msra.mxu0 0.0
        %1153 = vmatprep.subr.mxu0 0.0
        %1154 = vmatpush1.msra.mxu0 0.0
        %1155 = vmatprep.subr.mxu0 0.0
        %1156 = vmatpush1.msra.mxu0 0.0
        %1157 = vmatprep.subr.mxu0 0.0
        %1158 = vmatpush1.msra.mxu0 0.0
        %1159 = vmatprep.subr.mxu0 0.0
        %1160 = vmatpush1.msra.mxu0 0.0
        %1161 = vmatprep.subr.mxu0 0.0
        %1162 = vmatpush1.msra.mxu0 0.0
        %1163 = vmatprep.subr.mxu0 0.0
        %1164 = vmatpush1.msra.mxu0 0.0
        %1165 = vmatprep.subr.mxu0 0.0
        %1166 = vmatpush1.msra.mxu0 0.0
        %1167 = vmatprep.subr.mxu0 0.0
        %1168 = vmatpush1.msra.mxu0 0.0
        %1169 = vmatprep.subr.mxu0 0.0
        %1170 = vmatpush1.msra.mxu0 0.0
        %1171 = vmatprep.subr.mxu0 0.0
        %1172 = vmatpush1.msra.mxu0 0.0
        %1173 = vmatprep.subr.mxu0 0.0
        %1174 = vmatpush1.msra.mxu0 0.0
        %1175 = vmatprep.subr.mxu0 0.0
        %1176 = vmatpush1.msra.mxu0 0.0
        %1177 = vmatprep.subr.mxu0 0.0
        %1178 = vmatpush1.msra.mxu0 0.0
        %1179 = vmatprep.subr.mxu0 0.0
        %1180 = vmatpush1.msra.mxu0 0.0
        %1181 = vmatprep.mubr.f32.mxu0 0.0
        %1182 = vmatmul.mubr.f32.gmra.mrb[0].mxu0 %v1112
        %v1183 = vpop.f32.mrb[0].mxu0
        %v1184 = vadd.f32 0.0, %v1183
        %v1185 = vpop.f32.mrb[0].mxu0
        %1186 = vmatprep.mubr.f32.mxu0 0.0
        %1187 = vmatmul.mubr.f32.gmra.mrb[0].mxu0 %v1115
        %v1188 = vpop.f32.mrb[0].mxu0
        %v1189 = vadd.f32 0.0, %v1188
        %v1190 = vpop.f32.mrb[0].mxu0
        %1191 = vdwg.mxu0
        %1192 = vst.msk [vmem:[#allocation3] sm:$0xff] %vm821, %v1184
        %1193 = vst.msk [vmem:[#allocation3 + $0x8] sm:$0xff] %vm821, %v1189
        %1194 = vrot.lane.b32.xlu0 %v814, 112
        %v1195 = vpop.permute.xlu0 %1194
        %1196 = vrot.lane.b32.xlu0 %v697, 48
        %v1197 = vpop.permute.xlu0 %1196
        %1198 = vrot.lane.b32.xlu0 %v703, 48
        %v1199 = vpop.permute.xlu0 %1198
        %v1200 = vsel %vm821, %v1195, 0
        %v1202 = vsel %vm821, %v1197, 0
        %v1204 = vsel %vm821, %v1199, 0
        %1206 = vmatprep.subr.mxu0 0.0
        %1207 = vmatpush1.xpose.msra.mxu0 %v1202
        %1208 = vmatprep.subr.mxu0 0.0
        %1209 = vmatpush1.xpose.msra.mxu0 %v1204
        %1210 = vmatprep.subr.mxu0 0.0
        %1211 = vmatpush1.xpose.msra.mxu0 0.0
        %1212 = vmatprep.subr.mxu0 0.0
        %1213 = vmatpush1.xpose.msra.mxu0 0.0
        %1214 = vmatprep.subr.mxu0 0.0
        %1215 = vmatpush1.xpose.msra.mxu0 0.0
        %1216 = vmatprep.subr.mxu0 0.0
        %1217 = vmatpush1.xpose.msra.mxu0 0.0
        %1218 = vmatprep.subr.mxu0 0.0
        %1219 = vmatpush1.xpose.msra.mxu0 0.0
        %1220 = vmatprep.subr.mxu0 0.0
        %1221 = vmatpush1.xpose.msra.mxu0 0.0
        %1222 = vmatprep.subr.mxu0 0.0
        %1223 = vmatpush1.xpose.msra.mxu0 0.0
        %1224 = vmatprep.subr.mxu0 0.0
        %1225 = vmatpush1.xpose.msra.mxu0 0.0
        %1226 = vmatprep.subr.mxu0 0.0
        %1227 = vmatpush1.xpose.msra.mxu0 0.0
        %1228 = vmatprep.subr.mxu0 0.0
        %1229 = vmatpush1.xpose.msra.mxu0 0.0
        %1230 = vmatprep.subr.mxu0 0.0
        %1231 = vmatpush1.xpose.msra.mxu0 0.0
        %1232 = vmatprep.subr.mxu0 0.0
        %1233 = vmatpush1.xpose.msra.mxu0 0.0
        %1234 = vmatprep.subr.mxu0 0.0
        %1235 = vmatpush1.xpose.msra.mxu0 0.0
        %1236 = vmatprep.subr.mxu0 0.0
        %1237 = vmatpush1.xpose.msra.mxu0 0.0
        %1238 = vmatprep.subr.mxu0 0.0
        %1239 = vmatpush1.xpose.msra.mxu0 0.0
        %1240 = vmatprep.subr.mxu0 0.0
        %1241 = vmatpush1.xpose.msra.mxu0 0.0
        %1242 = vmatprep.subr.mxu0 0.0
        %1243 = vmatpush1.xpose.msra.mxu0 0.0
        %1244 = vmatprep.subr.mxu0 0.0
        %1245 = vmatpush1.xpose.msra.mxu0 0.0
        %1246 = vmatprep.subr.mxu0 0.0
        %1247 = vmatpush1.xpose.msra.mxu0 0.0
        %1248 = vmatprep.subr.mxu0 0.0
        %1249 = vmatpush1.xpose.msra.mxu0 0.0
        %1250 = vmatprep.subr.mxu0 0.0
        %1251 = vmatpush1.xpose.msra.mxu0 0.0
        %1252 = vmatprep.subr.mxu0 0.0
        %1253 = vmatpush1.xpose.msra.mxu0 0.0
        %1254 = vmatprep.subr.mxu0 0.0
        %1255 = vmatpush1.xpose.msra.mxu0 0.0
        %1256 = vmatprep.subr.mxu0 0.0
        %1257 = vmatpush1.xpose.msra.mxu0 0.0
        %1258 = vmatprep.subr.mxu0 0.0
        %1259 = vmatpush1.xpose.msra.mxu0 0.0
        %1260 = vmatprep.subr.mxu0 0.0
        %1261 = vmatpush1.xpose.msra.mxu0 0.0
        %1262 = vmatprep.subr.mxu0 0.0
        %1263 = vmatpush1.xpose.msra.mxu0 0.0
        %1264 = vmatprep.subr.mxu0 0.0
        %1265 = vmatpush1.xpose.msra.mxu0 0.0
        %1266 = vmatprep.subr.mxu0 0.0
        %1267 = vmatpush1.xpose.msra.mxu0 0.0
        %1268 = vmatprep.subr.mxu0 0.0
        %1269 = vmatpush1.xpose.msra.mxu0 0.0
        %1270 = vmatprep.mubr.f32.mxu0 0.0
        %1271 = vmatmul.mubr.f32.gmra.mrb[0].mxu0 %v1200
        %v1272 = vpop.f32.mrb[0].mxu0
        %v1273 = vadd.f32 0.0, %v1272
        %v1274 = vpop.f32.mrb[0].mxu0
        %1275 = vdwg.mxu0
        %v1276 = vmul.f32 %v1273, %v903
        %v1277 = vsel %vm821, %v1276, -inf
        %1278 = vmax.xlane.f32.xlu0 %v1277
        %v1279 = vpop.xlane.xlu0 %1278
        %v1280 = vsub.f32 %v1276, %v1279
        %v1281 = vmul.f32 %v1280, 1.442695
        %v1282 = vpow.pop %v1281
        %v1283 = vsel %vm821, %v1282, 0.0
        %1284 = vadd.xlane.f32.xlu0 %v1283
        %v1285 = vpop.xlane.xlu0 %1284
        %v1286 = vrcp.pop %v1285
        %v1287 = vmul.f32 %v1282, %v1286
        %s1288 = scalar_lea.vmem %s540, 8 [#allocation8]
        %1289 = vst.msk [vmem:[%s1288] sm:$0xff] %vm821, %v1287
        %1292 = vrot.lane.b32.xlu0 %v699, 112
        %v1293 = vpop.permute.xlu0 %1292
        %1294 = vrot.lane.b32.xlu0 %v705, 112
        %v1295 = vpop.permute.xlu0 %1294
        %v1299 = vsel %vm821, %v1287, 0
        %1301 = vmatprep.subr.mxu0 0.0
        %1302 = vmatpush1.msra.mxu0 %v1293
        %1303 = vmatprep.subr.mxu0 0.0
        %1304 = vmatpush1.msra.mxu0 %v1295
        %1305 = vmatprep.subr.mxu0 0.0
        %1306 = vmatpush1.msra.mxu0 0.0
        %1307 = vmatprep.subr.mxu0 0.0
        %1308 = vmatpush1.msra.mxu0 0.0
        %1309 = vmatprep.subr.mxu0 0.0
        %1310 = vmatpush1.msra.mxu0 0.0
        %1311 = vmatprep.subr.mxu0 0.0
        %1312 = vmatpush1.msra.mxu0 0.0
        %1313 = vmatprep.subr.mxu0 0.0
        %1314 = vmatpush1.msra.mxu0 0.0
        %1315 = vmatprep.subr.mxu0 0.0
        %1316 = vmatpush1.msra.mxu0 0.0
        %1317 = vmatprep.subr.mxu0 0.0
        %1318 = vmatpush1.msra.mxu0 0.0
        %1319 = vmatprep.subr.mxu0 0.0
        %1320 = vmatpush1.msra.mxu0 0.0
        %1321 = vmatprep.subr.mxu0 0.0
        %1322 = vmatpush1.msra.mxu0 0.0
        %1323 = vmatprep.subr.mxu0 0.0
        %1324 = vmatpush1.msra.mxu0 0.0
        %1325 = vmatprep.subr.mxu0 0.0
        %1326 = vmatpush1.msra.mxu0 0.0
        %1327 = vmatprep.subr.mxu0 0.0
        %1328 = vmatpush1.msra.mxu0 0.0
        %1329 = vmatprep.subr.mxu0 0.0
        %1330 = vmatpush1.msra.mxu0 0.0
        %1331 = vmatprep.subr.mxu0 0.0
        %1332 = vmatpush1.msra.mxu0 0.0
        %1333 = vmatprep.subr.mxu0 0.0
        %1334 = vmatpush1.msra.mxu0 0.0
        %1335 = vmatprep.subr.mxu0 0.0
        %1336 = vmatpush1.msra.mxu0 0.0
        %1337 = vmatprep.subr.mxu0 0.0
        %1338 = vmatpush1.msra.mxu0 0.0
        %1339 = vmatprep.subr.mxu0 0.0
        %1340 = vmatpush1.msra.mxu0 0.0
        %1341 = vmatprep.subr.mxu0 0.0
        %1342 = vmatpush1.msra.mxu0 0.0
        %1343 = vmatprep.subr.mxu0 0.0
        %1344 = vmatpush1.msra.mxu0 0.0
        %1345 = vmatprep.subr.mxu0 0.0
        %1346 = vmatpush1.msra.mxu0 0.0
        %1347 = vmatprep.subr.mxu0 0.0
        %1348 = vmatpush1.msra.mxu0 0.0
        %1349 = vmatprep.subr.mxu0 0.0
        %1350 = vmatpush1.msra.mxu0 0.0
        %1351 = vmatprep.subr.mxu0 0.0
        %1352 = vmatpush1.msra.mxu0 0.0
        %1353 = vmatprep.subr.mxu0 0.0
        %1354 = vmatpush1.msra.mxu0 0.0
        %1355 = vmatprep.subr.mxu0 0.0
        %1356 = vmatpush1.msra.mxu0 0.0
        %1357 = vmatprep.subr.mxu0 0.0
        %1358 = vmatpush1.msra.mxu0 0.0
        %1359 = vmatprep.subr.mxu0 0.0
        %1360 = vmatpush1.msra.mxu0 0.0
        %1361 = vmatprep.subr.mxu0 0.0
        %1362 = vmatpush1.msra.mxu0 0.0
        %1363 = vmatprep.subr.mxu0 0.0
        %1364 = vmatpush1.msra.mxu0 0.0
        %1365 = vmatprep.mubr.f32.mxu0 0.0
        %1366 = vmatmul.mubr.f32.gmra.mrb[0].mxu0 %v1299
        %v1367 = vpop.f32.mrb[0].mxu0
        %v1368 = vadd.f32 0.0, %v1367
        %v1369 = vpop.f32.mrb[0].mxu0
        %1370 = vdwg.mxu0
        %1372 = vrot.lane.b32.xlu0 %v1368, 16
        %v1373 = vpop.permute.xlu0 %1372
        %vm1375 = vcmask 261248
        %1376 = vst.msk [vmem:[#allocation2] sm:$0xff] %vm1375, %v1373
        %1377 = vrot.lane.b32.xlu0 %v812, 112
        %v1378 = vpop.permute.xlu0 %1377
        %1379 = vrot.lane.b32.xlu0 %v813, 112
        %v1380 = vpop.permute.xlu0 %1379
        %1381 = vrot.lane.b32.xlu0 %v805, 48
        %v1382 = vpop.permute.xlu0 %1381
        %v1383 = vsel %vm821, %v1378, 0
        %v1385 = vsel %vm821, %v1380, 0
        %v1387 = vsel %vm821, %v1382, 0
        %1389 = vmatprep.subr.mxu0 0.0
        %1390 = vmatpush1.xpose.msra.mxu0 %v1387
        %1391 = vmatprep.subr.mxu0 0.0
        %1392 = vmatpush1.xpose.msra.mxu0 0.0
        %1393 = vmatprep.subr.mxu0 0.0
        %1394 = vmatpush1.xpose.msra.mxu0 0.0
        %1395 = vmatprep.subr.mxu0 0.0
        %1396 = vmatpush1.xpose.msra.mxu0 0.0
        %1397 = vmatprep.subr.mxu0 0.0
        %1398 = vmatpush1.xpose.msra.mxu0 0.0
        %1399 = vmatprep.subr.mxu0 0.0
        %1400 = vmatpush1.xpose.msra.mxu0 0.0
        %1401 = vmatprep.subr.mxu0 0.0
        %1402 = vmatpush1.xpose.msra.mxu0 0.0
        %1403 = vmatprep.subr.mxu0 0.0
        %1404 = vmatpush1.xpose.msra.mxu0 0.0
        %1405 = vmatprep.subr.mxu0 0.0
        %1406 = vmatpush1.xpose.msra.mxu0 0.0
        %1407 = vmatprep.subr.mxu0 0.0
        %1408 = vmatpush1.xpose.msra.mxu0 0.0
        %1409 = vmatprep.subr.mxu0 0.0
        %1410 = vmatpush1.xpose.msra.mxu0 0.0
        %1411 = vmatprep.subr.mxu0 0.0
        %1412 = vmatpush1.xpose.msra.mxu0 0.0
        %1413 = vmatprep.subr.mxu0 0.0
        %1414 = vmatpush1.xpose.msra.mxu0 0.0
        %1415 = vmatprep.subr.mxu0 0.0
        %1416 = vmatpush1.xpose.msra.mxu0 0.0
        %1417 = vmatprep.subr.mxu0 0.0
        %1418 = vmatpush1.xpose.msra.mxu0 0.0
        %1419 = vmatprep.subr.mxu0 0.0
        %1420 = vmatpush1.xpose.msra.mxu0 0.0
        %1421 = vmatprep.subr.mxu0 0.0
        %1422 = vmatpush1.xpose.msra.mxu0 0.0
        %1423 = vmatprep.subr.mxu0 0.0
        %1424 = vmatpush1.xpose.msra.mxu0 0.0
        %1425 = vmatprep.subr.mxu0 0.0
        %1426 = vmatpush1.xpose.msra.mxu0 0.0
        %1427 = vmatprep.subr.mxu0 0.0
        %1428 = vmatpush1.xpose.msra.mxu0 0.0
        %1429 = vmatprep.subr.mxu0 0.0
        %1430 = vmatpush1.xpose.msra.mxu0 0.0
        %1431 = vmatprep.subr.mxu0 0.0
        %1432 = vmatpush1.xpose.msra.mxu0 0.0
        %1433 = vmatprep.subr.mxu0 0.0
        %1434 = vmatpush1.xpose.msra.mxu0 0.0
        %1435 = vmatprep.subr.mxu0 0.0
        %1436 = vmatpush1.xpose.msra.mxu0 0.0
        %1437 = vmatprep.subr.mxu0 0.0
        %1438 = vmatpush1.xpose.msra.mxu0 0.0
        %1439 = vmatprep.subr.mxu0 0.0
        %1440 = vmatpush1.xpose.msra.mxu0 0.0
        %1441 = vmatprep.subr.mxu0 0.0
        %1442 = vmatpush1.xpose.msra.mxu0 0.0
        %1443 = vmatprep.subr.mxu0 0.0
        %1444 = vmatpush1.xpose.msra.mxu0 0.0
        %1445 = vmatprep.subr.mxu0 0.0
        %1446 = vmatpush1.xpose.msra.mxu0 0.0
        %1447 = vmatprep.subr.mxu0 0.0
        %1448 = vmatpush1.xpose.msra.mxu0 0.0
        %1449 = vmatprep.subr.mxu0 0.0
        %1450 = vmatpush1.xpose.msra.mxu0 0.0
        %1451 = vmatprep.subr.mxu0 0.0
        %1452 = vmatpush1.xpose.msra.mxu0 0.0
        %1453 = vmatprep.mubr.f32.mxu0 0.0
        %1454 = vmatmul.mubr.f32.gmra.mrb[0].mxu0 %v1383
        %v1455 = vpop.f32.mrb[0].mxu0
        %v1456 = vadd.f32 0.0, %v1455
        %v1457 = vpop.f32.mrb[0].mxu0
        %1458 = vmatprep.mubr.f32.mxu0 0.0
        %1459 = vmatmul.mubr.f32.gmra.mrb[0].mxu0 %v1385
        %v1460 = vpop.f32.mrb[0].mxu0
        %v1461 = vadd.f32 0.0, %v1460
        %v1462 = vpop.f32.mrb[0].mxu0
        %1463 = vdwg.mxu0
        %v1464 = vmul.f32 %v1456, %v1082
        %v1465 = vmul.f32 %v1461, %v1082
        %v1466 = vsel %vm1086, %v1464, -inf
        %1467 = vmax.xlane.f32.xlu0 %v1466
        %v1468 = vpop.xlane.xlu0 %1467
        %v1469 = vsel %vm1086, %v1465, -inf
        %1470 = vmax.xlane.f32.xlu0 %v1469
        %v1471 = vpop.xlane.xlu0 %1470
        %v1472 = vsub.f32 %v1464, %v1468
        %v1473 = vsub.f32 %v1465, %v1471
        %v1474 = vmul.f32 %v1472, 1.442695
        %v1475 = vpow.pop %v1474
        %v1476 = vmul.f32 %v1473, 1.442695
        %v1477 = vpow.pop %v1476
        %v1478 = vsel %vm1086, %v1475, 0.0
        %1479 = vadd.xlane.f32.xlu0 %v1478
        %v1480 = vpop.xlane.xlu0 %1479
        %v1481 = vsel %vm1086, %v1477, 0.0
        %1482 = vadd.xlane.f32.xlu0 %v1481
        %v1483 = vpop.xlane.xlu0 %1482
        %v1484 = vrcp.pop %v1480
        %v1485 = vrcp.pop %v1483
        %v1486 = vmul.f32 %v1475, %v1484
        %v1487 = vmul.f32 %v1477, %v1485
        %s1488 = scalar_lea.vmem %s580, 16
        %1489 = vst.msk [vmem:[%s1488] sm:$0xff] %vm1086, %v1486
        %1490 = vst.msk [vmem:[%s1488 + $0x8] sm:$0xff] %vm1086, %v1487
        %1492 = vrot.lane.b32.xlu0 %v807, 112
        %v1493 = vpop.permute.xlu0 %1492
        %v1496 = vsel %vm1086, %v1486, 0
        %v1499 = vsel %vm1086, %v1487, 0
        %1501 = vmatprep.subr.mxu0 0.0
        %1502 = vmatpush1.msra.mxu0 %v1493
        %1503 = vmatprep.subr.mxu0 0.0
        %1504 = vmatpush1.msra.mxu0 0.0
        %1505 = vmatprep.subr.mxu0 0.0
        %1506 = vmatpush1.msra.mxu0 0.0
        %1507 = vmatprep.subr.mxu0 0.0
        %1508 = vmatpush1.msra.mxu0 0.0
        %1509 = vmatprep.subr.mxu0 0.0
        %1510 = vmatpush1.msra.mxu0 0.0
        %1511 = vmatprep.subr.mxu0 0.0
        %1512 = vmatpush1.msra.mxu0 0.0
        %1513 = vmatprep.subr.mxu0 0.0
        %1514 = vmatpush1.msra.mxu0 0.0
        %1515 = vmatprep.subr.mxu0 0.0
        %1516 = vmatpush1.msra.mxu0 0.0
        %1517 = vmatprep.subr.mxu0 0.0
        %1518 = vmatpush1.msra.mxu0 0.0
        %1519 = vmatprep.subr.mxu0 0.0
        %1520 = vmatpush1.msra.mxu0 0.0
        %1521 = vmatprep.subr.mxu0 0.0
        %1522 = vmatpush1.msra.mxu0 0.0
        %1523 = vmatprep.subr.mxu0 0.0
        %1524 = vmatpush1.msra.mxu0 0.0
        %1525 = vmatprep.subr.mxu0 0.0
        %1526 = vmatpush1.msra.mxu0 0.0
        %1527 = vmatprep.subr.mxu0 0.0
        %1528 = vmatpush1.msra.mxu0 0.0
        %1529 = vmatprep.subr.mxu0 0.0
        %1530 = vmatpush1.msra.mxu0 0.0
        %1531 = vmatprep.subr.mxu0 0.0
        %1532 = vmatpush1.msra.mxu0 0.0
        %1533 = vmatprep.subr.mxu0 0.0
        %1534 = vmatpush1.msra.mxu0 0.0
        %1535 = vmatprep.subr.mxu0 0.0
        %1536 = vmatpush1.msra.mxu0 0.0
        %1537 = vmatprep.subr.mxu0 0.0
        %1538 = vmatpush1.msra.mxu0 0.0
        %1539 = vmatprep.subr.mxu0 0.0
        %1540 = vmatpush1.msra.mxu0 0.0
        %1541 = vmatprep.subr.mxu0 0.0
        %1542 = vmatpush1.msra.mxu0 0.0
        %1543 = vmatprep.subr.mxu0 0.0
        %1544 = vmatpush1.msra.mxu0 0.0
        %1545 = vmatprep.subr.mxu0 0.0
        %1546 = vmatpush1.msra.mxu0 0.0
        %1547 = vmatprep.subr.mxu0 0.0
        %1548 = vmatpush1.msra.mxu0 0.0
        %1549 = vmatprep.subr.mxu0 0.0
        %1550 = vmatpush1.msra.mxu0 0.0
        %1551 = vmatprep.subr.mxu0 0.0
        %1552 = vmatpush1.msra.mxu0 0.0
        %1553 = vmatprep.subr.mxu0 0.0
        %1554 = vmatpush1.msra.mxu0 0.0
        %1555 = vmatprep.subr.mxu0 0.0
        %1556 = vmatpush1.msra.mxu0 0.0
        %1557 = vmatprep.subr.mxu0 0.0
        %1558 = vmatpush1.msra.mxu0 0.0
        %1559 = vmatprep.subr.mxu0 0.0
        %1560 = vmatpush1.msra.mxu0 0.0
        %1561 = vmatprep.subr.mxu0 0.0
        %1562 = vmatpush1.msra.mxu0 0.0
        %1563 = vmatprep.subr.mxu0 0.0
        %1564 = vmatpush1.msra.mxu0 0.0
        %1565 = vmatprep.mubr.f32.mxu0 0.0
        %1566 = vmatmul.mubr.f32.gmra.mrb[0].mxu0 %v1496
        %v1567 = vpop.f32.mrb[0].mxu0
        %v1568 = vadd.f32 0.0, %v1567
        %v1569 = vpop.f32.mrb[0].mxu0
        %1570 = vmatprep.mubr.f32.mxu0 0.0
        %1571 = vmatmul.mubr.f32.gmra.mrb[0].mxu0 %v1499
        %v1572 = vpop.f32.mrb[0].mxu0
        %v1573 = vadd.f32 0.0, %v1572
        %v1574 = vpop.f32.mrb[0].mxu0
        %1575 = vdwg.mxu0
        %1578 = vrot.lane.b32.xlu0 %v1568, 16
        %v1579 = vpop.permute.xlu0 %1578
        %1580 = vrot.lane.b32.xlu0 %v1573, 16
        %v1581 = vpop.permute.xlu0 %1580
        %1584 = vst.msk [vmem:[#allocation3] sm:$0xff] %vm1375, %v1579
        %1585 = vst.msk [vmem:[#allocation3 + $0x8] sm:$0xff] %vm1375, %v1581
        %1586 = vrot.lane.b32.xlu0 %v814, 96
        %v1587 = vpop.permute.xlu0 %1586
        %1588 = vrot.lane.b32.xlu0 %v697, 32
        %v1589 = vpop.permute.xlu0 %1588
        %1590 = vrot.lane.b32.xlu0 %v703, 32
        %v1591 = vpop.permute.xlu0 %1590
        %v1592 = vsel %vm821, %v1587, 0
        %v1594 = vsel %vm821, %v1589, 0
        %v1596 = vsel %vm821, %v1591, 0
        %1598 = vmatprep.subr.mxu0 0.0
        %1599 = vmatpush1.xpose.msra.mxu0 %v1594
        %1600 = vmatprep.subr.mxu0 0.0
        %1601 = vmatpush1.xpose.msra.mxu0 %v1596
        %1602 = vmatprep.subr.mxu0 0.0
        %1603 = vmatpush1.xpose.msra.mxu0 0.0
        %1604 = vmatprep.subr.mxu0 0.0
        %1605 = vmatpush1.xpose.msra.mxu0 0.0
        %1606 = vmatprep.subr.mxu0 0.0
        %1607 = vmatpush1.xpose.msra.mxu0 0.0
        %1608 = vmatprep.subr.mxu0 0.0
        %1609 = vmatpush1.xpose.msra.mxu0 0.0
        %1610 = vmatprep.subr.mxu0 0.0
        %1611 = vmatpush1.xpose.msra.mxu0 0.0
        %1612 = vmatprep.subr.mxu0 0.0
        %1613 = vmatpush1.xpose.msra.mxu0 0.0
        %1614 = vmatprep.subr.mxu0 0.0
        %1615 = vmatpush1.xpose.msra.mxu0 0.0
        %1616 = vmatprep.subr.mxu0 0.0
        %1617 = vmatpush1.xpose.msra.mxu0 0.0
        %1618 = vmatprep.subr.mxu0 0.0
        %1619 = vmatpush1.xpose.msra.mxu0 0.0
        %1620 = vmatprep.subr.mxu0 0.0
        %1621 = vmatpush1.xpose.msra.mxu0 0.0
        %1622 = vmatprep.subr.mxu0 0.0
        %1623 = vmatpush1.xpose.msra.mxu0 0.0
        %1624 = vmatprep.subr.mxu0 0.0
        %1625 = vmatpush1.xpose.msra.mxu0 0.0
        %1626 = vmatprep.subr.mxu0 0.0
        %1627 = vmatpush1.xpose.msra.mxu0 0.0
        %1628 = vmatprep.subr.mxu0 0.0
        %1629 = vmatpush1.xpose.msra.mxu0 0.0
        %1630 = vmatprep.subr.mxu0 0.0
        %1631 = vmatpush1.xpose.msra.mxu0 0.0
        %1632 = vmatprep.subr.mxu0 0.0
        %1633 = vmatpush1.xpose.msra.mxu0 0.0
        %1634 = vmatprep.subr.mxu0 0.0
        %1635 = vmatpush1.xpose.msra.mxu0 0.0
        %1636 = vmatprep.subr.mxu0 0.0
        %1637 = vmatpush1.xpose.msra.mxu0 0.0
        %1638 = vmatprep.subr.mxu0 0.0
        %1639 = vmatpush1.xpose.msra.mxu0 0.0
        %1640 = vmatprep.subr.mxu0 0.0
        %1641 = vmatpush1.xpose.msra.mxu0 0.0
        %1642 = vmatprep.subr.mxu0 0.0
        %1643 = vmatpush1.xpose.msra.mxu0 0.0
        %1644 = vmatprep.subr.mxu0 0.0
        %1645 = vmatpush1.xpose.msra.mxu0 0.0
        %1646 = vmatprep.subr.mxu0 0.0
        %1647 = vmatpush1.xpose.msra.mxu0 0.0
        %1648 = vmatprep.subr.mxu0 0.0
        %1649 = vmatpush1.xpose.msra.mxu0 0.0
        %1650 = vmatprep.subr.mxu0 0.0
        %1651 = vmatpush1.xpose.msra.mxu0 0.0
        %1652 = vmatprep.subr.mxu0 0.0
        %1653 = vmatpush1.xpose.msra.mxu0 0.0
        %1654 = vmatprep.subr.mxu0 0.0
        %1655 = vmatpush1.xpose.msra.mxu0 0.0
        %1656 = vmatprep.subr.mxu0 0.0
        %1657 = vmatpush1.xpose.msra.mxu0 0.0
        %1658 = vmatprep.subr.mxu0 0.0
        %1659 = vmatpush1.xpose.msra.mxu0 0.0
        %1660 = vmatprep.subr.mxu0 0.0
        %1661 = vmatpush1.xpose.msra.mxu0 0.0
        %1662 = vmatprep.mubr.f32.mxu0 0.0
        %1663 = vmatmul.mubr.f32.gmra.mrb[0].mxu0 %v1592
        %v1664 = vpop.f32.mrb[0].mxu0
        %v1665 = vadd.f32 0.0, %v1664
        %v1666 = vpop.f32.mrb[0].mxu0
        %1667 = vdwg.mxu0
        %v1668 = vmul.f32 %v1665, %v903
        %v1669 = vsel %vm821, %v1668, -inf
        %1670 = vmax.xlane.f32.xlu0 %v1669
        %v1671 = vpop.xlane.xlu0 %1670
        %v1672 = vsub.f32 %v1668, %v1671
        %v1673 = vmul.f32 %v1672, 1.442695
        %v1674 = vpow.pop %v1673
        %v1675 = vsel %vm821, %v1674, 0.0
        %1676 = vadd.xlane.f32.xlu0 %v1675
        %v1677 = vpop.xlane.xlu0 %1676
        %v1678 = vrcp.pop %v1677
        %v1679 = vmul.f32 %v1674, %v1678
        %s1680 = scalar_lea.vmem %s540, 16 [#allocation8]
        %1681 = vst.msk [vmem:[%s1680] sm:$0xff] %vm821, %v1679
        %1682 = vrot.lane.b32.xlu0 %v699, 96
        %v1683 = vpop.permute.xlu0 %1682
        %1684 = vrot.lane.b32.xlu0 %v705, 96
        %v1685 = vpop.permute.xlu0 %1684
        %v1689 = vsel %vm821, %v1679, 0
        %1691 = vmatprep.subr.mxu0 0.0
        %1692 = vmatpush1.msra.mxu0 %v1683
        %1693 = vmatprep.subr.mxu0 0.0
        %1694 = vmatpush1.msra.mxu0 %v1685
        %1695 = vmatprep.subr.mxu0 0.0
        %1696 = vmatpush1.msra.mxu0 0.0
        %1697 = vmatprep.subr.mxu0 0.0
        %1698 = vmatpush1.msra.mxu0 0.0
        %1699 = vmatprep.subr.mxu0 0.0
        %1700 = vmatpush1.msra.mxu0 0.0
        %1701 = vmatprep.subr.mxu0 0.0
        %1702 = vmatpush1.msra.mxu0 0.0
        %1703 = vmatprep.subr.mxu0 0.0
        %1704 = vmatpush1.msra.mxu0 0.0
        %1705 = vmatprep.subr.mxu0 0.0
        %1706 = vmatpush1.msra.mxu0 0.0
        %1707 = vmatprep.subr.mxu0 0.0
        %1708 = vmatpush1.msra.mxu0 0.0
        %1709 = vmatprep.subr.mxu0 0.0
        %1710 = vmatpush1.msra.mxu0 0.0
        %1711 = vmatprep.subr.mxu0 0.0
        %1712 = vmatpush1.msra.mxu0 0.0
        %1713 = vmatprep.subr.mxu0 0.0
        %1714 = vmatpush1.msra.mxu0 0.0
        %1715 = vmatprep.subr.mxu0 0.0
        %1716 = vmatpush1.msra.mxu0 0.0
        %1717 = vmatprep.subr.mxu0 0.0
        %1718 = vmatpush1.msra.mxu0 0.0
        %1719 = vmatprep.subr.mxu0 0.0
        %1720 = vmatpush1.msra.mxu0 0.0
        %1721 = vmatprep.subr.mxu0 0.0
        %1722 = vmatpush1.msra.mxu0 0.0
        %1723 = vmatprep.subr.mxu0 0.0
        %1724 = vmatpush1.msra.mxu0 0.0
        %1725 = vmatprep.subr.mxu0 0.0
        %1726 = vmatpush1.msra.mxu0 0.0
        %1727 = vmatprep.subr.mxu0 0.0
        %1728 = vmatpush1.msra.mxu0 0.0
        %1729 = vmatprep.subr.mxu0 0.0
        %1730 = vmatpush1.msra.mxu0 0.0
        %1731 = vmatprep.subr.mxu0 0.0
        %1732 = vmatpush1.msra.mxu0 0.0
        %1733 = vmatprep.subr.mxu0 0.0
        %1734 = vmatpush1.msra.mxu0 0.0
        %1735 = vmatprep.subr.mxu0 0.0
        %1736 = vmatpush1.msra.mxu0 0.0
        %1737 = vmatprep.subr.mxu0 0.0
        %1738 = vmatpush1.msra.mxu0 0.0
        %1739 = vmatprep.subr.mxu0 0.0
        %1740 = vmatpush1.msra.mxu0 0.0
        %1741 = vmatprep.subr.mxu0 0.0
        %1742 = vmatpush1.msra.mxu0 0.0
        %1743 = vmatprep.subr.mxu0 0.0
        %1744 = vmatpush1.msra.mxu0 0.0
        %1745 = vmatprep.subr.mxu0 0.0
        %1746 = vmatpush1.msra.mxu0 0.0
        %1747 = vmatprep.subr.mxu0 0.0
        %1748 = vmatpush1.msra.mxu0 0.0
        %1749 = vmatprep.subr.mxu0 0.0
        %1750 = vmatpush1.msra.mxu0 0.0
        %1751 = vmatprep.subr.mxu0 0.0
        %1752 = vmatpush1.msra.mxu0 0.0
        %1753 = vmatprep.subr.mxu0 0.0
        %1754 = vmatpush1.msra.mxu0 0.0
        %1755 = vmatprep.mubr.f32.mxu0 0.0
        %1756 = vmatmul.mubr.f32.gmra.mrb[0].mxu0 %v1689
        %v1757 = vpop.f32.mrb[0].mxu0
        %v1758 = vadd.f32 0.0, %v1757
        %v1759 = vpop.f32.mrb[0].mxu0
        %1760 = vdwg.mxu0
        %1762 = vrot.lane.b32.xlu0 %v1758, 32
        %v1763 = vpop.permute.xlu0 %1762
        %vm1765 = vcmask 392448
        %1766 = vst.msk [vmem:[#allocation2] sm:$0xff] %vm1765, %v1763
        %1767 = vrot.lane.b32.xlu0 %v812, 96
        %v1768 = vpop.permute.xlu0 %1767
        %1769 = vrot.lane.b32.xlu0 %v813, 96
        %v1770 = vpop.permute.xlu0 %1769
        %1771 = vrot.lane.b32.xlu0 %v805, 32
        %v1772 = vpop.permute.xlu0 %1771
        %v1773 = vsel %vm821, %v1768, 0
        %v1775 = vsel %vm821, %v1770, 0
        %v1777 = vsel %vm821, %v1772, 0
        %1779 = vmatprep.subr.mxu0 0.0
        %1780 = vmatpush1.xpose.msra.mxu0 %v1777
        %1781 = vmatprep.subr.mxu0 0.0
        %1782 = vmatpush1.xpose.msra.mxu0 0.0
        %1783 = vmatprep.subr.mxu0 0.0
        %1784 = vmatpush1.xpose.msra.mxu0 0.0
        %1785 = vmatprep.subr.mxu0 0.0
        %1786 = vmatpush1.xpose.msra.mxu0 0.0
        %1787 = vmatprep.subr.mxu0 0.0
        %1788 = vmatpush1.xpose.msra.mxu0 0.0
        %1789 = vmatprep.subr.mxu0 0.0
        %1790 = vmatpush1.xpose.msra.mxu0 0.0
        %1791 = vmatprep.subr.mxu0 0.0
        %1792 = vmatpush1.xpose.msra.mxu0 0.0
        %1793 = vmatprep.subr.mxu0 0.0
        %1794 = vmatpush1.xpose.msra.mxu0 0.0
        %1795 = vmatprep.subr.mxu0 0.0
        %1796 = vmatpush1.xpose.msra.mxu0 0.0
        %1797 = vmatprep.subr.mxu0 0.0
        %1798 = vmatpush1.xpose.msra.mxu0 0.0
        %1799 = vmatprep.subr.mxu0 0.0
        %1800 = vmatpush1.xpose.msra.mxu0 0.0
        %1801 = vmatprep.subr.mxu0 0.0
        %1802 = vmatpush1.xpose.msra.mxu0 0.0
        %1803 = vmatprep.subr.mxu0 0.0
        %1804 = vmatpush1.xpose.msra.mxu0 0.0
        %1805 = vmatprep.subr.mxu0 0.0
        %1806 = vmatpush1.xpose.msra.mxu0 0.0
        %1807 = vmatprep.subr.mxu0 0.0
        %1808 = vmatpush1.xpose.msra.mxu0 0.0
        %1809 = vmatprep.subr.mxu0 0.0
        %1810 = vmatpush1.xpose.msra.mxu0 0.0
        %1811 = vmatprep.subr.mxu0 0.0
        %1812 = vmatpush1.xpose.msra.mxu0 0.0
        %1813 = vmatprep.subr.mxu0 0.0
        %1814 = vmatpush1.xpose.msra.mxu0 0.0
        %1815 = vmatprep.subr.mxu0 0.0
        %1816 = vmatpush1.xpose.msra.mxu0 0.0
        %1817 = vmatprep.subr.mxu0 0.0
        %1818 = vmatpush1.xpose.msra.mxu0 0.0
        %1819 = vmatprep.subr.mxu0 0.0
        %1820 = vmatpush1.xpose.msra.mxu0 0.0
        %1821 = vmatprep.subr.mxu0 0.0
        %1822 = vmatpush1.xpose.msra.mxu0 0.0
        %1823 = vmatprep.subr.mxu0 0.0
        %1824 = vmatpush1.xpose.msra.mxu0 0.0
        %1825 = vmatprep.subr.mxu0 0.0
        %1826 = vmatpush1.xpose.msra.mxu0 0.0
        %1827 = vmatprep.subr.mxu0 0.0
        %1828 = vmatpush1.xpose.msra.mxu0 0.0
        %1829 = vmatprep.subr.mxu0 0.0
        %1830 = vmatpush1.xpose.msra.mxu0 0.0
        %1831 = vmatprep.subr.mxu0 0.0
        %1832 = vmatpush1.xpose.msra.mxu0 0.0
        %1833 = vmatprep.subr.mxu0 0.0
        %1834 = vmatpush1.xpose.msra.mxu0 0.0
        %1835 = vmatprep.subr.mxu0 0.0
        %1836 = vmatpush1.xpose.msra.mxu0 0.0
        %1837 = vmatprep.subr.mxu0 0.0
        %1838 = vmatpush1.xpose.msra.mxu0 0.0
        %1839 = vmatprep.subr.mxu0 0.0
        %1840 = vmatpush1.xpose.msra.mxu0 0.0
        %1841 = vmatprep.subr.mxu0 0.0
        %1842 = vmatpush1.xpose.msra.mxu0 0.0
        %1843 = vmatprep.mubr.f32.mxu0 0.0
        %1844 = vmatmul.mubr.f32.gmra.mrb[0].mxu0 %v1773
        %v1845 = vpop.f32.mrb[0].mxu0
        %v1846 = vadd.f32 0.0, %v1845
        %v1847 = vpop.f32.mrb[0].mxu0
        %1848 = vmatprep.mubr.f32.mxu0 0.0
        %1849 = vmatmul.mubr.f32.gmra.mrb[0].mxu0 %v1775
        %v1850 = vpop.f32.mrb[0].mxu0
        %v1851 = vadd.f32 0.0, %v1850
        %v1852 = vpop.f32.mrb[0].mxu0
        %1853 = vdwg.mxu0
        %v1854 = vmul.f32 %v1846, %v1082
        %v1855 = vmul.f32 %v1851, %v1082
        %v1856 = vsel %vm1086, %v1854, -inf
        %1857 = vmax.xlane.f32.xlu0 %v1856
        %v1858 = vpop.xlane.xlu0 %1857
        %v1859 = vsel %vm1086, %v1855, -inf
        %1860 = vmax.xlane.f32.xlu0 %v1859
        %v1861 = vpop.xlane.xlu0 %1860
        %v1862 = vsub.f32 %v1854, %v1858
        %v1863 = vsub.f32 %v1855, %v1861
        %v1864 = vmul.f32 %v1862, 1.442695
        %v1865 = vpow.pop %v1864
        %v1866 = vmul.f32 %v1863, 1.442695
        %v1867 = vpow.pop %v1866
        %v1868 = vsel %vm1086, %v1865, 0.0
        %1869 = vadd.xlane.f32.xlu0 %v1868
        %v1870 = vpop.xlane.xlu0 %1869
        %v1871 = vsel %vm1086, %v1867, 0.0
        %1872 = vadd.xlane.f32.xlu0 %v1871
        %v1873 = vpop.xlane.xlu0 %1872
        %v1874 = vrcp.pop %v1870
        %v1875 = vrcp.pop %v1873
        %v1876 = vmul.f32 %v1865, %v1874
        %v1877 = vmul.f32 %v1867, %v1875
        %s1878 = scalar_lea.vmem %s580, 32
        %1879 = vst.msk [vmem:[%s1878] sm:$0xff] %vm1086, %v1876
        %1880 = vst.msk [vmem:[%s1878 + $0x8] sm:$0xff] %vm1086, %v1877
        %1881 = vrot.lane.b32.xlu0 %v807, 96
        %v1882 = vpop.permute.xlu0 %1881
        %v1885 = vsel %vm1086, %v1876, 0
        %v1888 = vsel %vm1086, %v1877, 0
        %1890 = vmatprep.subr.mxu0 0.0
        %1891 = vmatpush1.msra.mxu0 %v1882
        %1892 = vmatprep.subr.mxu0 0.0
        %1893 = vmatpush1.msra.mxu0 0.0
        %1894 = vmatprep.subr.mxu0 0.0
        %1895 = vmatpush1.msra.mxu0 0.0
        %1896 = vmatprep.subr.mxu0 0.0
        %1897 = vmatpush1.msra.mxu0 0.0
        %1898 = vmatprep.subr.mxu0 0.0
        %1899 = vmatpush1.msra.mxu0 0.0
        %1900 = vmatprep.subr.mxu0 0.0
        %1901 = vmatpush1.msra.mxu0 0.0
        %1902 = vmatprep.subr.mxu0 0.0
        %1903 = vmatpush1.msra.mxu0 0.0
        %1904 = vmatprep.subr.mxu0 0.0
        %1905 = vmatpush1.msra.mxu0 0.0
        %1906 = vmatprep.subr.mxu0 0.0
        %1907 = vmatpush1.msra.mxu0 0.0
        %1908 = vmatprep.subr.mxu0 0.0
        %1909 = vmatpush1.msra.mxu0 0.0
        %1910 = vmatprep.subr.mxu0 0.0
        %1911 = vmatpush1.msra.mxu0 0.0
        %1912 = vmatprep.subr.mxu0 0.0
        %1913 = vmatpush1.msra.mxu0 0.0
        %1914 = vmatprep.subr.mxu0 0.0
        %1915 = vmatpush1.msra.mxu0 0.0
        %1916 = vmatprep.subr.mxu0 0.0
        %1917 = vmatpush1.msra.mxu0 0.0
        %1918 = vmatprep.subr.mxu0 0.0
        %1919 = vmatpush1.msra.mxu0 0.0
        %1920 = vmatprep.subr.mxu0 0.0
        %1921 = vmatpush1.msra.mxu0 0.0
        %1922 = vmatprep.subr.mxu0 0.0
        %1923 = vmatpush1.msra.mxu0 0.0
        %1924 = vmatprep.subr.mxu0 0.0
        %1925 = vmatpush1.msra.mxu0 0.0
        %1926 = vmatprep.subr.mxu0 0.0
        %1927 = vmatpush1.msra.mxu0 0.0
        %1928 = vmatprep.subr.mxu0 0.0
        %1929 = vmatpush1.msra.mxu0 0.0
        %1930 = vmatprep.subr.mxu0 0.0
        %1931 = vmatpush1.msra.mxu0 0.0
        %1932 = vmatprep.subr.mxu0 0.0
        %1933 = vmatpush1.msra.mxu0 0.0
        %1934 = vmatprep.subr.mxu0 0.0
        %1935 = vmatpush1.msra.mxu0 0.0
        %1936 = vmatprep.subr.mxu0 0.0
        %1937 = vmatpush1.msra.mxu0 0.0
        %1938 = vmatprep.subr.mxu0 0.0
        %1939 = vmatpush1.msra.mxu0 0.0
        %1940 = vmatprep.subr.mxu0 0.0
        %1941 = vmatpush1.msra.mxu0 0.0
        %1942 = vmatprep.subr.mxu0 0.0
        %1943 = vmatpush1.msra.mxu0 0.0
        %1944 = vmatprep.subr.mxu0 0.0
        %1945 = vmatpush1.msra.mxu0 0.0
        %1946 = vmatprep.subr.mxu0 0.0
        %1947 = vmatpush1.msra.mxu0 0.0
        %1948 = vmatprep.subr.mxu0 0.0
        %1949 = vmatpush1.msra.mxu0 0.0
        %1950 = vmatprep.subr.mxu0 0.0
        %1951 = vmatpush1.msra.mxu0 0.0
        %1952 = vmatprep.subr.mxu0 0.0
        %1953 = vmatpush1.msra.mxu0 0.0
        %1954 = vmatprep.mubr.f32.mxu0 0.0
        %1955 = vmatmul.mubr.f32.gmra.mrb[0].mxu0 %v1885
        %v1956 = vpop.f32.mrb[0].mxu0
        %v1957 = vadd.f32 0.0, %v1956
        %v1958 = vpop.f32.mrb[0].mxu0
        %1959 = vmatprep.mubr.f32.mxu0 0.0
        %1960 = vmatmul.mubr.f32.gmra.mrb[0].mxu0 %v1888
        %v1961 = vpop.f32.mrb[0].mxu0
        %v1962 = vadd.f32 0.0, %v1961
        %v1963 = vpop.f32.mrb[0].mxu0
        %1964 = vdwg.mxu0
        %1967 = vrot.lane.b32.xlu0 %v1957, 32
        %v1968 = vpop.permute.xlu0 %1967
        %1969 = vrot.lane.b32.xlu0 %v1962, 32
        %v1970 = vpop.permute.xlu0 %1969
        %1973 = vst.msk [vmem:[#allocation3] sm:$0xff] %vm1765, %v1968
        %1974 = vst.msk [vmem:[#allocation3 + $0x8] sm:$0xff] %vm1765, %v1970
        %1975 = vrot.lane.b32.xlu0 %v814, 80
        %v1976 = vpop.permute.xlu0 %1975
        %1977 = vrot.lane.b32.xlu0 %v697, 16
        %v1978 = vpop.permute.xlu0 %1977
        %1979 = vrot.lane.b32.xlu0 %v703, 16
        %v1980 = vpop.permute.xlu0 %1979
        %v1981 = vsel %vm821, %v1976, 0
        %v1983 = vsel %vm821, %v1978, 0
        %v1985 = vsel %vm821, %v1980, 0
        %1987 = vmatprep.subr.mxu0 0.0
        %1988 = vmatpush1.xpose.msra.mxu0 %v1983
        %1989 = vmatprep.subr.mxu0 0.0
        %1990 = vmatpush1.xpose.msra.mxu0 %v1985
        %1991 = vmatprep.subr.mxu0 0.0
        %1992 = vmatpush1.xpose.msra.mxu0 0.0
        %1993 = vmatprep.subr.mxu0 0.0
        %1994 = vmatpush1.xpose.msra.mxu0 0.0
        %1995 = vmatprep.subr.mxu0 0.0
        %1996 = vmatpush1.xpose.msra.mxu0 0.0
        %1997 = vmatprep.subr.mxu0 0.0
        %1998 = vmatpush1.xpose.msra.mxu0 0.0
        %1999 = vmatprep.subr.mxu0 0.0
        %2000 = vmatpush1.xpose.msra.mxu0 0.0
        %2001 = vmatprep.subr.mxu0 0.0
        %2002 = vmatpush1.xpose.msra.mxu0 0.0
        %2003 = vmatprep.subr.mxu0 0.0
        %2004 = vmatpush1.xpose.msra.mxu0 0.0
        %2005 = vmatprep.subr.mxu0 0.0
        %2006 = vmatpush1.xpose.msra.mxu0 0.0
        %2007 = vmatprep.subr.mxu0 0.0
        %2008 = vmatpush1.xpose.msra.mxu0 0.0
        %2009 = vmatprep.subr.mxu0 0.0
        %2010 = vmatpush1.xpose.msra.mxu0 0.0
        %2011 = vmatprep.subr.mxu0 0.0
        %2012 = vmatpush1.xpose.msra.mxu0 0.0
        %2013 = vmatprep.subr.mxu0 0.0
        %2014 = vmatpush1.xpose.msra.mxu0 0.0
        %2015 = vmatprep.subr.mxu0 0.0
        %2016 = vmatpush1.xpose.msra.mxu0 0.0
        %2017 = vmatprep.subr.mxu0 0.0
        %2018 = vmatpush1.xpose.msra.mxu0 0.0
        %2019 = vmatprep.subr.mxu0 0.0
        %2020 = vmatpush1.xpose.msra.mxu0 0.0
        %2021 = vmatprep.subr.mxu0 0.0
        %2022 = vmatpush1.xpose.msra.mxu0 0.0
        %2023 = vmatprep.subr.mxu0 0.0
        %2024 = vmatpush1.xpose.msra.mxu0 0.0
        %2025 = vmatprep.subr.mxu0 0.0
        %2026 = vmatpush1.xpose.msra.mxu0 0.0
        %2027 = vmatprep.subr.mxu0 0.0
        %2028 = vmatpush1.xpose.msra.mxu0 0.0
        %2029 = vmatprep.subr.mxu0 0.0
        %2030 = vmatpush1.xpose.msra.mxu0 0.0
        %2031 = vmatprep.subr.mxu0 0.0
        %2032 = vmatpush1.xpose.msra.mxu0 0.0
        %2033 = vmatprep.subr.mxu0 0.0
        %2034 = vmatpush1.xpose.msra.mxu0 0.0
        %2035 = vmatprep.subr.mxu0 0.0
        %2036 = vmatpush1.xpose.msra.mxu0 0.0
        %2037 = vmatprep.subr.mxu0 0.0
        %2038 = vmatpush1.xpose.msra.mxu0 0.0
        %2039 = vmatprep.subr.mxu0 0.0
        %2040 = vmatpush1.xpose.msra.mxu0 0.0
        %2041 = vmatprep.subr.mxu0 0.0
        %2042 = vmatpush1.xpose.msra.mxu0 0.0
        %2043 = vmatprep.subr.mxu0 0.0
        %2044 = vmatpush1.xpose.msra.mxu0 0.0
        %2045 = vmatprep.subr.mxu0 0.0
        %2046 = vmatpush1.xpose.msra.mxu0 0.0
        %2047 = vmatprep.subr.mxu0 0.0
        %2048 = vmatpush1.xpose.msra.mxu0 0.0
        %2049 = vmatprep.subr.mxu0 0.0
        %2050 = vmatpush1.xpose.msra.mxu0 0.0
        %2051 = vmatprep.mubr.f32.mxu0 0.0
        %2052 = vmatmul.mubr.f32.gmra.mrb[0].mxu0 %v1981
        %v2053 = vpop.f32.mrb[0].mxu0
        %v2054 = vadd.f32 0.0, %v2053
        %v2055 = vpop.f32.mrb[0].mxu0
        %2056 = vdwg.mxu0
        %v2057 = vmul.f32 %v2054, %v903
        %v2058 = vsel %vm821, %v2057, -inf
        %2059 = vmax.xlane.f32.xlu0 %v2058
        %v2060 = vpop.xlane.xlu0 %2059
        %v2061 = vsub.f32 %v2057, %v2060
        %v2062 = vmul.f32 %v2061, 1.442695
        %v2063 = vpow.pop %v2062
        %v2064 = vsel %vm821, %v2063, 0.0
        %2065 = vadd.xlane.f32.xlu0 %v2064
        %v2066 = vpop.xlane.xlu0 %2065
        %v2067 = vrcp.pop %v2066
        %v2068 = vmul.f32 %v2063, %v2067
        %s2069 = scalar_lea.vmem %s540, 24 [#allocation8]
        %2070 = vst.msk [vmem:[%s2069] sm:$0xff] %vm821, %v2068
        %2071 = vrot.lane.b32.xlu0 %v699, 80
        %v2072 = vpop.permute.xlu0 %2071
        %2073 = vrot.lane.b32.xlu0 %v705, 80
        %v2074 = vpop.permute.xlu0 %2073
        %v2078 = vsel %vm821, %v2068, 0
        %2080 = vmatprep.subr.mxu0 0.0
        %2081 = vmatpush1.msra.mxu0 %v2072
        %2082 = vmatprep.subr.mxu0 0.0
        %2083 = vmatpush1.msra.mxu0 %v2074
        %2084 = vmatprep.subr.mxu0 0.0
        %2085 = vmatpush1.msra.mxu0 0.0
        %2086 = vmatprep.subr.mxu0 0.0
        %2087 = vmatpush1.msra.mxu0 0.0
        %2088 = vmatprep.subr.mxu0 0.0
        %2089 = vmatpush1.msra.mxu0 0.0
        %2090 = vmatprep.subr.mxu0 0.0
        %2091 = vmatpush1.msra.mxu0 0.0
        %2092 = vmatprep.subr.mxu0 0.0
        %2093 = vmatpush1.msra.mxu0 0.0
        %2094 = vmatprep.subr.mxu0 0.0
        %2095 = vmatpush1.msra.mxu0 0.0
        %2096 = vmatprep.subr.mxu0 0.0
        %2097 = vmatpush1.msra.mxu0 0.0
        %2098 = vmatprep.subr.mxu0 0.0
        %2099 = vmatpush1.msra.mxu0 0.0
        %2100 = vmatprep.subr.mxu0 0.0
        %2101 = vmatpush1.msra.mxu0 0.0
        %2102 = vmatprep.subr.mxu0 0.0
        %2103 = vmatpush1.msra.mxu0 0.0
        %2104 = vmatprep.subr.mxu0 0.0
        %2105 = vmatpush1.msra.mxu0 0.0
        %2106 = vmatprep.subr.mxu0 0.0
        %2107 = vmatpush1.msra.mxu0 0.0
        %2108 = vmatprep.subr.mxu0 0.0
        %2109 = vmatpush1.msra.mxu0 0.0
        %2110 = vmatprep.subr.mxu0 0.0
        %2111 = vmatpush1.msra.mxu0 0.0
        %2112 = vmatprep.subr.mxu0 0.0
        %2113 = vmatpush1.msra.mxu0 0.0
        %2114 = vmatprep.subr.mxu0 0.0
        %2115 = vmatpush1.msra.mxu0 0.0
        %2116 = vmatprep.subr.mxu0 0.0
        %2117 = vmatpush1.msra.mxu0 0.0
        %2118 = vmatprep.subr.mxu0 0.0
        %2119 = vmatpush1.msra.mxu0 0.0
        %2120 = vmatprep.subr.mxu0 0.0
        %2121 = vmatpush1.msra.mxu0 0.0
        %2122 = vmatprep.subr.mxu0 0.0
        %2123 = vmatpush1.msra.mxu0 0.0
        %2124 = vmatprep.subr.mxu0 0.0
        %2125 = vmatpush1.msra.mxu0 0.0
        %2126 = vmatprep.subr.mxu0 0.0
        %2127 = vmatpush1.msra.mxu0 0.0
        %2128 = vmatprep.subr.mxu0 0.0
        %2129 = vmatpush1.msra.mxu0 0.0
        %2130 = vmatprep.subr.mxu0 0.0
        %2131 = vmatpush1.msra.mxu0 0.0
        %2132 = vmatprep.subr.mxu0 0.0
        %2133 = vmatpush1.msra.mxu0 0.0
        %2134 = vmatprep.subr.mxu0 0.0
        %2135 = vmatpush1.msra.mxu0 0.0
        %2136 = vmatprep.subr.mxu0 0.0
        %2137 = vmatpush1.msra.mxu0 0.0
        %2138 = vmatprep.subr.mxu0 0.0
        %2139 = vmatpush1.msra.mxu0 0.0
        %2140 = vmatprep.subr.mxu0 0.0
        %2141 = vmatpush1.msra.mxu0 0.0
        %2142 = vmatprep.subr.mxu0 0.0
        %2143 = vmatpush1.msra.mxu0 0.0
        %2144 = vmatprep.mubr.f32.mxu0 0.0
        %2145 = vmatmul.mubr.f32.gmra.mrb[0].mxu0 %v2078
        %v2146 = vpop.f32.mrb[0].mxu0
        %v2147 = vadd.f32 0.0, %v2146
        %v2148 = vpop.f32.mrb[0].mxu0
        %2149 = vdwg.mxu0
        %2151 = vrot.lane.b32.xlu0 %v2147, 48
        %v2152 = vpop.permute.xlu0 %2151
        %vm2154 = vcmask 523648
        %2155 = vst.msk [vmem:[#allocation2] sm:$0xff] %vm2154, %v2152
        %2156 = vrot.lane.b32.xlu0 %v812, 80
        %v2157 = vpop.permute.xlu0 %2156
        %2158 = vrot.lane.b32.xlu0 %v813, 80
        %v2159 = vpop.permute.xlu0 %2158
        %2160 = vrot.lane.b32.xlu0 %v805, 16
        %v2161 = vpop.permute.xlu0 %2160
        %v2162 = vsel %vm821, %v2157, 0
        %v2164 = vsel %vm821, %v2159, 0
        %v2166 = vsel %vm821, %v2161, 0
        %2168 = vmatprep.subr.mxu0 0.0
        %2169 = vmatpush1.xpose.msra.mxu0 %v2166
        %2170 = vmatprep.subr.mxu0 0.0
        %2171 = vmatpush1.xpose.msra.mxu0 0.0
        %2172 = vmatprep.subr.mxu0 0.0
        %2173 = vmatpush1.xpose.msra.mxu0 0.0
        %2174 = vmatprep.subr.mxu0 0.0
        %2175 = vmatpush1.xpose.msra.mxu0 0.0
        %2176 = vmatprep.subr.mxu0 0.0
        %2177 = vmatpush1.xpose.msra.mxu0 0.0
        %2178 = vmatprep.subr.mxu0 0.0
        %2179 = vmatpush1.xpose.msra.mxu0 0.0
        %2180 = vmatprep.subr.mxu0 0.0
        %2181 = vmatpush1.xpose.msra.mxu0 0.0
        %2182 = vmatprep.subr.mxu0 0.0
        %2183 = vmatpush1.xpose.msra.mxu0 0.0
        %2184 = vmatprep.subr.mxu0 0.0
        %2185 = vmatpush1.xpose.msra.mxu0 0.0
        %2186 = vmatprep.subr.mxu0 0.0
        %2187 = vmatpush1.xpose.msra.mxu0 0.0
        %2188 = vmatprep.subr.mxu0 0.0
        %2189 = vmatpush1.xpose.msra.mxu0 0.0
        %2190 = vmatprep.subr.mxu0 0.0
        %2191 = vmatpush1.xpose.msra.mxu0 0.0
        %2192 = vmatprep.subr.mxu0 0.0
        %2193 = vmatpush1.xpose.msra.mxu0 0.0
        %2194 = vmatprep.subr.mxu0 0.0
        %2195 = vmatpush1.xpose.msra.mxu0 0.0
        %2196 = vmatprep.subr.mxu0 0.0
        %2197 = vmatpush1.xpose.msra.mxu0 0.0
        %2198 = vmatprep.subr.mxu0 0.0
        %2199 = vmatpush1.xpose.msra.mxu0 0.0
        %2200 = vmatprep.subr.mxu0 0.0
        %2201 = vmatpush1.xpose.msra.mxu0 0.0
        %2202 = vmatprep.subr.mxu0 0.0
        %2203 = vmatpush1.xpose.msra.mxu0 0.0
        %2204 = vmatprep.subr.mxu0 0.0
        %2205 = vmatpush1.xpose.msra.mxu0 0.0
        %2206 = vmatprep.subr.mxu0 0.0
        %2207 = vmatpush1.xpose.msra.mxu0 0.0
        %2208 = vmatprep.subr.mxu0 0.0
        %2209 = vmatpush1.xpose.msra.mxu0 0.0
        %2210 = vmatprep.subr.mxu0 0.0
        %2211 = vmatpush1.xpose.msra.mxu0 0.0
        %2212 = vmatprep.subr.mxu0 0.0
        %2213 = vmatpush1.xpose.msra.mxu0 0.0
        %2214 = vmatprep.subr.mxu0 0.0
        %2215 = vmatpush1.xpose.msra.mxu0 0.0
        %2216 = vmatprep.subr.mxu0 0.0
        %2217 = vmatpush1.xpose.msra.mxu0 0.0
        %2218 = vmatprep.subr.mxu0 0.0
        %2219 = vmatpush1.xpose.msra.mxu0 0.0
        %2220 = vmatprep.subr.mxu0 0.0
        %2221 = vmatpush1.xpose.msra.mxu0 0.0
        %2222 = vmatprep.subr.mxu0 0.0
        %2223 = vmatpush1.xpose.msra.mxu0 0.0
        %2224 = vmatprep.subr.mxu0 0.0
        %2225 = vmatpush1.xpose.msra.mxu0 0.0
        %2226 = vmatprep.subr.mxu0 0.0
        %2227 = vmatpush1.xpose.msra.mxu0 0.0
        %2228 = vmatprep.subr.mxu0 0.0
        %2229 = vmatpush1.xpose.msra.mxu0 0.0
        %2230 = vmatprep.subr.mxu0 0.0
        %2231 = vmatpush1.xpose.msra.mxu0 0.0
        %2232 = vmatprep.mubr.f32.mxu0 0.0
        %2233 = vmatmul.mubr.f32.gmra.mrb[0].mxu0 %v2162
        %v2234 = vpop.f32.mrb[0].mxu0
        %v2235 = vadd.f32 0.0, %v2234
        %v2236 = vpop.f32.mrb[0].mxu0
        %2237 = vmatprep.mubr.f32.mxu0 0.0
        %2238 = vmatmul.mubr.f32.gmra.mrb[0].mxu0 %v2164
        %v2239 = vpop.f32.mrb[0].mxu0
        %v2240 = vadd.f32 0.0, %v2239
        %v2241 = vpop.f32.mrb[0].mxu0
        %2242 = vdwg.mxu0
        %v2243 = vmul.f32 %v2235, %v1082
        %v2244 = vmul.f32 %v2240, %v1082
        %v2245 = vsel %vm1086, %v2243, -inf
        %2246 = vmax.xlane.f32.xlu0 %v2245
        %v2247 = vpop.xlane.xlu0 %2246
        %v2248 = vsel %vm1086, %v2244, -inf
        %2249 = vmax.xlane.f32.xlu0 %v2248
        %v2250 = vpop.xlane.xlu0 %2249
        %v2251 = vsub.f32 %v2243, %v2247
        %v2252 = vsub.f32 %v2244, %v2250
        %v2253 = vmul.f32 %v2251, 1.442695
        %v2254 = vpow.pop %v2253
        %v2255 = vmul.f32 %v2252, 1.442695
        %v2256 = vpow.pop %v2255
        %v2257 = vsel %vm1086, %v2254, 0.0
        %2258 = vadd.xlane.f32.xlu0 %v2257
        %v2259 = vpop.xlane.xlu0 %2258
        %v2260 = vsel %vm1086, %v2256, 0.0
        %2261 = vadd.xlane.f32.xlu0 %v2260
        %v2262 = vpop.xlane.xlu0 %2261
        %v2263 = vrcp.pop %v2259
        %v2264 = vrcp.pop %v2262
        %v2265 = vmul.f32 %v2254, %v2263
        %v2266 = vmul.f32 %v2256, %v2264
        %s2267 = scalar_lea.vmem %s580, 48
        %2268 = vst.msk [vmem:[%s2267] sm:$0xff] %vm1086, %v2265
        %2269 = vst.msk [vmem:[%s2267 + $0x8] sm:$0xff] %vm1086, %v2266
        %2270 = vrot.lane.b32.xlu0 %v807, 80
        %v2271 = vpop.permute.xlu0 %2270
        %v2274 = vsel %vm1086, %v2265, 0
        %v2277 = vsel %vm1086, %v2266, 0
        %2279 = vmatprep.subr.mxu0 0.0
        %2280 = vmatpush1.msra.mxu0 %v2271
        %2281 = vmatprep.subr.mxu0 0.0
        %2282 = vmatpush1.msra.mxu0 0.0
        %2283 = vmatprep.subr.mxu0 0.0
        %2284 = vmatpush1.msra.mxu0 0.0
        %2285 = vmatprep.subr.mxu0 0.0
        %2286 = vmatpush1.msra.mxu0 0.0
        %2287 = vmatprep.subr.mxu0 0.0
        %2288 = vmatpush1.msra.mxu0 0.0
        %2289 = vmatprep.subr.mxu0 0.0
        %2290 = vmatpush1.msra.mxu0 0.0
        %2291 = vmatprep.subr.mxu0 0.0
        %2292 = vmatpush1.msra.mxu0 0.0
        %2293 = vmatprep.subr.mxu0 0.0
        %2294 = vmatpush1.msra.mxu0 0.0
        %2295 = vmatprep.subr.mxu0 0.0
        %2296 = vmatpush1.msra.mxu0 0.0
        %2297 = vmatprep.subr.mxu0 0.0
        %2298 = vmatpush1.msra.mxu0 0.0
        %2299 = vmatprep.subr.mxu0 0.0
        %2300 = vmatpush1.msra.mxu0 0.0
        %2301 = vmatprep.subr.mxu0 0.0
        %2302 = vmatpush1.msra.mxu0 0.0
        %2303 = vmatprep.subr.mxu0 0.0
        %2304 = vmatpush1.msra.mxu0 0.0
        %2305 = vmatprep.subr.mxu0 0.0
        %2306 = vmatpush1.msra.mxu0 0.0
        %2307 = vmatprep.subr.mxu0 0.0
        %2308 = vmatpush1.msra.mxu0 0.0
        %2309 = vmatprep.subr.mxu0 0.0
        %2310 = vmatpush1.msra.mxu0 0.0
        %2311 = vmatprep.subr.mxu0 0.0
        %2312 = vmatpush1.msra.mxu0 0.0
        %2313 = vmatprep.subr.mxu0 0.0
        %2314 = vmatpush1.msra.mxu0 0.0
        %2315 = vmatprep.subr.mxu0 0.0
        %2316 = vmatpush1.msra.mxu0 0.0
        %2317 = vmatprep.subr.mxu0 0.0
        %2318 = vmatpush1.msra.mxu0 0.0
        %2319 = vmatprep.subr.mxu0 0.0
        %2320 = vmatpush1.msra.mxu0 0.0
        %2321 = vmatprep.subr.mxu0 0.0
        %2322 = vmatpush1.msra.mxu0 0.0
        %2323 = vmatprep.subr.mxu0 0.0
        %2324 = vmatpush1.msra.mxu0 0.0
        %2325 = vmatprep.subr.mxu0 0.0
        %2326 = vmatpush1.msra.mxu0 0.0
        %2327 = vmatprep.subr.mxu0 0.0
        %2328 = vmatpush1.msra.mxu0 0.0
        %2329 = vmatprep.subr.mxu0 0.0
        %2330 = vmatpush1.msra.mxu0 0.0
        %2331 = vmatprep.subr.mxu0 0.0
        %2332 = vmatpush1.msra.mxu0 0.0
        %2333 = vmatprep.subr.mxu0 0.0
        %2334 = vmatpush1.msra.mxu0 0.0
        %2335 = vmatprep.subr.mxu0 0.0
        %2336 = vmatpush1.msra.mxu0 0.0
        %2337 = vmatprep.subr.mxu0 0.0
        %2338 = vmatpush1.msra.mxu0 0.0
        %2339 = vmatprep.subr.mxu0 0.0
        %2340 = vmatpush1.msra.mxu0 0.0
        %2341 = vmatprep.subr.mxu0 0.0
        %2342 = vmatpush1.msra.mxu0 0.0
        %2343 = vmatprep.mubr.f32.mxu0 0.0
        %2344 = vmatmul.mubr.f32.gmra.mrb[0].mxu0 %v2274
        %v2345 = vpop.f32.mrb[0].mxu0
        %v2346 = vadd.f32 0.0, %v2345
        %v2347 = vpop.f32.mrb[0].mxu0
        %2348 = vmatprep.mubr.f32.mxu0 0.0
        %2349 = vmatmul.mubr.f32.gmra.mrb[0].mxu0 %v2277
        %v2350 = vpop.f32.mrb[0].mxu0
        %v2351 = vadd.f32 0.0, %v2350
        %v2352 = vpop.f32.mrb[0].mxu0
        %2353 = vdwg.mxu0
        %2356 = vrot.lane.b32.xlu0 %v2346, 48
        %v2357 = vpop.permute.xlu0 %2356
        %2358 = vrot.lane.b32.xlu0 %v2351, 48
        %v2359 = vpop.permute.xlu0 %2358
        %2362 = vst.msk [vmem:[#allocation3] sm:$0xff] %vm2154, %v2357
        %2363 = vst.msk [vmem:[#allocation3 + $0x8] sm:$0xff] %vm2154, %v2359
        %v2364 = vld [vmem:[#allocation2] sm:$0xff]
        %v2365 = vld [vmem:[#allocation3] sm:$0xff]
        %v2366 = vld [vmem:[#allocation3 + $0x8] sm:$0xff]
        %v2367 = vld [vmem:[%s8] sm:$0xff]
        %v2368 = vld [vmem:[%s8 + $0x8] sm:$0xff]
        %v2369 = vld [vmem:[%s8 + $0x10] sm:$0xff]
        %v2370 = vld [vmem:[%s8 + $0x18] sm:$0xff]
        %v2371 = vld [vmem:[%s8 + $0x20] sm:$0xff]
        %v2372 = vld [vmem:[%s8 + $0x28] sm:$0xff]
        %v2373 = vld [vmem:[%s8 + $0x30] sm:$0xff]
        %v2374 = vld [vmem:[%s8 + $0x38] sm:$0xff]
        %v2375 = vld [vmem:[%s9] sm:$0x1]
        %v2376 = vld [vmem:[%s9 + $0x1] sm:$0x1]
        %v2377 = vld [vmem:[%s9 + $0x2] sm:$0x1]
        %v2378 = vlaneseq
        %v2379 = vshrl.u32 %v2378, 7
        %v2380 = vsub.s32 0, %v2379
        %v2381 = vrot.slane %v2375, %v2380
        %v2383 = vsel %vm623, %v2365, 0
        %v2386 = vsel %vm623, %v2366, 0
        %2388 = vmatprep.subr.mxu0 0.0
        %2389 = vmatpush1.msra.mxu0 %v2367
        %2390 = vmatprep.subr.mxu0 0.0
        %2391 = vmatpush1.msra.mxu0 %v2368
        %2392 = vmatprep.subr.mxu0 0.0
        %2393 = vmatpush1.msra.mxu0 %v2369
        %2394 = vmatprep.subr.mxu0 0.0
        %2395 = vmatpush1.msra.mxu0 %v2370
        %2396 = vmatprep.subr.mxu0 0.0
        %2397 = vmatpush1.msra.mxu0 %v2371
        %2398 = vmatprep.subr.mxu0 0.0
        %2399 = vmatpush1.msra.mxu0 %v2372
        %2400 = vmatprep.subr.mxu0 0.0
        %2401 = vmatpush1.msra.mxu0 %v2373
        %2402 = vmatprep.subr.mxu0 0.0
        %2403 = vmatpush1.msra.mxu0 %v2374
        %2404 = vmatprep.subr.mxu0 0.0
        %2405 = vmatpush1.msra.mxu0 0.0
        %2406 = vmatprep.subr.mxu0 0.0
        %2407 = vmatpush1.msra.mxu0 0.0
        %2408 = vmatprep.subr.mxu0 0.0
        %2409 = vmatpush1.msra.mxu0 0.0
        %2410 = vmatprep.subr.mxu0 0.0
        %2411 = vmatpush1.msra.mxu0 0.0
        %2412 = vmatprep.subr.mxu0 0.0
        %2413 = vmatpush1.msra.mxu0 0.0
        %2414 = vmatprep.subr.mxu0 0.0
        %2415 = vmatpush1.msra.mxu0 0.0
        %2416 = vmatprep.subr.mxu0 0.0
        %2417 = vmatpush1.msra.mxu0 0.0
        %2418 = vmatprep.subr.mxu0 0.0
        %2419 = vmatpush1.msra.mxu0 0.0
        %2420 = vmatprep.subr.mxu0 0.0
        %2421 = vmatpush1.msra.mxu0 0.0
        %2422 = vmatprep.subr.mxu0 0.0
        %2423 = vmatpush1.msra.mxu0 0.0
        %2424 = vmatprep.subr.mxu0 0.0
        %2425 = vmatpush1.msra.mxu0 0.0
        %2426 = vmatprep.subr.mxu0 0.0
        %2427 = vmatpush1.msra.mxu0 0.0
        %2428 = vmatprep.subr.mxu0 0.0
        %2429 = vmatpush1.msra.mxu0 0.0
        %2430 = vmatprep.subr.mxu0 0.0
        %2431 = vmatpush1.msra.mxu0 0.0
        %2432 = vmatprep.subr.mxu0 0.0
        %2433 = vmatpush1.msra.mxu0 0.0
        %2434 = vmatprep.subr.mxu0 0.0
        %2435 = vmatpush1.msra.mxu0 0.0
        %2436 = vmatprep.subr.mxu0 0.0
        %2437 = vmatpush1.msra.mxu0 0.0
        %2438 = vmatprep.subr.mxu0 0.0
        %2439 = vmatpush1.msra.mxu0 0.0
        %2440 = vmatprep.subr.mxu0 0.0
        %2441 = vmatpush1.msra.mxu0 0.0
        %2442 = vmatprep.subr.mxu0 0.0
        %2443 = vmatpush1.msra.mxu0 0.0
        %2444 = vmatprep.subr.mxu0 0.0
        %2445 = vmatpush1.msra.mxu0 0.0
        %2446 = vmatprep.subr.mxu0 0.0
        %2447 = vmatpush1.msra.mxu0 0.0
        %2448 = vmatprep.subr.mxu0 0.0
        %2449 = vmatpush1.msra.mxu0 0.0
        %2450 = vmatprep.subr.mxu0 0.0
        %2451 = vmatpush1.msra.mxu0 0.0
        %2452 = vmatprep.mubr.f32.mxu0 0.0
        %2453 = vmatmul.mubr.f32.gmra.mrb[0].mxu0 %v2383
        %v2454 = vpop.f32.mrb[0].mxu0
        %v2455 = vadd.f32 %v2381, %v2454
        %v2456 = vpop.f32.mrb[0].mxu0
        %2457 = vmatprep.mubr.f32.mxu0 0.0
        %2458 = vmatmul.mubr.f32.gmra.mrb[0].mxu0 %v2386
        %v2459 = vpop.f32.mrb[0].mxu0
        %v2460 = vadd.f32 %v2381, %v2459
        %v2461 = vpop.f32.mrb[0].mxu0
        %2462 = vdwg.mxu0
        %v2463 = vadd.f32 %v2455, %v590
        %v2464 = vadd.f32 %v2460, %v591
        %v2465 = vsel %vm623, %v2463, 0.0
        %2466 = vadd.xlane.f32.xlu0 %v2465
        %v2467 = vpop.xlane.xlu0 %2466
        %v2468 = vsel %vm623, %v2464, 0.0
        %2469 = vadd.xlane.f32.xlu0 %v2468
        %v2470 = vpop.xlane.xlu0 %2469
        %v2471 = vrcp.pop 64.0
        %v2472 = vmul.f32 %v2467, %v2471
        %v2473 = vmul.f32 %v2470, %v2471
        %v2474 = vsub.f32 %v2463, %v2472
        %v2475 = vsub.f32 %v2464, %v2473
        %v2476 = vmul.f32 %v2474, %v2474
        %v2477 = vmul.f32 %v2475, %v2475
        %v2478 = vsel %vm623, %v2476, 0.0
        %2479 = vadd.xlane.f32.xlu0 %v2478
        %v2480 = vpop.xlane.xlu0 %2479
        %v2481 = vsel %vm623, %v2477, 0.0
        %2482 = vadd.xlane.f32.xlu0 %v2481
        %v2483 = vpop.xlane.xlu0 %2482
        %v2484 = vmul.f32 %v2480, %v2471
        %v2485 = vmul.f32 %v2483, %v2471
        %v2486 = vadd.f32 %v2484, 1e-05
        %v2487 = vadd.f32 %v2485, 1e-05
        %v2488 = vrsqrt.pop %v2486
        %v2489 = vrsqrt.pop %v2487
        %v2490 = vmul.f32 %v2474, %v2488
        %v2491 = vmul.f32 %v2475, %v2489
        %v2492 = vlaneseq
        %v2493 = vshrl.u32 %v2492, 7
        %v2494 = vsub.s32 0, %v2493
        %v2495 = vrot.slane %v2376, %v2494
        %v2496 = vmul.f32 %v2490, %v2495
        %v2497 = vmul.f32 %v2491, %v2495
        %v2498 = vlaneseq
        %v2499 = vshrl.u32 %v2498, 7
        %v2500 = vsub.s32 0, %v2499
        %v2501 = vrot.slane %v2377, %v2500
        %v2502 = vadd.f32 %v2496, %v2501
        %v2503 = vadd.f32 %v2497, %v2501
        %s2504 = scalar_lea.vmem %s8, 64
        %v2505 = vld [vmem:[%s2504] sm:$0xff]
        %v2506 = vld [vmem:[%s2504 + $0x8] sm:$0xff]
        %v2507 = vld [vmem:[%s2504 + $0x10] sm:$0xff]
        %v2508 = vld [vmem:[%s2504 + $0x18] sm:$0xff]
        %v2509 = vld [vmem:[%s2504 + $0x20] sm:$0xff]
        %v2510 = vld [vmem:[%s2504 + $0x28] sm:$0xff]
        %v2511 = vld [vmem:[%s2504 + $0x30] sm:$0xff]
        %v2512 = vld [vmem:[%s2504 + $0x38] sm:$0xff]
        %v2513 = vld [vmem:[%s9 + $0x3] sm:$0x1]
        %v2514 = vld [vmem:[%s9 + $0x4] sm:$0x1]
        %v2515 = vld [vmem:[%s9 + $0x5] sm:$0x1]
        %v2516 = vlaneseq
        %v2517 = vshrl.u32 %v2516, 7
        %v2518 = vsub.s32 0, %v2517
        %v2519 = vrot.slane %v2513, %v2518
        %v2521 = vsel %vm623, %v2364, 0
        %2523 = vmatprep.subr.mxu0 0.0
        %2524 = vmatpush1.msra.mxu0 %v2505
        %2525 = vmatprep.subr.mxu0 0.0
        %2526 = vmatpush1.msra.mxu0 %v2506
        %2527 = vmatprep.subr.mxu0 0.0
        %2528 = vmatpush1.msra.mxu0 %v2507
        %2529 = vmatprep.subr.mxu0 0.0
        %2530 = vmatpush1.msra.mxu0 %v2508
        %2531 = vmatprep.subr.mxu0 0.0
        %2532 = vmatpush1.msra.mxu0 %v2509
        %2533 = vmatprep.subr.mxu0 0.0
        %2534 = vmatpush1.msra.mxu0 %v2510
        %2535 = vmatprep.subr.mxu0 0.0
        %2536 = vmatpush1.msra.mxu0 %v2511
        %2537 = vmatprep.subr.mxu0 0.0
        %2538 = vmatpush1.msra.mxu0 %v2512
        %2539 = vmatprep.subr.mxu0 0.0
        %2540 = vmatpush1.msra.mxu0 0.0
        %2541 = vmatprep.subr.mxu0 0.0
        %2542 = vmatpush1.msra.mxu0 0.0
        %2543 = vmatprep.subr.mxu0 0.0
        %2544 = vmatpush1.msra.mxu0 0.0
        %2545 = vmatprep.subr.mxu0 0.0
        %2546 = vmatpush1.msra.mxu0 0.0
        %2547 = vmatprep.subr.mxu0 0.0
        %2548 = vmatpush1.msra.mxu0 0.0
        %2549 = vmatprep.subr.mxu0 0.0
        %2550 = vmatpush1.msra.mxu0 0.0
        %2551 = vmatprep.subr.mxu0 0.0
        %2552 = vmatpush1.msra.mxu0 0.0
        %2553 = vmatprep.subr.mxu0 0.0
        %2554 = vmatpush1.msra.mxu0 0.0
        %2555 = vmatprep.subr.mxu0 0.0
        %2556 = vmatpush1.msra.mxu0 0.0
        %2557 = vmatprep.subr.mxu0 0.0
        %2558 = vmatpush1.msra.mxu0 0.0
        %2559 = vmatprep.subr.mxu0 0.0
        %2560 = vmatpush1.msra.mxu0 0.0
        %2561 = vmatprep.subr.mxu0 0.0
        %2562 = vmatpush1.msra.mxu0 0.0
        %2563 = vmatprep.subr.mxu0 0.0
        %2564 = vmatpush1.msra.mxu0 0.0
        %2565 = vmatprep.subr.mxu0 0.0
        %2566 = vmatpush1.msra.mxu0 0.0
        %2567 = vmatprep.subr.mxu0 0.0
        %2568 = vmatpush1.msra.mxu0 0.0
        %2569 = vmatprep.subr.mxu0 0.0
        %2570 = vmatpush1.msra.mxu0 0.0
        %2571 = vmatprep.subr.mxu0 0.0
        %2572 = vmatpush1.msra.mxu0 0.0
        %2573 = vmatprep.subr.mxu0 0.0
        %2574 = vmatpush1.msra.mxu0 0.0
        %2575 = vmatprep.subr.mxu0 0.0
        %2576 = vmatpush1.msra.mxu0 0.0
        %2577 = vmatprep.subr.mxu0 0.0
        %2578 = vmatpush1.msra.mxu0 0.0
        %2579 = vmatprep.subr.mxu0 0.0
        %2580 = vmatpush1.msra.mxu0 0.0
        %2581 = vmatprep.subr.mxu0 0.0
        %2582 = vmatpush1.msra.mxu0 0.0
        %2583 = vmatprep.subr.mxu0 0.0
        %2584 = vmatpush1.msra.mxu0 0.0
        %2585 = vmatprep.subr.mxu0 0.0
        %2586 = vmatpush1.msra.mxu0 0.0
        %2587 = vmatprep.mubr.f32.mxu0 0.0
        %2588 = vmatmul.mubr.f32.gmra.mrb[0].mxu0 %v2521
        %v2589 = vpop.f32.mrb[0].mxu0
        %v2590 = vadd.f32 %v2519, %v2589
        %v2591 = vpop.f32.mrb[0].mxu0
        %2592 = vdwg.mxu0
        %v2593 = vadd.f32 %v2590, %v592
        %v2594 = vsel %vm623, %v2593, 0.0
        %2595 = vadd.xlane.f32.xlu0 %v2594
        %v2596 = vpop.xlane.xlu0 %2595
        %v2597 = vmul.f32 %v2596, %v2471
        %v2598 = vsub.f32 %v2593, %v2597
        %v2599 = vmul.f32 %v2598, %v2598
        %v2600 = vsel %vm623, %v2599, 0.0
        %2601 = vadd.xlane.f32.xlu0 %v2600
        %v2602 = vpop.xlane.xlu0 %2601
        %v2603 = vmul.f32 %v2602, %v2471
        %v2604 = vadd.f32 %v2603, 1e-05
        %v2605 = vrsqrt.pop %v2604
        %v2606 = vmul.f32 %v2598, %v2605
        %v2607 = vlaneseq
        %v2608 = vshrl.u32 %v2607, 7
        %v2609 = vsub.s32 0, %v2608
        %v2610 = vrot.slane %v2514, %v2609
        %v2611 = vmul.f32 %v2606, %v2610
        %v2612 = vlaneseq
        %v2613 = vshrl.u32 %v2612, 7
        %v2614 = vsub.s32 0, %v2613
        %v2615 = vrot.slane %v2515, %v2614
        %v2616 = vadd.f32 %v2611, %v2615
        %s2617 = scalar_lea.vmem %s8, 128
        %v2618 = vld [vmem:[%s2617] sm:$0xff]
        %v2619 = vld [vmem:[%s2617 + $0x8] sm:$0xff]
        %v2620 = vld [vmem:[%s2617 + $0x10] sm:$0xff]
        %v2621 = vld [vmem:[%s2617 + $0x18] sm:$0xff]
        %v2622 = vld [vmem:[%s2617 + $0x20] sm:$0xff]
        %v2623 = vld [vmem:[%s2617 + $0x28] sm:$0xff]
        %v2624 = vld [vmem:[%s2617 + $0x30] sm:$0xff]
        %v2625 = vld [vmem:[%s2617 + $0x38] sm:$0xff]
        %v2626 = vld [vmem:[%s9 + $0x6] sm:$0x1]
        %v2627 = vlaneseq
        %v2628 = vshrl.u32 %v2627, 7
        %v2629 = vsub.s32 0, %v2628
        %v2630 = vrot.slane %v2626, %v2629
        %v2632 = vsel %vm623, %v2502, 0
        %v2635 = vsel %vm623, %v2503, 0
        %2637 = vmatprep.subr.mxu0 0.0
        %2638 = vmatpush1.msra.mxu0 %v2618
        %2639 = vmatprep.subr.mxu0 0.0
        %2640 = vmatpush1.msra.mxu0 %v2619
        %2641 = vmatprep.subr.mxu0 0.0
        %2642 = vmatpush1.msra.mxu0 %v2620
        %2643 = vmatprep.subr.mxu0 0.0
        %2644 = vmatpush1.msra.mxu0 %v2621
        %2645 = vmatprep.subr.mxu0 0.0
        %2646 = vmatpush1.msra.mxu0 %v2622
        %2647 = vmatprep.subr.mxu0 0.0
        %2648 = vmatpush1.msra.mxu0 %v2623
        %2649 = vmatprep.subr.mxu0 0.0
        %2650 = vmatpush1.msra.mxu0 %v2624
        %2651 = vmatprep.subr.mxu0 0.0
        %2652 = vmatpush1.msra.mxu0 %v2625
        %2653 = vmatprep.subr.mxu0 0.0
        %2654 = vmatpush1.msra.mxu0 0.0
        %2655 = vmatprep.subr.mxu0 0.0
        %2656 = vmatpush1.msra.mxu0 0.0
        %2657 = vmatprep.subr.mxu0 0.0
        %2658 = vmatpush1.msra.mxu0 0.0
        %2659 = vmatprep.subr.mxu0 0.0
        %2660 = vmatpush1.msra.mxu0 0.0
        %2661 = vmatprep.subr.mxu0 0.0
        %2662 = vmatpush1.msra.mxu0 0.0
        %2663 = vmatprep.subr.mxu0 0.0
        %2664 = vmatpush1.msra.mxu0 0.0
        %2665 = vmatprep.subr.mxu0 0.0
        %2666 = vmatpush1.msra.mxu0 0.0
        %2667 = vmatprep.subr.mxu0 0.0
        %2668 = vmatpush1.msra.mxu0 0.0
        %2669 = vmatprep.subr.mxu0 0.0
        %2670 = vmatpush1.msra.mxu0 0.0
        %2671 = vmatprep.subr.mxu0 0.0
        %2672 = vmatpush1.msra.mxu0 0.0
        %2673 = vmatprep.subr.mxu0 0.0
        %2674 = vmatpush1.msra.mxu0 0.0
        %2675 = vmatprep.subr.mxu0 0.0
        %2676 = vmatpush1.msra.mxu0 0.0
        %2677 = vmatprep.subr.mxu0 0.0
        %2678 = vmatpush1.msra.mxu0 0.0
        %2679 = vmatprep.subr.mxu0 0.0
        %2680 = vmatpush1.msra.mxu0 0.0
        %2681 = vmatprep.subr.mxu0 0.0
        %2682 = vmatpush1.msra.mxu0 0.0
        %2683 = vmatprep.subr.mxu0 0.0
        %2684 = vmatpush1.msra.mxu0 0.0
        %2685 = vmatprep.subr.mxu0 0.0
        %2686 = vmatpush1.msra.mxu0 0.0
        %2687 = vmatprep.subr.mxu0 0.0
        %2688 = vmatpush1.msra.mxu0 0.0
        %2689 = vmatprep.subr.mxu0 0.0
        %2690 = vmatpush1.msra.mxu0 0.0
        %2691 = vmatprep.subr.mxu0 0.0
        %2692 = vmatpush1.msra.mxu0 0.0
        %2693 = vmatprep.subr.mxu0 0.0
        %2694 = vmatpush1.msra.mxu0 0.0
        %2695 = vmatprep.subr.mxu0 0.0
        %2696 = vmatpush1.msra.mxu0 0.0
        %2697 = vmatprep.subr.mxu0 0.0
        %2698 = vmatpush1.msra.mxu0 0.0
        %2699 = vmatprep.subr.mxu0 0.0
        %2700 = vmatpush1.msra.mxu0 0.0
        %2701 = vmatprep.mubr.f32.mxu0 0.0
        %2702 = vmatmul.mubr.f32.gmra.mrb[0].mxu0 %v2632
        %v2703 = vpop.f32.mrb[0].mxu0
        %v2704 = vadd.f32 %v2630, %v2703
        %v2705 = vpop.f32.mrb[0].mxu0
        %2706 = vmatprep.mubr.f32.mxu0 0.0
        %2707 = vmatmul.mubr.f32.gmra.mrb[0].mxu0 %v2635
        %v2708 = vpop.f32.mrb[0].mxu0
        %v2709 = vadd.f32 %v2630, %v2708
        %v2710 = vpop.f32.mrb[0].mxu0
        %2711 = vdwg.mxu0
        %v2712 = vmul.f32 %v2704, 0.5
        %v2713 = vmul.f32 %v2709, 0.5
        %v2714 = vmul.f32 %v2704, 0.70710677
        %v2715 = vmul.f32 %v2709, 0.70710677
        %v2716 = verf.f32.pop %v2714
        %v2717 = verf.f32.pop %v2715
        %v2718 = vadd.f32 %v2716, 1.0
        %v2719 = vadd.f32 %v2717, 1.0
        %v2720 = vmul.f32 %v2712, %v2718
        %v2721 = vmul.f32 %v2713, %v2719
        %s2722 = scalar_lea.vmem %s8, 192
        %v2723 = vld [vmem:[%s2722] sm:$0xff]
        %v2724 = vld [vmem:[%s2722 + $0x8] sm:$0xff]
        %v2725 = vld [vmem:[%s2722 + $0x10] sm:$0xff]
        %v2726 = vld [vmem:[%s2722 + $0x18] sm:$0xff]
        %v2727 = vld [vmem:[%s2722 + $0x20] sm:$0xff]
        %v2728 = vld [vmem:[%s2722 + $0x28] sm:$0xff]
        %v2729 = vld [vmem:[%s2722 + $0x30] sm:$0xff]
        %v2730 = vld [vmem:[%s2722 + $0x38] sm:$0xff]
        %v2731 = vld [vmem:[%s9 + $0x7] sm:$0x1]
        %v2732 = vld [vmem:[%s9 + $0x8] sm:$0x1]
        %v2733 = vld [vmem:[%s9 + $0x9] sm:$0x1]
        %v2734 = vlaneseq
        %v2735 = vshrl.u32 %v2734, 7
        %v2736 = vsub.s32 0, %v2735
        %v2737 = vrot.slane %v2731, %v2736
        %v2739 = vsel %vm623, %v2720, 0
        %v2742 = vsel %vm623, %v2721, 0
        %2744 = vmatprep.subr.mxu0 0.0
        %2745 = vmatpush1.msra.mxu0 %v2723
        %2746 = vmatprep.subr.mxu0 0.0
        %2747 = vmatpush1.msra.mxu0 %v2724
        %2748 = vmatprep.subr.mxu0 0.0
        %2749 = vmatpush1.msra.mxu0 %v2725
        %2750 = vmatprep.subr.mxu0 0.0
        %2751 = vmatpush1.msra.mxu0 %v2726
        %2752 = vmatprep.subr.mxu0 0.0
        %2753 = vmatpush1.msra.mxu0 %v2727
        %2754 = vmatprep.subr.mxu0 0.0
        %2755 = vmatpush1.msra.mxu0 %v2728
        %2756 = vmatprep.subr.mxu0 0.0
        %2757 = vmatpush1.msra.mxu0 %v2729
        %2758 = vmatprep.subr.mxu0 0.0
        %2759 = vmatpush1.msra.mxu0 %v2730
        %2760 = vmatprep.subr.mxu0 0.0
        %2761 = vmatpush1.msra.mxu0 0.0
        %2762 = vmatprep.subr.mxu0 0.0
        %2763 = vmatpush1.msra.mxu0 0.0
        %2764 = vmatprep.subr.mxu0 0.0
        %2765 = vmatpush1.msra.mxu0 0.0
        %2766 = vmatprep.subr.mxu0 0.0
        %2767 = vmatpush1.msra.mxu0 0.0
        %2768 = vmatprep.subr.mxu0 0.0
        %2769 = vmatpush1.msra.mxu0 0.0
        %2770 = vmatprep.subr.mxu0 0.0
        %2771 = vmatpush1.msra.mxu0 0.0
        %2772 = vmatprep.subr.mxu0 0.0
        %2773 = vmatpush1.msra.mxu0 0.0
        %2774 = vmatprep.subr.mxu0 0.0
        %2775 = vmatpush1.msra.mxu0 0.0
        %2776 = vmatprep.subr.mxu0 0.0
        %2777 = vmatpush1.msra.mxu0 0.0
        %2778 = vmatprep.subr.mxu0 0.0
        %2779 = vmatpush1.msra.mxu0 0.0
        %2780 = vmatprep.subr.mxu0 0.0
        %2781 = vmatpush1.msra.mxu0 0.0
        %2782 = vmatprep.subr.mxu0 0.0
        %2783 = vmatpush1.msra.mxu0 0.0
        %2784 = vmatprep.subr.mxu0 0.0
        %2785 = vmatpush1.msra.mxu0 0.0
        %2786 = vmatprep.subr.mxu0 0.0
        %2787 = vmatpush1.msra.mxu0 0.0
        %2788 = vmatprep.subr.mxu0 0.0
        %2789 = vmatpush1.msra.mxu0 0.0
        %2790 = vmatprep.subr.mxu0 0.0
        %2791 = vmatpush1.msra.mxu0 0.0
        %2792 = vmatprep.subr.mxu0 0.0
        %2793 = vmatpush1.msra.mxu0 0.0
        %2794 = vmatprep.subr.mxu0 0.0
        %2795 = vmatpush1.msra.mxu0 0.0
        %2796 = vmatprep.subr.mxu0 0.0
        %2797 = vmatpush1.msra.mxu0 0.0
        %2798 = vmatprep.subr.mxu0 0.0
        %2799 = vmatpush1.msra.mxu0 0.0
        %2800 = vmatprep.subr.mxu0 0.0
        %2801 = vmatpush1.msra.mxu0 0.0
        %2802 = vmatprep.subr.mxu0 0.0
        %2803 = vmatpush1.msra.mxu0 0.0
        %2804 = vmatprep.subr.mxu0 0.0
        %2805 = vmatpush1.msra.mxu0 0.0
        %2806 = vmatprep.subr.mxu0 0.0
        %2807 = vmatpush1.msra.mxu0 0.0
        %2808 = vmatprep.mubr.f32.mxu0 0.0
        %2809 = vmatmul.mubr.f32.gmra.mrb[0].mxu0 %v2739
        %v2810 = vpop.f32.mrb[0].mxu0
        %v2811 = vadd.f32 %v2737, %v2810
        %v2812 = vpop.f32.mrb[0].mxu0
        %2813 = vmatprep.mubr.f32.mxu0 0.0
        %2814 = vmatmul.mubr.f32.gmra.mrb[0].mxu0 %v2742
        %v2815 = vpop.f32.mrb[0].mxu0
        %v2816 = vadd.f32 %v2737, %v2815
        %v2817 = vpop.f32.mrb[0].mxu0
        %2818 = vdwg.mxu0
        %v2819 = vadd.f32 %v2811, %v2502
        %v2820 = vadd.f32 %v2816, %v2503
        %v2821 = vsel %vm623, %v2819, 0.0
        %2822 = vadd.xlane.f32.xlu0 %v2821
        %v2823 = vpop.xlane.xlu0 %2822
        %v2824 = vsel %vm623, %v2820, 0.0
        %2825 = vadd.xlane.f32.xlu0 %v2824
        %v2826 = vpop.xlane.xlu0 %2825
        %v2827 = vmul.f32 %v2823, %v2471
        %v2828 = vmul.f32 %v2826, %v2471
        %v2829 = vsub.f32 %v2819, %v2827
        %v2830 = vsub.f32 %v2820, %v2828
        %v2831 = vmul.f32 %v2829, %v2829
        %v2832 = vmul.f32 %v2830, %v2830
        %v2833 = vsel %vm623, %v2831, 0.0
        %2834 = vadd.xlane.f32.xlu0 %v2833
        %v2835 = vpop.xlane.xlu0 %2834
        %v2836 = vsel %vm623, %v2832, 0.0
        %2837 = vadd.xlane.f32.xlu0 %v2836
        %v2838 = vpop.xlane.xlu0 %2837
        %v2839 = vmul.f32 %v2835, %v2471
        %v2840 = vmul.f32 %v2838, %v2471
        %v2841 = vadd.f32 %v2839, 1e-05
        %v2842 = vadd.f32 %v2840, 1e-05
        %v2843 = vrsqrt.pop %v2841
        %v2844 = vrsqrt.pop %v2842
        %v2845 = vmul.f32 %v2829, %v2843
        %v2846 = vmul.f32 %v2830, %v2844
        %v2847 = vlaneseq
        %v2848 = vshrl.u32 %v2847, 7
        %v2849 = vsub.s32 0, %v2848
        %v2850 = vrot.slane %v2732, %v2849
        %v2851 = vmul.f32 %v2845, %v2850
        %v2852 = vmul.f32 %v2846, %v2850
        %v2853 = vlaneseq
        %v2854 = vshrl.u32 %v2853, 7
        %v2855 = vsub.s32 0, %v2854
        %v2856 = vrot.slane %v2733, %v2855
        %v2857 = vadd.f32 %v2851, %v2856
        %v2858 = vadd.f32 %v2852, %v2856
        %2859 = vst.msk [vmem:[%s526] sm:$0xff] %vm623, %v2857
        %2860 = vst.msk [vmem:[%s526 + $0x8] sm:$0xff] %vm623, %v2858
        %s2861 = scalar_lea.vmem %s8, 256
        %v2862 = vld [vmem:[%s2861] sm:$0xff]
        %v2863 = vld [vmem:[%s2861 + $0x8] sm:$0xff]
        %v2864 = vld [vmem:[%s2861 + $0x10] sm:$0xff]
        %v2865 = vld [vmem:[%s2861 + $0x18] sm:$0xff]
        %v2866 = vld [vmem:[%s2861 + $0x20] sm:$0xff]
        %v2867 = vld [vmem:[%s2861 + $0x28] sm:$0xff]
        %v2868 = vld [vmem:[%s2861 + $0x30] sm:$0xff]
        %v2869 = vld [vmem:[%s2861 + $0x38] sm:$0xff]
        %v2870 = vld [vmem:[%s9 + $0xa] sm:$0x1]
        %v2871 = vlaneseq
        %v2872 = vshrl.u32 %v2871, 7
        %v2873 = vsub.s32 0, %v2872
        %v2874 = vrot.slane %v2870, %v2873
        %v2876 = vsel %vm623, %v2616, 0
        %2878 = vmatprep.subr.mxu0 0.0
        %2879 = vmatpush1.msra.mxu0 %v2862
        %2880 = vmatprep.subr.mxu0 0.0
        %2881 = vmatpush1.msra.mxu0 %v2863
        %2882 = vmatprep.subr.mxu0 0.0
        %2883 = vmatpush1.msra.mxu0 %v2864
        %2884 = vmatprep.subr.mxu0 0.0
        %2885 = vmatpush1.msra.mxu0 %v2865
        %2886 = vmatprep.subr.mxu0 0.0
        %2887 = vmatpush1.msra.mxu0 %v2866
        %2888 = vmatprep.subr.mxu0 0.0
        %2889 = vmatpush1.msra.mxu0 %v2867
        %2890 = vmatprep.subr.mxu0 0.0
        %2891 = vmatpush1.msra.mxu0 %v2868
        %2892 = vmatprep.subr.mxu0 0.0
        %2893 = vmatpush1.msra.mxu0 %v2869
        %2894 = vmatprep.subr.mxu0 0.0
        %2895 = vmatpush1.msra.mxu0 0.0
        %2896 = vmatprep.subr.mxu0 0.0
        %2897 = vmatpush1.msra.mxu0 0.0
        %2898 = vmatprep.subr.mxu0 0.0
        %2899 = vmatpush1.msra.mxu0 0.0
        %2900 = vmatprep.subr.mxu0 0.0
        %2901 = vmatpush1.msra.mxu0 0.0
        %2902 = vmatprep.subr.mxu0 0.0
        %2903 = vmatpush1.msra.mxu0 0.0
        %2904 = vmatprep.subr.mxu0 0.0
        %2905 = vmatpush1.msra.mxu0 0.0
        %2906 = vmatprep.subr.mxu0 0.0
        %2907 = vmatpush1.msra.mxu0 0.0
        %2908 = vmatprep.subr.mxu0 0.0
        %2909 = vmatpush1.msra.mxu0 0.0
        %2910 = vmatprep.subr.mxu0 0.0
        %2911 = vmatpush1.msra.mxu0 0.0
        %2912 = vmatprep.subr.mxu0 0.0
        %2913 = vmatpush1.msra.mxu0 0.0
        %2914 = vmatprep.subr.mxu0 0.0
        %2915 = vmatpush1.msra.mxu0 0.0
        %2916 = vmatprep.subr.mxu0 0.0
        %2917 = vmatpush1.msra.mxu0 0.0
        %2918 = vmatprep.subr.mxu0 0.0
        %2919 = vmatpush1.msra.mxu0 0.0
        %2920 = vmatprep.subr.mxu0 0.0
        %2921 = vmatpush1.msra.mxu0 0.0
        %2922 = vmatprep.subr.mxu0 0.0
        %2923 = vmatpush1.msra.mxu0 0.0
        %2924 = vmatprep.subr.mxu0 0.0
        %2925 = vmatpush1.msra.mxu0 0.0
        %2926 = vmatprep.subr.mxu0 0.0
        %2927 = vmatpush1.msra.mxu0 0.0
        %2928 = vmatprep.subr.mxu0 0.0
        %2929 = vmatpush1.msra.mxu0 0.0
        %2930 = vmatprep.subr.mxu0 0.0
        %2931 = vmatpush1.msra.mxu0 0.0
        %2932 = vmatprep.subr.mxu0 0.0
        %2933 = vmatpush1.msra.mxu0 0.0
        %2934 = vmatprep.subr.mxu0 0.0
        %2935 = vmatpush1.msra.mxu0 0.0
        %2936 = vmatprep.subr.mxu0 0.0
        %2937 = vmatpush1.msra.mxu0 0.0
        %2938 = vmatprep.subr.mxu0 0.0
        %2939 = vmatpush1.msra.mxu0 0.0
        %2940 = vmatprep.subr.mxu0 0.0
        %2941 = vmatpush1.msra.mxu0 0.0
        %2942 = vmatprep.mubr.f32.mxu0 0.0
        %2943 = vmatmul.mubr.f32.gmra.mrb[0].mxu0 %v2876
        %v2944 = vpop.f32.mrb[0].mxu0
        %v2945 = vadd.f32 %v2874, %v2944
        %v2946 = vpop.f32.mrb[0].mxu0
        %2947 = vdwg.mxu0
        %v2948 = vmul.f32 %v2945, 0.5
        %v2949 = vmul.f32 %v2945, 0.70710677
        %v2950 = verf.f32.pop %v2949
        %v2951 = vadd.f32 %v2950, 1.0
        %v2952 = vmul.f32 %v2948, %v2951
        %s2953 = scalar_lea.vmem %s8, 320
        %v2954 = vld [vmem:[%s2953] sm:$0xff]
        %v2955 = vld [vmem:[%s2953 + $0x8] sm:$0xff]
        %v2956 = vld [vmem:[%s2953 + $0x10] sm:$0xff]
        %v2957 = vld [vmem:[%s2953 + $0x18] sm:$0xff]
        %v2958 = vld [vmem:[%s2953 + $0x20] sm:$0xff]
        %v2959 = vld [vmem:[%s2953 + $0x28] sm:$0xff]
        %v2960 = vld [vmem:[%s2953 + $0x30] sm:$0xff]
        %v2961 = vld [vmem:[%s2953 + $0x38] sm:$0xff]
        %v2962 = vld [vmem:[%s9 + $0xb] sm:$0x1]
        %v2963 = vld [vmem:[%s9 + $0xc] sm:$0x1]
        %v2964 = vld [vmem:[%s9 + $0xd] sm:$0x1]
        %v2965 = vlaneseq
        %v2966 = vshrl.u32 %v2965, 7
        %v2967 = vsub.s32 0, %v2966
        %v2968 = vrot.slane %v2962, %v2967
        %v2970 = vsel %vm623, %v2952, 0
        %2972 = vmatprep.subr.mxu0 0.0
        %2973 = vmatpush1.msra.mxu0 %v2954
        %2974 = vmatprep.subr.mxu0 0.0
        %2975 = vmatpush1.msra.mxu0 %v2955
        %2976 = vmatprep.subr.mxu0 0.0
        %2977 = vmatpush1.msra.mxu0 %v2956
        %2978 = vmatprep.subr.mxu0 0.0
        %2979 = vmatpush1.msra.mxu0 %v2957
        %2980 = vmatprep.subr.mxu0 0.0
        %2981 = vmatpush1.msra.mxu0 %v2958
        %2982 = vmatprep.subr.mxu0 0.0
        %2983 = vmatpush1.msra.mxu0 %v2959
        %2984 = vmatprep.subr.mxu0 0.0
        %2985 = vmatpush1.msra.mxu0 %v2960
        %2986 = vmatprep.subr.mxu0 0.0
        %2987 = vmatpush1.msra.mxu0 %v2961
        %2988 = vmatprep.subr.mxu0 0.0
        %2989 = vmatpush1.msra.mxu0 0.0
        %2990 = vmatprep.subr.mxu0 0.0
        %2991 = vmatpush1.msra.mxu0 0.0
        %2992 = vmatprep.subr.mxu0 0.0
        %2993 = vmatpush1.msra.mxu0 0.0
        %2994 = vmatprep.subr.mxu0 0.0
        %2995 = vmatpush1.msra.mxu0 0.0
        %2996 = vmatprep.subr.mxu0 0.0
        %2997 = vmatpush1.msra.mxu0 0.0
        %2998 = vmatprep.subr.mxu0 0.0
        %2999 = vmatpush1.msra.mxu0 0.0
        %3000 = vmatprep.subr.mxu0 0.0
        %3001 = vmatpush1.msra.mxu0 0.0
        %3002 = vmatprep.subr.mxu0 0.0
        %3003 = vmatpush1.msra.mxu0 0.0
        %3004 = vmatprep.subr.mxu0 0.0
        %3005 = vmatpush1.msra.mxu0 0.0
        %3006 = vmatprep.subr.mxu0 0.0
        %3007 = vmatpush1.msra.mxu0 0.0
        %3008 = vmatprep.subr.mxu0 0.0
        %3009 = vmatpush1.msra.mxu0 0.0
        %3010 = vmatprep.subr.mxu0 0.0
        %3011 = vmatpush1.msra.mxu0 0.0
        %3012 = vmatprep.subr.mxu0 0.0
        %3013 = vmatpush1.msra.mxu0 0.0
        %3014 = vmatprep.subr.mxu0 0.0
        %3015 = vmatpush1.msra.mxu0 0.0
        %3016 = vmatprep.subr.mxu0 0.0
        %3017 = vmatpush1.msra.mxu0 0.0
        %3018 = vmatprep.subr.mxu0 0.0
        %3019 = vmatpush1.msra.mxu0 0.0
        %3020 = vmatprep.subr.mxu0 0.0
        %3021 = vmatpush1.msra.mxu0 0.0
        %3022 = vmatprep.subr.mxu0 0.0
        %3023 = vmatpush1.msra.mxu0 0.0
        %3024 = vmatprep.subr.mxu0 0.0
        %3025 = vmatpush1.msra.mxu0 0.0
        %3026 = vmatprep.subr.mxu0 0.0
        %3027 = vmatpush1.msra.mxu0 0.0
        %3028 = vmatprep.subr.mxu0 0.0
        %3029 = vmatpush1.msra.mxu0 0.0
        %3030 = vmatprep.subr.mxu0 0.0
        %3031 = vmatpush1.msra.mxu0 0.0
        %3032 = vmatprep.subr.mxu0 0.0
        %3033 = vmatpush1.msra.mxu0 0.0
        %3034 = vmatprep.subr.mxu0 0.0
        %3035 = vmatpush1.msra.mxu0 0.0
        %3036 = vmatprep.mubr.f32.mxu0 0.0
        %3037 = vmatmul.mubr.f32.gmra.mrb[0].mxu0 %v2970
        %v3038 = vpop.f32.mrb[0].mxu0
        %v3039 = vadd.f32 %v2968, %v3038
        %v3040 = vpop.f32.mrb[0].mxu0
        %3041 = vdwg.mxu0
        %v3042 = vadd.f32 %v3039, %v2616
        %v3043 = vsel %vm623, %v3042, 0.0
        %3044 = vadd.xlane.f32.xlu0 %v3043
        %v3045 = vpop.xlane.xlu0 %3044
        %v3046 = vmul.f32 %v3045, %v2471
        %v3047 = vsub.f32 %v3042, %v3046
        %v3048 = vmul.f32 %v3047, %v3047
        %v3049 = vsel %vm623, %v3048, 0.0
        %3050 = vadd.xlane.f32.xlu0 %v3049
        %v3051 = vpop.xlane.xlu0 %3050
        %v3052 = vmul.f32 %v3051, %v2471
        %v3053 = vadd.f32 %v3052, 1e-05
        %v3054 = vrsqrt.pop %v3053
        %v3055 = vmul.f32 %v3047, %v3054
        %v3056 = vlaneseq
        %v3057 = vshrl.u32 %v3056, 7
        %v3058 = vsub.s32 0, %v3057
        %v3059 = vrot.slane %v2963, %v3058
        %v3060 = vmul.f32 %v3055, %v3059
        %v3061 = vlaneseq
        %v3062 = vshrl.u32 %v3061, 7
        %v3063 = vsub.s32 0, %v3062
        %v3064 = vrot.slane %v2964, %v3063
        %v3065 = vadd.f32 %v3060, %v3064
        %3066 = vst.msk [vmem:[%s533] sm:$0xff] %vm623, %v3065
        %s3067 = sand.u32 %s271, 1
        %s3068 = scalar_lea.sflag [#allocation5], %s3067
        %s3069 = sand.u32 %s271, 1
        %s3070 = smul.addr %s3069, 16
        %s3071 = scalar_lea.vmem [#allocation4], %s3070
        %s3072 = sand.u32 %s33, 1
        %s3073 = scalar_lea.sflag [#allocation7], %s3072
        %s3074 = sand.u32 %s297, 1
        %s3075 = smul.addr %s3074, 8
        %s3076 = scalar_lea.vmem [#allocation6], %s3075
        %s3077 = sand.u32 %s33, 1
        %s3078 = scalar_lea.sflag [#allocation7], %s3077
        %s3079 = sand.u32 %s323, 1
        %s3080 = smul.addr %s3079, 32
        %s3081 = scalar_lea.vmem [#allocation8], %s3080
        %p3082 = scmp.lt.s32.totalorder %s33, 1
        %s3083 = scalar_select %p3082, %s33, 1
        %s3084 = smul.addr %s3083, 8
        %s3085 = smul.addr %s3084, 8
        %s3086 = scalar_lea.vmem %s13, %s3085
        %p3087 = scmp.lt.s32.totalorder %s33, 1
        %s3088 = scalar_select %p3087, %s33, 1
        %s3089 = smul.addr %s3088, 2
        %s3090 = smul.addr %s3089, 8
        %s3091 = scalar_lea.vmem %s14, %s3090
        %p3092 = scmp.lt.s32.totalorder %s33, 1
        %s3093 = scalar_select %p3092, %s33, 1
        %s3094 = smul.addr %s3093, 8
        %s3095 = scalar_lea.vmem %s15, %s3094
        // Predicated region
        $region61: #{co_attention_block_forward.1} parent=59 // pred_check
          %p3096 = pneg %p281
        $region62: #{co_attention_block_forward.1} parent=59 // pred_check_branch
          %3098 = sbr.rel (%p3096) target = $region64
        $region63: #{co_attention_block_forward.1} parent=59 // pred_region
          %s3100 = ssub.s32 256, 256
          %3101 = vsyncadd %s3068, %s3100
          %s3102 = smul.addr %s33, 2
          %s3103 = smul.addr %s3102, 128
          %s3104 = scalar_lea.hbm %s10, %s3103
          %s3105 = sshll.u32 %s3071, 4
          %s3106 = int_to_ptr.vmem [resolvable:$true] %s3105
          %3111 = dma.vmem_to_hbm [thread:$0]  %s3106, 256, %s3104, %s3068, 128, 128, 8
        $region64: #{co_attention_block_forward.1} parent=59 // pred_fallthru
          _
        // Predicated region
        $region65: #{co_attention_block_forward.1} parent=59 // pred_check
          %p3112 = pneg %p307
        $region66: #{co_attention_block_forward.1} parent=59 // pred_check_branch
          %3114 = sbr.rel (%p3112) target = $region68
        $region67: #{co_attention_block_forward.1} parent=59 // pred_region
          %s3116 = ssub.s32 128, 128
          %3117 = vsyncadd %s3073, %s3116
          %s3118 = smul.addr %s33, 128
          %s3119 = scalar_lea.hbm %s11, %s3118
          %s3121 = sshll.u32 %s3076, 4
          %s3122 = int_to_ptr.vmem [resolvable:$true] %s3121
          %3124 = dma.vmem_to_hbm [thread:$0]  %s3122, 128, %s3119, %s3073
        $region68: #{co_attention_block_forward.1} parent=59 // pred_fallthru
          _
        // Predicated region
        $region69: #{co_attention_block_forward.1} parent=59 // pred_check
          %p3125 = pneg %p333
        $region70: #{co_attention_block_forward.1} parent=59 // pred_check_branch
          %3127 = sbr.rel (%p3125) target = $region72
        $region71: #{co_attention_block_forward.1} parent=59 // pred_region
          %s3129 = ssub.s32 512, 512
          %3130 = vsyncadd %s3078, %s3129
          %s3131 = smul.addr %s33, 4
          %s3132 = smul.addr %s3131, 128
          %s3133 = scalar_lea.hbm %s12, %s3132
          %s3134 = sshll.u32 %s3081, 4
          %s3135 = int_to_ptr.vmem [resolvable:$true] %s3134
          %3140 = dma.vmem_to_hbm [thread:$0]  %s3135, 512, %s3133, %s3078, 128, 128, 8
        $region72: #{co_attention_block_forward.1} parent=59 // pred_fallthru
          _
        // Predicated region
        $region73: #{co_attention_block_forward.1} parent=59 // pred_check
          %p3141 = pneg %p359
        $region74: #{co_attention_block_forward.1} parent=59 // pred_check_branch
          %3143 = sbr.rel (%p3141) target = $region76
        $region75: #{co_attention_block_forward.1} parent=59 // pred_region
          _
        $region76: #{co_attention_block_forward.1} parent=59 // pred_fallthru
          _
        // Predicated region
        $region77: #{co_attention_block_forward.1} parent=59 // pred_check
          %p3144 = pneg %p385
        $region78: #{co_attention_block_forward.1} parent=59 // pred_check_branch
          %3146 = sbr.rel (%p3144) target = $region80
        $region79: #{co_attention_block_forward.1} parent=59 // pred_region
          _
        $region80: #{co_attention_block_forward.1} parent=59 // pred_fallthru
          _
        // Predicated region
        $region81: #{co_attention_block_forward.1} parent=59 // pred_check
          %p3147 = pneg %p411
        $region82: #{co_attention_block_forward.1} parent=59 // pred_check_branch
          %3149 = sbr.rel (%p3147) target = $region84
        $region83: #{co_attention_block_forward.1} parent=59 // pred_region
          _
        $region84: #{co_attention_block_forward.1} parent=59 // pred_fallthru
          _
      $region60: #{co_attention_block_forward.1} parent=5 // pred_fallthru
        _
      %p3150 = scmp.le.s32.totalorder 2, %s28
      // Predicated region
      $region85: #{co_attention_block_forward.1} parent=5 // pred_check
        %p3151 = pneg %p3150
      $region86: #{co_attention_block_forward.1} parent=5 // pred_check_branch
        %3153 = sbr.rel (%p3151) target = $region88
      $region87: #{co_attention_block_forward.1} parent=5 // pred_region
        %s3154 = ssub.s32 %s28, 2
        // Predicated region
        $region89: #{co_attention_block_forward.1} parent=87 // pred_check
          %p3155 = pneg %p287
        $region90: #{co_attention_block_forward.1} parent=87 // pred_check_branch
          %3157 = sbr.rel (%p3155) target = $region92
        $region91: #{co_attention_block_forward.1} parent=87 // pred_region
          %s3158 = sand.u32 %s272, 1
          %s3159 = scalar_lea.sflag [#allocation5], %s3158
          %s3160 = sand.u32 %s272, 1
          %s3161 = smul.addr %s3160, 16
          %s3162 = scalar_lea.vmem [#allocation4], %s3161
          %3163 = dma.done %s3159, 256
        $region92: #{co_attention_block_forward.1} parent=87 // pred_fallthru
          _
        // Predicated region
        $region93: #{co_attention_block_forward.1} parent=87 // pred_check
          %p3164 = pneg %p313
        $region94: #{co_attention_block_forward.1} parent=87 // pred_check_branch
          %3166 = sbr.rel (%p3164) target = $region96
        $region95: #{co_attention_block_forward.1} parent=87 // pred_region
          %s3167 = sand.u32 %s34, 1
          %s3168 = scalar_lea.sflag [#allocation7], %s3167
          %s3169 = sand.u32 %s298, 1
          %s3170 = smul.addr %s3169, 8
          %s3171 = scalar_lea.vmem [#allocation6], %s3170
          %3172 = dma.done %s3168, 128
        $region96: #{co_attention_block_forward.1} parent=87 // pred_fallthru
          _
        // Predicated region
        $region97: #{co_attention_block_forward.1} parent=87 // pred_check
          %p3173 = pneg %p339
        $region98: #{co_attention_block_forward.1} parent=87 // pred_check_branch
          %3175 = sbr.rel (%p3173) target = $region100
        $region99: #{co_attention_block_forward.1} parent=87 // pred_region
          %s3176 = sand.u32 %s34, 1
          %s3177 = scalar_lea.sflag [#allocation7], %s3176
          %s3178 = sand.u32 %s324, 1
          %s3179 = smul.addr %s3178, 32
          %s3180 = scalar_lea.vmem [#allocation8], %s3179
          %3181 = dma.done %s3177, 512
        $region100: #{co_attention_block_forward.1} parent=87 // pred_fallthru
          _
        // Predicated region
        $region101: #{co_attention_block_forward.1} parent=87 // pred_check
          %p3182 = pneg %p365
        $region102: #{co_attention_block_forward.1} parent=87 // pred_check_branch
          %3184 = sbr.rel (%p3182) target = $region104
        $region103: #{co_attention_block_forward.1} parent=87 // pred_region
          %p3185 = scmp.lt.s32.totalorder %s34, 1
          %s3186 = scalar_select %p3185, %s34, 1
          %s3187 = smul.addr %s3186, 8
          %s3188 = smul.addr %s3187, 8
          %s3189 = scalar_lea.vmem %s13, %s3188
        $region104: #{co_attention_block_forward.1} parent=87 // pred_fallthru
          _
        // Predicated region
        $region105: #{co_attention_block_forward.1} parent=87 // pred_check
          %p3190 = pneg %p391
        $region106: #{co_attention_block_forward.1} parent=87 // pred_check_branch
          %3192 = sbr.rel (%p3190) target = $region108
        $region107: #{co_attention_block_forward.1} parent=87 // pred_region
          %p3193 = scmp.lt.s32.totalorder %s34, 1
          %s3194 = scalar_select %p3193, %s34, 1
          %s3195 = smul.addr %s3194, 2
          %s3196 = smul.addr %s3195, 8
          %s3197 = scalar_lea.vmem %s14, %s3196
        $region108: #{co_attention_block_forward.1} parent=87 // pred_fallthru
          _
        // Predicated region
        $region109: #{co_attention_block_forward.1} parent=87 // pred_check
          %p3198 = pneg %p417
        $region110: #{co_attention_block_forward.1} parent=87 // pred_check_branch
          %3200 = sbr.rel (%p3198) target = $region112
        $region111: #{co_attention_block_forward.1} parent=87 // pred_region
          %p3201 = scmp.lt.s32.totalorder %s34, 1
          %s3202 = scalar_select %p3201, %s34, 1
          %s3203 = smul.addr %s3202, 8
          %s3204 = scalar_lea.vmem %s15, %s3203
        $region112: #{co_attention_block_forward.1} parent=87 // pred_fallthru
          _
      $region88: #{co_attention_block_forward.1} parent=5 // pred_fallthru
        _
    $region6: #{co_attention_block_forward.1} parent=1 // loop_footer
      %s32 = sadd.s32 1, %s28
    $region7: #{co_attention_block_forward.1} parent=1 // loop_footer_branch
      %27 = sbr.rel target = $region3
    $region8: #{co_attention_block_forward.1} parent=1 // loop_exit
      _
    %3205 = vsyncpa [#allocation5], 1
    %s3206 = scalar_lea.sflag [#allocation5], 1
    %3207 = vsyncpa %s3206, 1
    %3208 = vsyncpa [#allocation7], 1
    %s3209 = scalar_lea.sflag [#allocation7], 1
    %3210 = vsyncpa %s3209, 1

</llo_original>
